<compile_context>
chip_gen: v7x
topology: tpu7x:2x2x1
jax: 0.10.0
libtpu: 0.0.40
codegen_flags: <defaults>
</compile_context>

<pallas_src>
import jax
import jax.numpy as jnp
from jax.experimental import pallas as pl
from jax.experimental.pallas import tpu as pltpu


# ---------------------------------------------------------------------------
# Pallas kernel
# ---------------------------------------------------------------------------
def lstm_mlp_kernel(x_ref, wih_ref, whh_ref, b_ref,
                    w1_ref, b1_ref, w2_ref, b2_ref, w3_ref, b3_ref,
                    out_ref,
                    xp_sc):
    """x_ref: (T*B, D_in) bf16, time-major flattened input.

    Weights are pre-transposed to (in_features, out_features) and stored bf16;
    biases are f32. b_ref is the pre-summed (b_ih + b_hh).
    """
    B = out_ref.shape[0]
    H = whh_ref.shape[0]
    TB = x_ref.shape[0]
    T = TB // B

    # ---- Hoisted input projection for ALL timesteps: one big bf16 MXU matmul ----
    # xp[t*B:(t+1)*B, :] == x_t @ W_ih^T + (b_ih + b_hh)   (bias folded in here,
    # off the serial path; broadcast happens once, not per recurrence step)
    xp_sc[...] = (
        jnp.dot(x_ref[...], wih_ref[...], preferred_element_type=jnp.float32)
        + b_ref[...])

    # Loop-invariant recurrent weight, read once (bf16 MXU operand).
    whh = whh_ref[...]

    def sig(v):  # sigmoid via a single EUP tanh: sigmoid(x) = 0.5*tanh(0.5*x)+0.5
        return 0.5 * jnp.tanh(0.5 * v) + 0.5

    def step(t, carry):
        h, c = carry  # f32 state
        row = pl.multiple_of(t * B, 8)
        gates = xp_sc[pl.ds(row, B), :] + jnp.dot(
            h.astype(whh.dtype), whh, preferred_element_type=jnp.float32)
        # PyTorch gate order [i, f, g, o]
        i_g = sig(gates[:, 0 * H:1 * H])
        f_g = sig(gates[:, 1 * H:2 * H])
        g_g = jnp.tanh(gates[:, 2 * H:3 * H])
        o_g = sig(gates[:, 3 * H:4 * H])
        c_new = f_g * c + i_g * g_g
        h_new = o_g * jnp.tanh(c_new)
        return h_new, c_new

    h0 = jnp.zeros((B, H), jnp.float32)
    c0 = jnp.zeros((B, H), jnp.float32)
    h_T, _ = jax.lax.fori_loop(0, T, step, (h0, c0), unroll=True)

    # ---- Fused MLP head (dropout layers are identity in eval mode) ----
    z1 = jnp.maximum(
        jnp.dot(h_T.astype(w1_ref.dtype), w1_ref[...],
                preferred_element_type=jnp.float32) + b1_ref[...], 0.0)
    z2 = jnp.maximum(
        jnp.dot(z1.astype(w2_ref.dtype), w2_ref[...],
                preferred_element_type=jnp.float32) + b2_ref[...], 0.0)
    z3 = jnp.dot(z2.astype(w3_ref.dtype), w3_ref[...],
                 preferred_element_type=jnp.float32) + b3_ref[...]
    out_ref[...] = z3.astype(out_ref.dtype)   # lane-dense (B, 128) store


# ---------------------------------------------------------------------------
# Wrapper
# ---------------------------------------------------------------------------
def lstm_model_forward(x, params):
    """x: (B, T, input_size) float32 (PyTorch batch_first layout)."""
    B, T, D_in = x.shape
    H = params["w_hh"].shape[0]            # 256
    C = params["fc3_b"].shape[-1]
    C_pad = max(128, ((C + 127) // 128) * 128)   # lane-dense output, sliced below

    # Time-major, flattened to (T*B, D_in); bf16 MXU operands (f32 accumulate).
    x_tm = jnp.transpose(x, (1, 0, 2)).reshape(T * B, D_in).astype(jnp.bfloat16)

    wih = params["w_ih"].astype(jnp.bfloat16)
    whh = params["w_hh"].astype(jnp.bfloat16)
    b_g = params["b_gates"]                                  # f32, pre-summed
    w1, b1 = params["fc1_w"].astype(jnp.bfloat16), params["fc1_b"]
    w2, b2 = params["fc2_w"].astype(jnp.bfloat16), params["fc2_b"]
    w3 = jnp.pad(params["fc3_w"], ((0, 0), (0, C_pad - C))).astype(jnp.bfloat16)
    b3 = jnp.pad(params["fc3_b"], ((0, 0), (0, C_pad - C)))

    flops = (2 * T * B * D_in * 4 * H                      # hoisted input projection
             + 2 * T * B * H * 4 * H                       # serial h @ W_hh
             + 2 * B * (H * 128 + 128 * 64 + 64 * C_pad))  # MLP head
    transcendentals = 5 * T * B * H                        # 4 gate tanh + cell tanh
    bytes_accessed = (T * B * D_in * 2
                      + (wih.size + whh.size + w1.size + w2.size + w3.size) * 2
                      + (b_g.size + b1.size + b2.size + b3.size) * 4
                      + B * C_pad * 4)

    vmem_spec = pl.BlockSpec(memory_space=pltpu.MemorySpace.VMEM)
    out_padded = pl.pallas_call(
        lstm_mlp_kernel,
        out_shape=jax.ShapeDtypeStruct((B, C_pad), jnp.float32),
        in_specs=[vmem_spec] * 10,
        out_specs=vmem_spec,
        scratch_shapes=[pltpu.VMEM((T * B, 4 * H), jnp.float32)],  # hoisted X@W_ih
        cost_estimate=pl.CostEstimate(
            flops=flops, transcendentals=transcendentals,
            bytes_accessed=bytes_accessed),
    )(x_tm, wih, whh, b_g, w1, b1, w2, b2, w3, b3)

    return out_padded[:, :C]


# ---------------------------------------------------------------------------
# Pure-JAX f32 reference (for correctness check)
# ---------------------------------------------------------------------------
def reference_forward(x, params):
    B, T, D_in = x.shape
    H = params["w_hh"].shape[0]

    def step(carry, x_t):
        h, c = carry
        gates = x_t @ params["w_ih"] + h @ params["w_hh"] + params["b_gates"][0]
        i = jax.nn.sigmoid(gates[:, 0 * H:1 * H])
        f = jax.nn.sigmoid(gates[:, 1 * H:2 * H])
        g = jnp.tanh(gates[:, 2 * H:3 * H])
        o = jax.nn.sigmoid(gates[:, 3 * H:4 * H])
        c = f * c + i * g
        h = o * jnp.tanh(c)
        return (h, c), None

    h0 = jnp.zeros((B, H), jnp.float32)
    (h, _), _ = jax.lax.scan(step, (h0, h0), jnp.transpose(x, (1, 0, 2)))
    z1 = jnp.maximum(h @ params["fc1_w"] + params["fc1_b"][0], 0.0)
    z2 = jnp.maximum(z1 @ params["fc2_w"] + params["fc2_b"][0], 0.0)
    return z2 @ params["fc3_w"] + params["fc3_b"][0]


# ---------------------------------------------------------------------------
# Deterministic parameter init (shapes from LSTMModel.__init__)
# ---------------------------------------------------------------------------
def make_params(key, input_size, num_classes, hidden=256):
    ks = jax.random.split(key, 10)
    s = 0.05
    return {
        # PyTorch stores W_ih: (4H, input_size), W_hh: (4H, H); we keep transposed.
        "w_ih":    jax.random.normal(ks[0], (input_size, 4 * hidden), jnp.float32) * s,
        "w_hh":    jax.random.normal(ks[1], (hidden, 4 * hidden), jnp.float32) * s,
        "b_gates": jax.random.normal(ks[2], (1, 4 * hidden), jnp.float32) * s,  # b_ih+b_hh
        "fc1_w":   jax.random.normal(ks[3], (hidden, 128), jnp.float32) * s,
        "fc1_b":   jax.random.normal(ks[4], (1, 128), jnp.float32) * s,
        "fc2_w":   jax.random.normal(ks[5], (128, 64), jnp.float32) * s,
        "fc2_b":   jax.random.normal(ks[6], (1, 64), jnp.float32) * s,
        "fc3_w":   jax.random.normal(ks[7], (64, num_classes), jnp.float32) * s,
        "fc3_b":   jax.random.normal(ks[8], (1, num_classes), jnp.float32) * s,
    }


if __name__ == "__main__":
    B, T, INPUT_SIZE, NUM_CLASSES = 8, 8, 32, 10

    key = jax.random.PRNGKey(0)
    k_x, k_p = jax.random.split(key)
    x = jax.random.normal(k_x, (B, T, INPUT_SIZE), jnp.float32)
    params = make_params(k_p, INPUT_SIZE, NUM_CLASSES)

    out = jax.block_until_ready(lstm_model_forward(x, params))
    ref = jax.block_until_ready(reference_forward(x, params))

    assert out.shape == (B, NUM_CLASSES), out.shape
    # bf16 MXU operands (f32 accumulate) introduce small rounding drift vs. the
    # pure-f32 reference over the T-step recurrence -> looser tolerance (expected).
    max_err = float(jnp.abs(out - ref).max())
    assert jnp.allclose(out, ref, atol=2e-2, rtol=2e-2), max_err
    print("KERNEL_OK")
</pallas_src>

<mosaic_0001>
module attributes {stable_mosaic.version = 11 : i64} {
  func.func @lstm_mlp_kernel(%arg0: memref<64x32xbf16, #tpu.memory_space<vmem>>, %arg1: memref<32x1024xbf16, #tpu.memory_space<vmem>>, %arg2: memref<256x1024xbf16, #tpu.memory_space<vmem>>, %arg3: memref<1x1024xf32, #tpu.memory_space<vmem>>, %arg4: memref<256x128xbf16, #tpu.memory_space<vmem>>, %arg5: memref<1x128xf32, #tpu.memory_space<vmem>>, %arg6: memref<128x64xbf16, #tpu.memory_space<vmem>>, %arg7: memref<1x64xf32, #tpu.memory_space<vmem>>, %arg8: memref<64x128xbf16, #tpu.memory_space<vmem>>, %arg9: memref<1x128xf32, #tpu.memory_space<vmem>>, %arg10: memref<8x128xf32, #tpu.memory_space<vmem>>, %arg11: memref<64x1024xf32, #tpu.memory_space<vmem>>) attributes {dimension_semantics = [], scalar_prefetch = 0 : i64, scratch_operands = 1 : i64, tpu.core_type = #tpu.core_type<tc>} {
    %c0 = arith.constant 0 : index
    %c0_0 = arith.constant 0 : index
    %0 = vector.load %arg0[%c0, %c0_0] : memref<64x32xbf16, #tpu.memory_space<vmem>>, vector<64x32xbf16>
    %c0_1 = arith.constant 0 : index
    %c0_2 = arith.constant 0 : index
    %1 = vector.load %arg1[%c0_1, %c0_2] : memref<32x1024xbf16, #tpu.memory_space<vmem>>, vector<32x1024xbf16>
    %cst = arith.constant dense<0.000000e+00> : vector<64x1024xf32>
    %2 = tpu.matmul %0, %1, %cst {dimension_numbers = #tpu.dot_dimension_numbers<[1], [0], [0], [1], [0, 0, 1, 1], [], []>} : vector<64x32xbf16>, vector<32x1024xbf16>, vector<64x1024xf32> -> vector<64x1024xf32>
    %c0_3 = arith.constant 0 : index
    %c0_4 = arith.constant 0 : index
    %3 = vector.load %arg3[%c0_3, %c0_4] : memref<1x1024xf32, #tpu.memory_space<vmem>>, vector<1x1024xf32>
    %4 = vector.broadcast %3 : vector<1x1024xf32> to vector<64x1024xf32>
    %5 = arith.addf %2, %4 : vector<64x1024xf32>
    %c0_5 = arith.constant 0 : index
    %c0_6 = arith.constant 0 : index
    %6 = vector.load %arg11[%c0_5, %c0_6] : memref<64x1024xf32, #tpu.memory_space<vmem>>, vector<64x1024xf32>
    tpu.vector_store %arg11[%c0_5, %c0_6], %5 {strides = array<i32>} : memref<64x1024xf32, #tpu.memory_space<vmem>>, vector<64x1024xf32>,
    %c0_7 = arith.constant 0 : index
    %c0_8 = arith.constant 0 : index
    %7 = vector.load %arg2[%c0_7, %c0_8] : memref<256x1024xbf16, #tpu.memory_space<vmem>>, vector<256x1024xbf16>
    %cst_9 = arith.constant 0.000000e+00 : f32
    %8 = vector.broadcast %cst_9 : f32 to vector<8x256xf32>
    %cst_10 = arith.constant 0.000000e+00 : f32
    %9 = vector.broadcast %cst_10 : f32 to vector<8x256xf32>
    %c0_i32 = arith.constant 0 : i32
    %c8_i32 = arith.constant 8 : i32
    %10 = arith.muli %c0_i32, %c8_i32 : i32
    %11 = tpu.assume_multiple %10, 8 : i32
    %12 = arith.index_cast %11 : i32 to index
    %c0_11 = arith.constant 0 : index
    %13 = vector.load %arg11[%12, %c0_11] : memref<64x1024xf32, #tpu.memory_space<vmem>>, vector<8x1024xf32>
    %14 = arith.truncf %8 : vector<8x256xf32> to vector<8x256xbf16>
    %cst_12 = arith.constant dense<0.000000e+00> : vector<8x1024xf32>
    %15 = tpu.matmul %14, %7, %cst_12 {dimension_numbers = #tpu.dot_dimension_numbers<[1], [0], [0], [1], [0, 0, 1, 1], [], []>} : vector<8x256xbf16>, vector<256x1024xbf16>, vector<8x1024xf32> -> vector<8x1024xf32>
    %16 = arith.addf %13, %15 : vector<8x1024xf32>
    %17 = vector.extract_strided_slice %16 {offsets = [0, 0], sizes = [8, 256], strides = [1, 1]} : vector<8x1024xf32> to vector<8x256xf32>
    %cst_13 = arith.constant 5.000000e-01 : f32
    %18 = vector.broadcast %cst_13 : f32 to vector<8x256xf32>
    %19 = arith.mulf %18, %17 : vector<8x256xf32>
    %20 = math.tanh %19 : vector<8x256xf32>
    %cst_14 = arith.constant 5.000000e-01 : f32
    %21 = vector.broadcast %cst_14 : f32 to vector<8x256xf32>
    %22 = arith.mulf %21, %20 : vector<8x256xf32>
    %cst_15 = arith.constant 5.000000e-01 : f32
    %23 = vector.broadcast %cst_15 : f32 to vector<8x256xf32>
    %24 = arith.addf %22, %23 : vector<8x256xf32>
    %25 = vector.extract_strided_slice %16 {offsets = [0, 256], sizes = [8, 256], strides = [1, 1]} : vector<8x1024xf32> to vector<8x256xf32>
    %cst_16 = arith.constant 5.000000e-01 : f32
    %26 = vector.broadcast %cst_16 : f32 to vector<8x256xf32>
    %27 = arith.mulf %26, %25 : vector<8x256xf32>
    %28 = math.tanh %27 : vector<8x256xf32>
    %cst_17 = arith.constant 5.000000e-01 : f32
    %29 = vector.broadcast %cst_17 : f32 to vector<8x256xf32>
    %30 = arith.mulf %29, %28 : vector<8x256xf32>
    %cst_18 = arith.constant 5.000000e-01 : f32
    %31 = vector.broadcast %cst_18 : f32 to vector<8x256xf32>
    %32 = arith.addf %30, %31 : vector<8x256xf32>
    %33 = vector.extract_strided_slice %16 {offsets = [0, 512], sizes = [8, 256], strides = [1, 1]} : vector<8x1024xf32> to vector<8x256xf32>
    %34 = math.tanh %33 : vector<8x256xf32>
    %35 = vector.extract_strided_slice %16 {offsets = [0, 768], sizes = [8, 256], strides = [1, 1]} : vector<8x1024xf32> to vector<8x256xf32>
    %cst_19 = arith.constant 5.000000e-01 : f32
    %36 = vector.broadcast %cst_19 : f32 to vector<8x256xf32>
    %37 = arith.mulf %36, %35 : vector<8x256xf32>
    %38 = math.tanh %37 : vector<8x256xf32>
    %cst_20 = arith.constant 5.000000e-01 : f32
    %39 = vector.broadcast %cst_20 : f32 to vector<8x256xf32>
    %40 = arith.mulf %39, %38 : vector<8x256xf32>
    %cst_21 = arith.constant 5.000000e-01 : f32
    %41 = vector.broadcast %cst_21 : f32 to vector<8x256xf32>
    %42 = arith.addf %40, %41 : vector<8x256xf32>
    %43 = arith.mulf %32, %9 : vector<8x256xf32>
    %44 = arith.mulf %24, %34 : vector<8x256xf32>
    %45 = arith.addf %43, %44 : vector<8x256xf32>
    %46 = math.tanh %45 : vector<8x256xf32>
    %47 = arith.mulf %42, %46 : vector<8x256xf32>
    %c1_i32 = arith.constant 1 : i32
    %c8_i32_22 = arith.constant 8 : i32
    %48 = arith.muli %c1_i32, %c8_i32_22 : i32
    %49 = tpu.assume_multiple %48, 8 : i32
    %50 = arith.index_cast %49 : i32 to index
    %c0_23 = arith.constant 0 : index
    %51 = vector.load %arg11[%50, %c0_23] : memref<64x1024xf32, #tpu.memory_space<vmem>>, vector<8x1024xf32>
    %52 = arith.truncf %47 : vector<8x256xf32> to vector<8x256xbf16>
    %cst_24 = arith.constant dense<0.000000e+00> : vector<8x1024xf32>
    %53 = tpu.matmul %52, %7, %cst_24 {dimension_numbers = #tpu.dot_dimension_numbers<[1], [0], [0], [1], [0, 0, 1, 1], [], []>} : vector<8x256xbf16>, vector<256x1024xbf16>, vector<8x1024xf32> -> vector<8x1024xf32>
    %54 = arith.addf %51, %53 : vector<8x1024xf32>
    %55 = vector.extract_strided_slice %54 {offsets = [0, 0], sizes = [8, 256], strides = [1, 1]} : vector<8x1024xf32> to vector<8x256xf32>
    %cst_25 = arith.constant 5.000000e-01 : f32
    %56 = vector.broadcast %cst_25 : f32 to vector<8x256xf32>
    %57 = arith.mulf %56, %55 : vector<8x256xf32>
    %58 = math.tanh %57 : vector<8x256xf32>
    %cst_26 = arith.constant 5.000000e-01 : f32
    %59 = vector.broadcast %cst_26 : f32 to vector<8x256xf32>
    %60 = arith.mulf %59, %58 : vector<8x256xf32>
    %cst_27 = arith.constant 5.000000e-01 : f32
    %61 = vector.broadcast %cst_27 : f32 to vector<8x256xf32>
    %62 = arith.addf %60, %61 : vector<8x256xf32>
    %63 = vector.extract_strided_slice %54 {offsets = [0, 256], sizes = [8, 256], strides = [1, 1]} : vector<8x1024xf32> to vector<8x256xf32>
    %cst_28 = arith.constant 5.000000e-01 : f32
    %64 = vector.broadcast %cst_28 : f32 to vector<8x256xf32>
    %65 = arith.mulf %64, %63 : vector<8x256xf32>
    %66 = math.tanh %65 : vector<8x256xf32>
    %cst_29 = arith.constant 5.000000e-01 : f32
    %67 = vector.broadcast %cst_29 : f32 to vector<8x256xf32>
    %68 = arith.mulf %67, %66 : vector<8x256xf32>
    %cst_30 = arith.constant 5.000000e-01 : f32
    %69 = vector.broadcast %cst_30 : f32 to vector<8x256xf32>
    %70 = arith.addf %68, %69 : vector<8x256xf32>
    %71 = vector.extract_strided_slice %54 {offsets = [0, 512], sizes = [8, 256], strides = [1, 1]} : vector<8x1024xf32> to vector<8x256xf32>
    %72 = math.tanh %71 : vector<8x256xf32>
    %73 = vector.extract_strided_slice %54 {offsets = [0, 768], sizes = [8, 256], strides = [1, 1]} : vector<8x1024xf32> to vector<8x256xf32>
    %cst_31 = arith.constant 5.000000e-01 : f32
    %74 = vector.broadcast %cst_31 : f32 to vector<8x256xf32>
    %75 = arith.mulf %74, %73 : vector<8x256xf32>
    %76 = math.tanh %75 : vector<8x256xf32>
    %cst_32 = arith.constant 5.000000e-01 : f32
    %77 = vector.broadcast %cst_32 : f32 to vector<8x256xf32>
    %78 = arith.mulf %77, %76 : vector<8x256xf32>
    %cst_33 = arith.constant 5.000000e-01 : f32
    %79 = vector.broadcast %cst_33 : f32 to vector<8x256xf32>
    %80 = arith.addf %78, %79 : vector<8x256xf32>
    %81 = arith.mulf %70, %45 : vector<8x256xf32>
    %82 = arith.mulf %62, %72 : vector<8x256xf32>
    %83 = arith.addf %81, %82 : vector<8x256xf32>
    %84 = math.tanh %83 : vector<8x256xf32>
    %85 = arith.mulf %80, %84 : vector<8x256xf32>
    %c2_i32 = arith.constant 2 : i32
    %c8_i32_34 = arith.constant 8 : i32
    %86 = arith.muli %c2_i32, %c8_i32_34 : i32
    %87 = tpu.assume_multiple %86, 8 : i32
    %88 = arith.index_cast %87 : i32 to index
    %c0_35 = arith.constant 0 : index
    %89 = vector.load %arg11[%88, %c0_35] : memref<64x1024xf32, #tpu.memory_space<vmem>>, vector<8x1024xf32>
    %90 = arith.truncf %85 : vector<8x256xf32> to vector<8x256xbf16>
    %cst_36 = arith.constant dense<0.000000e+00> : vector<8x1024xf32>
    %91 = tpu.matmul %90, %7, %cst_36 {dimension_numbers = #tpu.dot_dimension_numbers<[1], [0], [0], [1], [0, 0, 1, 1], [], []>} : vector<8x256xbf16>, vector<256x1024xbf16>, vector<8x1024xf32> -> vector<8x1024xf32>
    %92 = arith.addf %89, %91 : vector<8x1024xf32>
    %93 = vector.extract_strided_slice %92 {offsets = [0, 0], sizes = [8, 256], strides = [1, 1]} : vector<8x1024xf32> to vector<8x256xf32>
    %cst_37 = arith.constant 5.000000e-01 : f32
    %94 = vector.broadcast %cst_37 : f32 to vector<8x256xf32>
    %95 = arith.mulf %94, %93 : vector<8x256xf32>
    %96 = math.tanh %95 : vector<8x256xf32>
    %cst_38 = arith.constant 5.000000e-01 : f32
    %97 = vector.broadcast %cst_38 : f32 to vector<8x256xf32>
    %98 = arith.mulf %97, %96 : vector<8x256xf32>
    %cst_39 = arith.constant 5.000000e-01 : f32
    %99 = vector.broadcast %cst_39 : f32 to vector<8x256xf32>
    %100 = arith.addf %98, %99 : vector<8x256xf32>
    %101 = vector.extract_strided_slice %92 {offsets = [0, 256], sizes = [8, 256], strides = [1, 1]} : vector<8x1024xf32> to vector<8x256xf32>
    %cst_40 = arith.constant 5.000000e-01 : f32
    %102 = vector.broadcast %cst_40 : f32 to vector<8x256xf32>
    %103 = arith.mulf %102, %101 : vector<8x256xf32>
    %104 = math.tanh %103 : vector<8x256xf32>
    %cst_41 = arith.constant 5.000000e-01 : f32
    %105 = vector.broadcast %cst_41 : f32 to vector<8x256xf32>
    %106 = arith.mulf %105, %104 : vector<8x256xf32>
    %cst_42 = arith.constant 5.000000e-01 : f32
    %107 = vector.broadcast %cst_42 : f32 to vector<8x256xf32>
    %108 = arith.addf %106, %107 : vector<8x256xf32>
    %109 = vector.extract_strided_slice %92 {offsets = [0, 512], sizes = [8, 256], strides = [1, 1]} : vector<8x1024xf32> to vector<8x256xf32>
    %110 = math.tanh %109 : vector<8x256xf32>
    %111 = vector.extract_strided_slice %92 {offsets = [0, 768], sizes = [8, 256], strides = [1, 1]} : vector<8x1024xf32> to vector<8x256xf32>
    %cst_43 = arith.constant 5.000000e-01 : f32
    %112 = vector.broadcast %cst_43 : f32 to vector<8x256xf32>
    %113 = arith.mulf %112, %111 : vector<8x256xf32>
    %114 = math.tanh %113 : vector<8x256xf32>
    %cst_44 = arith.constant 5.000000e-01 : f32
    %115 = vector.broadcast %cst_44 : f32 to vector<8x256xf32>
    %116 = arith.mulf %115, %114 : vector<8x256xf32>
    %cst_45 = arith.constant 5.000000e-01 : f32
    %117 = vector.broadcast %cst_45 : f32 to vector<8x256xf32>
    %118 = arith.addf %116, %117 : vector<8x256xf32>
    %119 = arith.mulf %108, %83 : vector<8x256xf32>
    %120 = arith.mulf %100, %110 : vector<8x256xf32>
    %121 = arith.addf %119, %120 : vector<8x256xf32>
    %122 = math.tanh %121 : vector<8x256xf32>
    %123 = arith.mulf %118, %122 : vector<8x256xf32>
    %c3_i32 = arith.constant 3 : i32
    %c8_i32_46 = arith.constant 8 : i32
    %124 = arith.muli %c3_i32, %c8_i32_46 : i32
    %125 = tpu.assume_multiple %124, 8 : i32
    %126 = arith.index_cast %125 : i32 to index
    %c0_47 = arith.constant 0 : index
    %127 = vector.load %arg11[%126, %c0_47] : memref<64x1024xf32, #tpu.memory_space<vmem>>, vector<8x1024xf32>
    %128 = arith.truncf %123 : vector<8x256xf32> to vector<8x256xbf16>
    %cst_48 = arith.constant dense<0.000000e+00> : vector<8x1024xf32>
    %129 = tpu.matmul %128, %7, %cst_48 {dimension_numbers = #tpu.dot_dimension_numbers<[1], [0], [0], [1], [0, 0, 1, 1], [], []>} : vector<8x256xbf16>, vector<256x1024xbf16>, vector<8x1024xf32> -> vector<8x1024xf32>
    %130 = arith.addf %127, %129 : vector<8x1024xf32>
    %131 = vector.extract_strided_slice %130 {offsets = [0, 0], sizes = [8, 256], strides = [1, 1]} : vector<8x1024xf32> to vector<8x256xf32>
    %cst_49 = arith.constant 5.000000e-01 : f32
    %132 = vector.broadcast %cst_49 : f32 to vector<8x256xf32>
    %133 = arith.mulf %132, %131 : vector<8x256xf32>
    %134 = math.tanh %133 : vector<8x256xf32>
    %cst_50 = arith.constant 5.000000e-01 : f32
    %135 = vector.broadcast %cst_50 : f32 to vector<8x256xf32>
    %136 = arith.mulf %135, %134 : vector<8x256xf32>
    %cst_51 = arith.constant 5.000000e-01 : f32
    %137 = vector.broadcast %cst_51 : f32 to vector<8x256xf32>
    %138 = arith.addf %136, %137 : vector<8x256xf32>
    %139 = vector.extract_strided_slice %130 {offsets = [0, 256], sizes = [8, 256], strides = [1, 1]} : vector<8x1024xf32> to vector<8x256xf32>
    %cst_52 = arith.constant 5.000000e-01 : f32
    %140 = vector.broadcast %cst_52 : f32 to vector<8x256xf32>
    %141 = arith.mulf %140, %139 : vector<8x256xf32>
    %142 = math.tanh %141 : vector<8x256xf32>
    %cst_53 = arith.constant 5.000000e-01 : f32
    %143 = vector.broadcast %cst_53 : f32 to vector<8x256xf32>
    %144 = arith.mulf %143, %142 : vector<8x256xf32>
    %cst_54 = arith.constant 5.000000e-01 : f32
    %145 = vector.broadcast %cst_54 : f32 to vector<8x256xf32>
    %146 = arith.addf %144, %145 : vector<8x256xf32>
    %147 = vector.extract_strided_slice %130 {offsets = [0, 512], sizes = [8, 256], strides = [1, 1]} : vector<8x1024xf32> to vector<8x256xf32>
    %148 = math.tanh %147 : vector<8x256xf32>
    %149 = vector.extract_strided_slice %130 {offsets = [0, 768], sizes = [8, 256], strides = [1, 1]} : vector<8x1024xf32> to vector<8x256xf32>
    %cst_55 = arith.constant 5.000000e-01 : f32
    %150 = vector.broadcast %cst_55 : f32 to vector<8x256xf32>
    %151 = arith.mulf %150, %149 : vector<8x256xf32>
    %152 = math.tanh %151 : vector<8x256xf32>
    %cst_56 = arith.constant 5.000000e-01 : f32
    %153 = vector.broadcast %cst_56 : f32 to vector<8x256xf32>
    %154 = arith.mulf %153, %152 : vector<8x256xf32>
    %cst_57 = arith.constant 5.000000e-01 : f32
    %155 = vector.broadcast %cst_57 : f32 to vector<8x256xf32>
    %156 = arith.addf %154, %155 : vector<8x256xf32>
    %157 = arith.mulf %146, %121 : vector<8x256xf32>
    %158 = arith.mulf %138, %148 : vector<8x256xf32>
    %159 = arith.addf %157, %158 : vector<8x256xf32>
    %160 = math.tanh %159 : vector<8x256xf32>
    %161 = arith.mulf %156, %160 : vector<8x256xf32>
    %c4_i32 = arith.constant 4 : i32
    %c8_i32_58 = arith.constant 8 : i32
    %162 = arith.muli %c4_i32, %c8_i32_58 : i32
    %163 = tpu.assume_multiple %162, 8 : i32
    %164 = arith.index_cast %163 : i32 to index
    %c0_59 = arith.constant 0 : index
    %165 = vector.load %arg11[%164, %c0_59] : memref<64x1024xf32, #tpu.memory_space<vmem>>, vector<8x1024xf32>
    %166 = arith.truncf %161 : vector<8x256xf32> to vector<8x256xbf16>
    %cst_60 = arith.constant dense<0.000000e+00> : vector<8x1024xf32>
    %167 = tpu.matmul %166, %7, %cst_60 {dimension_numbers = #tpu.dot_dimension_numbers<[1], [0], [0], [1], [0, 0, 1, 1], [], []>} : vector<8x256xbf16>, vector<256x1024xbf16>, vector<8x1024xf32> -> vector<8x1024xf32>
    %168 = arith.addf %165, %167 : vector<8x1024xf32>
    %169 = vector.extract_strided_slice %168 {offsets = [0, 0], sizes = [8, 256], strides = [1, 1]} : vector<8x1024xf32> to vector<8x256xf32>
    %cst_61 = arith.constant 5.000000e-01 : f32
    %170 = vector.broadcast %cst_61 : f32 to vector<8x256xf32>
    %171 = arith.mulf %170, %169 : vector<8x256xf32>
    %172 = math.tanh %171 : vector<8x256xf32>
    %cst_62 = arith.constant 5.000000e-01 : f32
    %173 = vector.broadcast %cst_62 : f32 to vector<8x256xf32>
    %174 = arith.mulf %173, %172 : vector<8x256xf32>
    %cst_63 = arith.constant 5.000000e-01 : f32
    %175 = vector.broadcast %cst_63 : f32 to vector<8x256xf32>
    %176 = arith.addf %174, %175 : vector<8x256xf32>
    %177 = vector.extract_strided_slice %168 {offsets = [0, 256], sizes = [8, 256], strides = [1, 1]} : vector<8x1024xf32> to vector<8x256xf32>
    %cst_64 = arith.constant 5.000000e-01 : f32
    %178 = vector.broadcast %cst_64 : f32 to vector<8x256xf32>
    %179 = arith.mulf %178, %177 : vector<8x256xf32>
    %180 = math.tanh %179 : vector<8x256xf32>
    %cst_65 = arith.constant 5.000000e-01 : f32
    %181 = vector.broadcast %cst_65 : f32 to vector<8x256xf32>
    %182 = arith.mulf %181, %180 : vector<8x256xf32>
    %cst_66 = arith.constant 5.000000e-01 : f32
    %183 = vector.broadcast %cst_66 : f32 to vector<8x256xf32>
    %184 = arith.addf %182, %183 : vector<8x256xf32>
    %185 = vector.extract_strided_slice %168 {offsets = [0, 512], sizes = [8, 256], strides = [1, 1]} : vector<8x1024xf32> to vector<8x256xf32>
    %186 = math.tanh %185 : vector<8x256xf32>
    %187 = vector.extract_strided_slice %168 {offsets = [0, 768], sizes = [8, 256], strides = [1, 1]} : vector<8x1024xf32> to vector<8x256xf32>
    %cst_67 = arith.constant 5.000000e-01 : f32
    %188 = vector.broadcast %cst_67 : f32 to vector<8x256xf32>
    %189 = arith.mulf %188, %187 : vector<8x256xf32>
    %190 = math.tanh %189 : vector<8x256xf32>
    %cst_68 = arith.constant 5.000000e-01 : f32
    %191 = vector.broadcast %cst_68 : f32 to vector<8x256xf32>
    %192 = arith.mulf %191, %190 : vector<8x256xf32>
    %cst_69 = arith.constant 5.000000e-01 : f32
    %193 = vector.broadcast %cst_69 : f32 to vector<8x256xf32>
    %194 = arith.addf %192, %193 : vector<8x256xf32>
    %195 = arith.mulf %184, %159 : vector<8x256xf32>
    %196 = arith.mulf %176, %186 : vector<8x256xf32>
    %197 = arith.addf %195, %196 : vector<8x256xf32>
    %198 = math.tanh %197 : vector<8x256xf32>
    %199 = arith.mulf %194, %198 : vector<8x256xf32>
    %c5_i32 = arith.constant 5 : i32
    %c8_i32_70 = arith.constant 8 : i32
    %200 = arith.muli %c5_i32, %c8_i32_70 : i32
    %201 = tpu.assume_multiple %200, 8 : i32
    %202 = arith.index_cast %201 : i32 to index
    %c0_71 = arith.constant 0 : index
    %203 = vector.load %arg11[%202, %c0_71] : memref<64x1024xf32, #tpu.memory_space<vmem>>, vector<8x1024xf32>
    %204 = arith.truncf %199 : vector<8x256xf32> to vector<8x256xbf16>
    %cst_72 = arith.constant dense<0.000000e+00> : vector<8x1024xf32>
    %205 = tpu.matmul %204, %7, %cst_72 {dimension_numbers = #tpu.dot_dimension_numbers<[1], [0], [0], [1], [0, 0, 1, 1], [], []>} : vector<8x256xbf16>, vector<256x1024xbf16>, vector<8x1024xf32> -> vector<8x1024xf32>
    %206 = arith.addf %203, %205 : vector<8x1024xf32>
    %207 = vector.extract_strided_slice %206 {offsets = [0, 0], sizes = [8, 256], strides = [1, 1]} : vector<8x1024xf32> to vector<8x256xf32>
    %cst_73 = arith.constant 5.000000e-01 : f32
    %208 = vector.broadcast %cst_73 : f32 to vector<8x256xf32>
    %209 = arith.mulf %208, %207 : vector<8x256xf32>
    %210 = math.tanh %209 : vector<8x256xf32>
    %cst_74 = arith.constant 5.000000e-01 : f32
    %211 = vector.broadcast %cst_74 : f32 to vector<8x256xf32>
    %212 = arith.mulf %211, %210 : vector<8x256xf32>
    %cst_75 = arith.constant 5.000000e-01 : f32
    %213 = vector.broadcast %cst_75 : f32 to vector<8x256xf32>
    %214 = arith.addf %212, %213 : vector<8x256xf32>
    %215 = vector.extract_strided_slice %206 {offsets = [0, 256], sizes = [8, 256], strides = [1, 1]} : vector<8x1024xf32> to vector<8x256xf32>
    %cst_76 = arith.constant 5.000000e-01 : f32
    %216 = vector.broadcast %cst_76 : f32 to vector<8x256xf32>
    %217 = arith.mulf %216, %215 : vector<8x256xf32>
    %218 = math.tanh %217 : vector<8x256xf32>
    %cst_77 = arith.constant 5.000000e-01 : f32
    %219 = vector.broadcast %cst_77 : f32 to vector<8x256xf32>
    %220 = arith.mulf %219, %218 : vector<8x256xf32>
    %cst_78 = arith.constant 5.000000e-01 : f32
    %221 = vector.broadcast %cst_78 : f32 to vector<8x256xf32>
    %222 = arith.addf %220, %221 : vector<8x256xf32>
    %223 = vector.extract_strided_slice %206 {offsets = [0, 512], sizes = [8, 256], strides = [1, 1]} : vector<8x1024xf32> to vector<8x256xf32>
    %224 = math.tanh %223 : vector<8x256xf32>
    %225 = vector.extract_strided_slice %206 {offsets = [0, 768], sizes = [8, 256], strides = [1, 1]} : vector<8x1024xf32> to vector<8x256xf32>
    %cst_79 = arith.constant 5.000000e-01 : f32
    %226 = vector.broadcast %cst_79 : f32 to vector<8x256xf32>
    %227 = arith.mulf %226, %225 : vector<8x256xf32>
    %228 = math.tanh %227 : vector<8x256xf32>
    %cst_80 = arith.constant 5.000000e-01 : f32
    %229 = vector.broadcast %cst_80 : f32 to vector<8x256xf32>
    %230 = arith.mulf %229, %228 : vector<8x256xf32>
    %cst_81 = arith.constant 5.000000e-01 : f32
    %231 = vector.broadcast %cst_81 : f32 to vector<8x256xf32>
    %232 = arith.addf %230, %231 : vector<8x256xf32>
    %233 = arith.mulf %222, %197 : vector<8x256xf32>
    %234 = arith.mulf %214, %224 : vector<8x256xf32>
    %235 = arith.addf %233, %234 : vector<8x256xf32>
    %236 = math.tanh %235 : vector<8x256xf32>
    %237 = arith.mulf %232, %236 : vector<8x256xf32>
    %c6_i32 = arith.constant 6 : i32
    %c8_i32_82 = arith.constant 8 : i32
    %238 = arith.muli %c6_i32, %c8_i32_82 : i32
    %239 = tpu.assume_multiple %238, 8 : i32
    %240 = arith.index_cast %239 : i32 to index
    %c0_83 = arith.constant 0 : index
    %241 = vector.load %arg11[%240, %c0_83] : memref<64x1024xf32, #tpu.memory_space<vmem>>, vector<8x1024xf32>
    %242 = arith.truncf %237 : vector<8x256xf32> to vector<8x256xbf16>
    %cst_84 = arith.constant dense<0.000000e+00> : vector<8x1024xf32>
    %243 = tpu.matmul %242, %7, %cst_84 {dimension_numbers = #tpu.dot_dimension_numbers<[1], [0], [0], [1], [0, 0, 1, 1], [], []>} : vector<8x256xbf16>, vector<256x1024xbf16>, vector<8x1024xf32> -> vector<8x1024xf32>
    %244 = arith.addf %241, %243 : vector<8x1024xf32>
    %245 = vector.extract_strided_slice %244 {offsets = [0, 0], sizes = [8, 256], strides = [1, 1]} : vector<8x1024xf32> to vector<8x256xf32>
    %cst_85 = arith.constant 5.000000e-01 : f32
    %246 = vector.broadcast %cst_85 : f32 to vector<8x256xf32>
    %247 = arith.mulf %246, %245 : vector<8x256xf32>
    %248 = math.tanh %247 : vector<8x256xf32>
    %cst_86 = arith.constant 5.000000e-01 : f32
    %249 = vector.broadcast %cst_86 : f32 to vector<8x256xf32>
    %250 = arith.mulf %249, %248 : vector<8x256xf32>
    %cst_87 = arith.constant 5.000000e-01 : f32
    %251 = vector.broadcast %cst_87 : f32 to vector<8x256xf32>
    %252 = arith.addf %250, %251 : vector<8x256xf32>
    %253 = vector.extract_strided_slice %244 {offsets = [0, 256], sizes = [8, 256], strides = [1, 1]} : vector<8x1024xf32> to vector<8x256xf32>
    %cst_88 = arith.constant 5.000000e-01 : f32
    %254 = vector.broadcast %cst_88 : f32 to vector<8x256xf32>
    %255 = arith.mulf %254, %253 : vector<8x256xf32>
    %256 = math.tanh %255 : vector<8x256xf32>
    %cst_89 = arith.constant 5.000000e-01 : f32
    %257 = vector.broadcast %cst_89 : f32 to vector<8x256xf32>
    %258 = arith.mulf %257, %256 : vector<8x256xf32>
    %cst_90 = arith.constant 5.000000e-01 : f32
    %259 = vector.broadcast %cst_90 : f32 to vector<8x256xf32>
    %260 = arith.addf %258, %259 : vector<8x256xf32>
    %261 = vector.extract_strided_slice %244 {offsets = [0, 512], sizes = [8, 256], strides = [1, 1]} : vector<8x1024xf32> to vector<8x256xf32>
    %262 = math.tanh %261 : vector<8x256xf32>
    %263 = vector.extract_strided_slice %244 {offsets = [0, 768], sizes = [8, 256], strides = [1, 1]} : vector<8x1024xf32> to vector<8x256xf32>
    %cst_91 = arith.constant 5.000000e-01 : f32
    %264 = vector.broadcast %cst_91 : f32 to vector<8x256xf32>
    %265 = arith.mulf %264, %263 : vector<8x256xf32>
    %266 = math.tanh %265 : vector<8x256xf32>
    %cst_92 = arith.constant 5.000000e-01 : f32
    %267 = vector.broadcast %cst_92 : f32 to vector<8x256xf32>
    %268 = arith.mulf %267, %266 : vector<8x256xf32>
    %cst_93 = arith.constant 5.000000e-01 : f32
    %269 = vector.broadcast %cst_93 : f32 to vector<8x256xf32>
    %270 = arith.addf %268, %269 : vector<8x256xf32>
    %271 = arith.mulf %260, %235 : vector<8x256xf32>
    %272 = arith.mulf %252, %262 : vector<8x256xf32>
    %273 = arith.addf %271, %272 : vector<8x256xf32>
    %274 = math.tanh %273 : vector<8x256xf32>
    %275 = arith.mulf %270, %274 : vector<8x256xf32>
    %c7_i32 = arith.constant 7 : i32
    %c8_i32_94 = arith.constant 8 : i32
    %276 = arith.muli %c7_i32, %c8_i32_94 : i32
    %277 = tpu.assume_multiple %276, 8 : i32
    %278 = arith.index_cast %277 : i32 to index
    %c0_95 = arith.constant 0 : index
    %279 = vector.load %arg11[%278, %c0_95] : memref<64x1024xf32, #tpu.memory_space<vmem>>, vector<8x1024xf32>
    %280 = arith.truncf %275 : vector<8x256xf32> to vector<8x256xbf16>
    %cst_96 = arith.constant dense<0.000000e+00> : vector<8x1024xf32>
    %281 = tpu.matmul %280, %7, %cst_96 {dimension_numbers = #tpu.dot_dimension_numbers<[1], [0], [0], [1], [0, 0, 1, 1], [], []>} : vector<8x256xbf16>, vector<256x1024xbf16>, vector<8x1024xf32> -> vector<8x1024xf32>
    %282 = arith.addf %279, %281 : vector<8x1024xf32>
    %283 = vector.extract_strided_slice %282 {offsets = [0, 0], sizes = [8, 256], strides = [1, 1]} : vector<8x1024xf32> to vector<8x256xf32>
    %cst_97 = arith.constant 5.000000e-01 : f32
    %284 = vector.broadcast %cst_97 : f32 to vector<8x256xf32>
    %285 = arith.mulf %284, %283 : vector<8x256xf32>
    %286 = math.tanh %285 : vector<8x256xf32>
    %cst_98 = arith.constant 5.000000e-01 : f32
    %287 = vector.broadcast %cst_98 : f32 to vector<8x256xf32>
    %288 = arith.mulf %287, %286 : vector<8x256xf32>
    %cst_99 = arith.constant 5.000000e-01 : f32
    %289 = vector.broadcast %cst_99 : f32 to vector<8x256xf32>
    %290 = arith.addf %288, %289 : vector<8x256xf32>
    %291 = vector.extract_strided_slice %282 {offsets = [0, 256], sizes = [8, 256], strides = [1, 1]} : vector<8x1024xf32> to vector<8x256xf32>
    %cst_100 = arith.constant 5.000000e-01 : f32
    %292 = vector.broadcast %cst_100 : f32 to vector<8x256xf32>
    %293 = arith.mulf %292, %291 : vector<8x256xf32>
    %294 = math.tanh %293 : vector<8x256xf32>
    %cst_101 = arith.constant 5.000000e-01 : f32
    %295 = vector.broadcast %cst_101 : f32 to vector<8x256xf32>
    %296 = arith.mulf %295, %294 : vector<8x256xf32>
    %cst_102 = arith.constant 5.000000e-01 : f32
    %297 = vector.broadcast %cst_102 : f32 to vector<8x256xf32>
    %298 = arith.addf %296, %297 : vector<8x256xf32>
    %299 = vector.extract_strided_slice %282 {offsets = [0, 512], sizes = [8, 256], strides = [1, 1]} : vector<8x1024xf32> to vector<8x256xf32>
    %300 = math.tanh %299 : vector<8x256xf32>
    %301 = vector.extract_strided_slice %282 {offsets = [0, 768], sizes = [8, 256], strides = [1, 1]} : vector<8x1024xf32> to vector<8x256xf32>
    %cst_103 = arith.constant 5.000000e-01 : f32
    %302 = vector.broadcast %cst_103 : f32 to vector<8x256xf32>
    %303 = arith.mulf %302, %301 : vector<8x256xf32>
    %304 = math.tanh %303 : vector<8x256xf32>
    %cst_104 = arith.constant 5.000000e-01 : f32
    %305 = vector.broadcast %cst_104 : f32 to vector<8x256xf32>
    %306 = arith.mulf %305, %304 : vector<8x256xf32>
    %cst_105 = arith.constant 5.000000e-01 : f32
    %307 = vector.broadcast %cst_105 : f32 to vector<8x256xf32>
    %308 = arith.addf %306, %307 : vector<8x256xf32>
    %309 = arith.mulf %298, %273 : vector<8x256xf32>
    %310 = arith.mulf %290, %300 : vector<8x256xf32>
    %311 = arith.addf %309, %310 : vector<8x256xf32>
    %312 = math.tanh %311 : vector<8x256xf32>
    %313 = arith.mulf %308, %312 : vector<8x256xf32>
    %c8_i32_106 = arith.constant 8 : i32
    %314 = arith.truncf %313 : vector<8x256xf32> to vector<8x256xbf16>
    %c0_107 = arith.constant 0 : index
    %c0_108 = arith.constant 0 : index
    %315 = vector.load %arg4[%c0_107, %c0_108] : memref<256x128xbf16, #tpu.memory_space<vmem>>, vector<256x128xbf16>
    %cst_109 = arith.constant dense<0.000000e+00> : vector<8x128xf32>
    %316 = tpu.matmul %314, %315, %cst_109 {dimension_numbers = #tpu.dot_dimension_numbers<[1], [0], [0], [1], [0, 0, 1, 1], [], []>} : vector<8x256xbf16>, vector<256x128xbf16>, vector<8x128xf32> -> vector<8x128xf32>
    %c0_110 = arith.constant 0 : index
    %c0_111 = arith.constant 0 : index
    %317 = vector.load %arg5[%c0_110, %c0_111] : memref<1x128xf32, #tpu.memory_space<vmem>>, vector<1x128xf32>
    %318 = vector.broadcast %317 : vector<1x128xf32> to vector<8x128xf32>
    %319 = arith.addf %316, %318 : vector<8x128xf32>
    %cst_112 = arith.constant 0.000000e+00 : f32
    %320 = vector.broadcast %cst_112 : f32 to vector<8x128xf32>
    %321 = arith.maximumf %319, %320 : vector<8x128xf32>
    %322 = arith.truncf %321 : vector<8x128xf32> to vector<8x128xbf16>
    %c0_113 = arith.constant 0 : index
    %c0_114 = arith.constant 0 : index
    %323 = vector.load %arg6[%c0_113, %c0_114] : memref<128x64xbf16, #tpu.memory_space<vmem>>, vector<128x64xbf16>
    %cst_115 = arith.constant dense<0.000000e+00> : vector<8x64xf32>
    %324 = tpu.matmul %322, %323, %cst_115 {dimension_numbers = #tpu.dot_dimension_numbers<[1], [0], [0], [1], [0, 0, 1, 1], [], []>} : vector<8x128xbf16>, vector<128x64xbf16>, vector<8x64xf32> -> vector<8x64xf32>
    %c0_116 = arith.constant 0 : index
    %c0_117 = arith.constant 0 : index
    %325 = vector.load %arg7[%c0_116, %c0_117] : memref<1x64xf32, #tpu.memory_space<vmem>>, vector<1x64xf32>
    %326 = vector.broadcast %325 : vector<1x64xf32> to vector<8x64xf32>
    %327 = arith.addf %324, %326 : vector<8x64xf32>
    %cst_118 = arith.constant 0.000000e+00 : f32
    %328 = vector.broadcast %cst_118 : f32 to vector<8x64xf32>
    %329 = arith.maximumf %327, %328 : vector<8x64xf32>
    %330 = arith.truncf %329 : vector<8x64xf32> to vector<8x64xbf16>
    %c0_119 = arith.constant 0 : index
    %c0_120 = arith.constant 0 : index
    %331 = vector.load %arg8[%c0_119, %c0_120] : memref<64x128xbf16, #tpu.memory_space<vmem>>, vector<64x128xbf16>
    %cst_121 = arith.constant dense<0.000000e+00> : vector<8x128xf32>
    %332 = tpu.matmul %330, %331, %cst_121 {dimension_numbers = #tpu.dot_dimension_numbers<[1], [0], [0], [1], [0, 0, 1, 1], [], []>} : vector<8x64xbf16>, vector<64x128xbf16>, vector<8x128xf32> -> vector<8x128xf32>
    %c0_122 = arith.constant 0 : index
    %c0_123 = arith.constant 0 : index
    %333 = vector.load %arg9[%c0_122, %c0_123] : memref<1x128xf32, #tpu.memory_space<vmem>>, vector<1x128xf32>
    %334 = vector.broadcast %333 : vector<1x128xf32> to vector<8x128xf32>
    %335 = arith.addf %332, %334 : vector<8x128xf32>
    %c0_124 = arith.constant 0 : index
    %c0_125 = arith.constant 0 : index
    %336 = vector.load %arg10[%c0_124, %c0_125] : memref<8x128xf32, #tpu.memory_space<vmem>>, vector<8x128xf32>
    tpu.vector_store %arg10[%c0_124, %c0_125], %335 {strides = array<i32>} : memref<8x128xf32, #tpu.memory_space<vmem>>, vector<8x128xf32>,
    return
  }
}

</mosaic_0001>

<llo_original>
// kernel: tpu_custom_call.1
$region0: #{tpu_custom_call.1}
  #allocation0 [shape = 'u32[]', space=smem, size = 0x4, offset = 0x4, fixed_abs, tag = 'smem constant byte address 0x4 - core index']
  #allocation1 [shape = 'u32[144,128]{1,0:T(1,128)}', space=vmem, size = 0x12000, scoped, tag = 'internal scratch']
  #allocation2 [shape = 'f32[64,1024]{1,0:T(8,128)}', space=vmem, size = 0x40000, scoped, tag = 'scratch operand']
  %s0 = inlined_call_operand.vmem [shape: bf16[64,32], index: 0, kind: input, shape index: {}]
  %s1 = inlined_call_operand.vmem [shape: bf16[32,1024], index: 1, kind: input, shape index: {}]
  %s2 = inlined_call_operand.hbm [shape: bf16[256,1024], index: 2, kind: input, shape index: {}]
  %s3 = inlined_call_operand.hbm [shape: f32[1,1024], index: 3, kind: input, shape index: {}]
  %s4 = inlined_call_operand.hbm [shape: bf16[256,128], index: 4, kind: input, shape index: {}]
  %s5 = inlined_call_operand.vmem [shape: f32[1,128], index: 5, kind: input, shape index: {}]
  %s6 = inlined_call_operand.vmem [shape: bf16[128,64], index: 6, kind: input, shape index: {}]
  %s7 = inlined_call_operand.vmem [shape: f32[1,64], index: 7, kind: input, shape index: {}]
  %s8 = inlined_call_operand.hbm [shape: bf16[64,128], index: 8, kind: input, shape index: {}]
  %s9 = inlined_call_operand.vmem [shape: f32[1,128], index: 9, kind: input, shape index: {}]
  %s10 = inlined_call_operand.hbm [shape: f32[8,128], index: 10, kind: output, shape index: {}]
  %s11 = sld [smem:[#allocation0]]
  $region66: #{tpu_custom_call.1} parent=0
    _
  %s13 = ssub.s32 1, %s11
  %s14 = scalar_select 0, %s13, %s11
  $region1: #{tpu_custom_call.1} parent=0
    #allocation3 [shape = 'u8[524288]{0}', space=vmem, size = 0x80000, scoped, tag = 'input window, operand 2, single buffered']
    #allocation4 [shape = 's32[1]{0}', space=sflag, size = 0x4, scoped, tag = 'scoped memory for tpu_custom_call.1']
    #allocation5 [shape = 's32[1]{0}', space=sflag, size = 0x4, scoped, tag = 'scoped memory for tpu_custom_call.1']
    #allocation6 [shape = 'u8[4096]{0}', space=vmem, size = 0x1000, scoped, tag = 'input window, operand 3, single buffered']
    #allocation7 [shape = 's32[1]{0}', space=sflag, size = 0x4, scoped, tag = 'scoped memory for tpu_custom_call.1']
    #allocation8 [shape = 'u8[65536]{0}', space=vmem, size = 0x10000, scoped, tag = 'input window, operand 4, single buffered']
    #allocation9 [shape = 'u8[16384]{0}', space=vmem, size = 0x4000, scoped, tag = 'input window, operand 8, single buffered']
    #allocation10 [shape = 's32[1]{0}', space=sflag, size = 0x4, scoped, tag = 'scoped memory for tpu_custom_call.1']
    #allocation11 [shape = 'u8[4096]{0}', space=vmem, size = 0x1000, scoped, tag = 'output window, operand 0, single buffered']
    %15 = vsyncpa [#allocation4], 0
    %16 = vsyncpa [#allocation7], 0
    %17 = vsyncpa [#allocation10], 0
    %18 = vsyncpa [#allocation5], 0
    // Predicated region
    $region2: #{tpu_custom_call.1} parent=1 // pred_check
      _
    $region3: #{tpu_custom_call.1} parent=1 // pred_check_branch
      %20 = sbr.rel (0) target = $region5
    $region4: #{tpu_custom_call.1} parent=1 // pred_region
      _
    $region5: #{tpu_custom_call.1} parent=1 // pred_fallthru
      _
    // Predicated region
    $region6: #{tpu_custom_call.1} parent=1 // pred_check
      _
    $region7: #{tpu_custom_call.1} parent=1 // pred_check_branch
      %22 = sbr.rel (0) target = $region9
    $region8: #{tpu_custom_call.1} parent=1 // pred_region
      _
    $region9: #{tpu_custom_call.1} parent=1 // pred_fallthru
      _
    // Predicated region
    $region10: #{tpu_custom_call.1} parent=1 // pred_check
      _
    $region11: #{tpu_custom_call.1} parent=1 // pred_check_branch
      %24 = sbr.rel (0) target = $region13
    $region12: #{tpu_custom_call.1} parent=1 // pred_region
      %s26 = ssub.s32 16384, 16384
      %27 = vsyncadd [#allocation4], %s26
      %s28 = sshll.u32 [#allocation3], 4
      %s29 = int_to_ptr.vmem [resolvable:$true] %s28
      %34 = dma.hbm_to_vmem [thread:$0]  %s2, 16384, %s29, [#allocation4], 512, 512, 32
    $region13: #{tpu_custom_call.1} parent=1 // pred_fallthru
      _
    // Predicated region
    $region14: #{tpu_custom_call.1} parent=1 // pred_check
      _
    $region15: #{tpu_custom_call.1} parent=1 // pred_check_branch
      %36 = sbr.rel (0) target = $region17
    $region16: #{tpu_custom_call.1} parent=1 // pred_region
      %s38 = ssub.s32 128, 128
      %39 = vsyncadd [#allocation7], %s38
      %s41 = sshll.u32 [#allocation6], 4
      %s42 = int_to_ptr.vmem [resolvable:$true] %s41
      %44 = dma.hbm_to_vmem [thread:$0]  %s3, 128, %s42, [#allocation7]
    $region17: #{tpu_custom_call.1} parent=1 // pred_fallthru
      _
    // Predicated region
    $region18: #{tpu_custom_call.1} parent=1 // pred_check
      _
    $region19: #{tpu_custom_call.1} parent=1 // pred_check_branch
      %46 = sbr.rel (0) target = $region21
    $region20: #{tpu_custom_call.1} parent=1 // pred_region
      %s48 = ssub.s32 2048, 2048
      %49 = vsyncadd [#allocation7], %s48
      %s50 = sshll.u32 [#allocation8], 4
      %s51 = int_to_ptr.vmem [resolvable:$true] %s50
      %56 = dma.hbm_to_vmem [thread:$0]  %s4, 2048, %s51, [#allocation7], 64, 64, 4
    $region21: #{tpu_custom_call.1} parent=1 // pred_fallthru
      _
    // Predicated region
    $region22: #{tpu_custom_call.1} parent=1 // pred_check
      _
    $region23: #{tpu_custom_call.1} parent=1 // pred_check_branch
      %58 = sbr.rel (0) target = $region25
    $region24: #{tpu_custom_call.1} parent=1 // pred_region
      _
    $region25: #{tpu_custom_call.1} parent=1 // pred_fallthru
      _
    // Predicated region
    $region26: #{tpu_custom_call.1} parent=1 // pred_check
      _
    $region27: #{tpu_custom_call.1} parent=1 // pred_check_branch
      %60 = sbr.rel (0) target = $region29
    $region28: #{tpu_custom_call.1} parent=1 // pred_region
      _
    $region29: #{tpu_custom_call.1} parent=1 // pred_fallthru
      _
    // Predicated region
    $region30: #{tpu_custom_call.1} parent=1 // pred_check
      _
    $region31: #{tpu_custom_call.1} parent=1 // pred_check_branch
      %62 = sbr.rel (0) target = $region33
    $region32: #{tpu_custom_call.1} parent=1 // pred_region
      _
    $region33: #{tpu_custom_call.1} parent=1 // pred_fallthru
      _
    // Predicated region
    $region34: #{tpu_custom_call.1} parent=1 // pred_check
      _
    $region35: #{tpu_custom_call.1} parent=1 // pred_check_branch
      %64 = sbr.rel (0) target = $region37
    $region36: #{tpu_custom_call.1} parent=1 // pred_region
      %s66 = ssub.s32 512, 512
      %67 = vsyncadd [#allocation10], %s66
      %s68 = sshll.u32 [#allocation9], 4
      %s69 = int_to_ptr.vmem [resolvable:$true] %s68
      %74 = dma.hbm_to_vmem [thread:$0]  %s8, 512, %s69, [#allocation10], 64, 64, 4
    $region37: #{tpu_custom_call.1} parent=1 // pred_fallthru
      _
    // Predicated region
    $region38: #{tpu_custom_call.1} parent=1 // pred_check
      _
    $region39: #{tpu_custom_call.1} parent=1 // pred_check_branch
      %76 = sbr.rel (0) target = $region41
    $region40: #{tpu_custom_call.1} parent=1 // pred_region
      _
    $region41: #{tpu_custom_call.1} parent=1 // pred_fallthru
      _
    // Predicated region
    $region42: #{tpu_custom_call.1} parent=1 // pred_check
      _
    $region43: #{tpu_custom_call.1} parent=1 // pred_check_branch
      %78 = sbr.rel (0) target = $region45
    $region44: #{tpu_custom_call.1} parent=1 // pred_region
      %79 = dma.done [#allocation4], 16384
    $region45: #{tpu_custom_call.1} parent=1 // pred_fallthru
      _
    // Predicated region
    $region46: #{tpu_custom_call.1} parent=1 // pred_check
      _
    $region47: #{tpu_custom_call.1} parent=1 // pred_check_branch
      %81 = sbr.rel (0) target = $region49
    $region48: #{tpu_custom_call.1} parent=1 // pred_region
      %82 = dma.done [#allocation7], 128
    $region49: #{tpu_custom_call.1} parent=1 // pred_fallthru
      _
    // Predicated region
    $region50: #{tpu_custom_call.1} parent=1 // pred_check
      _
    $region51: #{tpu_custom_call.1} parent=1 // pred_check_branch
      %84 = sbr.rel (0) target = $region53
    $region52: #{tpu_custom_call.1} parent=1 // pred_region
      %85 = dma.done [#allocation7], 2048
    $region53: #{tpu_custom_call.1} parent=1 // pred_fallthru
      _
    // Predicated region
    $region54: #{tpu_custom_call.1} parent=1 // pred_check
      _
    $region55: #{tpu_custom_call.1} parent=1 // pred_check_branch
      %87 = sbr.rel (0) target = $region57
    $region56: #{tpu_custom_call.1} parent=1 // pred_region
      %88 = dma.done [#allocation10], 512
    $region57: #{tpu_custom_call.1} parent=1 // pred_fallthru
      _
    %v90 = vld [vmem:[%s0] sm:$0xf]
    %v91 = vld [vmem:[%s0 + $0x4] sm:$0xf]
    %v92 = vld [vmem:[%s0 + $0x8] sm:$0xf]
    %v93 = vld [vmem:[%s0 + $0xc] sm:$0xf]
    %v94 = vld [vmem:[%s0 + $0x10] sm:$0xf]
    %v95 = vld [vmem:[%s0 + $0x14] sm:$0xf]
    %v96 = vld [vmem:[%s0 + $0x18] sm:$0xf]
    %v97 = vld [vmem:[%s0 + $0x1c] sm:$0xf]
    %v98 = vld [vmem:[%s1] sm:$0xff]
    %v99 = vld [vmem:[%s1 + $0x8] sm:$0xff]
    %v100 = vld [vmem:[%s1 + $0x10] sm:$0xff]
    %v101 = vld [vmem:[%s1 + $0x18] sm:$0xff]
    %v102 = vld [vmem:[%s1 + $0x20] sm:$0xff]
    %v103 = vld [vmem:[%s1 + $0x28] sm:$0xff]
    %v104 = vld [vmem:[%s1 + $0x30] sm:$0xff]
    %v105 = vld [vmem:[%s1 + $0x38] sm:$0xff]
    %v106 = vld [vmem:[%s1 + $0x40] sm:$0xff]
    %v107 = vld [vmem:[%s1 + $0x48] sm:$0xff]
    %v108 = vld [vmem:[%s1 + $0x50] sm:$0xff]
    %v109 = vld [vmem:[%s1 + $0x58] sm:$0xff]
    %v110 = vld [vmem:[%s1 + $0x60] sm:$0xff]
    %v111 = vld [vmem:[%s1 + $0x68] sm:$0xff]
    %v112 = vld [vmem:[%s1 + $0x70] sm:$0xff]
    %v113 = vld [vmem:[%s1 + $0x78] sm:$0xff]
    %v114 = vld [vmem:[#allocation6] sm:$0xff]
    %v116 = vlaneseq
    %v117 = vshrl.u32 %v116, 7
    %v118 = vsub.s32 0, %v117
    %v119 = vrot.slane %v114, %v118
    %v120 = vlaneseq
    %v121 = vshrl.u32 %v120, 7
    %v122 = vsub.s32 1, %v121
    %v123 = vrot.slane %v114, %v122
    %v124 = vlaneseq
    %v125 = vshrl.u32 %v124, 7
    %v126 = vsub.s32 2, %v125
    %v127 = vrot.slane %v114, %v126
    %v128 = vlaneseq
    %v129 = vshrl.u32 %v128, 7
    %v130 = vsub.s32 3, %v129
    %v131 = vrot.slane %v114, %v130
    %v132 = vlaneseq
    %v133 = vshrl.u32 %v132, 7
    %v134 = vsub.s32 4, %v133
    %v135 = vrot.slane %v114, %v134
    %v136 = vlaneseq
    %v137 = vshrl.u32 %v136, 7
    %v138 = vsub.s32 5, %v137
    %v139 = vrot.slane %v114, %v138
    %v140 = vlaneseq
    %v141 = vshrl.u32 %v140, 7
    %v142 = vsub.s32 6, %v141
    %v143 = vrot.slane %v114, %v142
    %v144 = vlaneseq
    %v145 = vshrl.u32 %v144, 7
    %v146 = vsub.s32 7, %v145
    %v147 = vrot.slane %v114, %v146
    %v164 = vunpack.c.l.b16 %v90
    %v165 = vunpack.c.l.b16 %v91
    %v166 = vunpack.c.l.b16 %v92
    %v167 = vunpack.c.l.b16 %v93
    %v168 = vunpack.c.l.b16 %v94
    %v169 = vunpack.c.l.b16 %v95
    %v170 = vunpack.c.l.b16 %v96
    %v171 = vunpack.c.l.b16 %v97
    %v172 = vpack.c.b16 %v165, %v164
    %v173 = vpack.c.b16 %v167, %v166
    %v174 = vpack.c.b16 %v169, %v168
    %v175 = vpack.c.b16 %v171, %v170
    %v192 = vunpack.c.l.b16 %v98
    %v193 = vunpack.c.h.b16 %v98
    %v194 = vunpack.c.l.b16 %v99
    %v195 = vunpack.c.h.b16 %v99
    %v196 = vunpack.c.l.b16 %v100
    %v197 = vunpack.c.h.b16 %v100
    %v198 = vunpack.c.l.b16 %v101
    %v199 = vunpack.c.h.b16 %v101
    %v200 = vunpack.c.l.b16 %v102
    %v201 = vunpack.c.h.b16 %v102
    %v202 = vunpack.c.l.b16 %v103
    %v203 = vunpack.c.h.b16 %v103
    %v204 = vunpack.c.l.b16 %v104
    %v205 = vunpack.c.h.b16 %v104
    %v206 = vunpack.c.l.b16 %v105
    %v207 = vunpack.c.h.b16 %v105
    %v208 = vunpack.c.l.b16 %v106
    %v209 = vunpack.c.h.b16 %v106
    %v210 = vunpack.c.l.b16 %v107
    %v211 = vunpack.c.h.b16 %v107
    %v212 = vunpack.c.l.b16 %v108
    %v213 = vunpack.c.h.b16 %v108
    %v214 = vunpack.c.l.b16 %v109
    %v215 = vunpack.c.h.b16 %v109
    %v216 = vunpack.c.l.b16 %v110
    %v217 = vunpack.c.h.b16 %v110
    %v218 = vunpack.c.l.b16 %v111
    %v219 = vunpack.c.h.b16 %v111
    %v220 = vunpack.c.l.b16 %v112
    %v221 = vunpack.c.h.b16 %v112
    %v222 = vunpack.c.l.b16 %v113
    %v223 = vunpack.c.h.b16 %v113
    %v224 = vpack.c.b16 %v200, %v192
    %v225 = vpack.c.b16 %v201, %v193
    %v226 = vpack.c.b16 %v202, %v194
    %v227 = vpack.c.b16 %v203, %v195
    %v228 = vpack.c.b16 %v204, %v196
    %v229 = vpack.c.b16 %v205, %v197
    %v230 = vpack.c.b16 %v206, %v198
    %v231 = vpack.c.b16 %v207, %v199
    %v232 = vpack.c.b16 %v216, %v208
    %v233 = vpack.c.b16 %v217, %v209
    %v234 = vpack.c.b16 %v218, %v210
    %v235 = vpack.c.b16 %v219, %v211
    %v236 = vpack.c.b16 %v220, %v212
    %v237 = vpack.c.b16 %v221, %v213
    %v238 = vpack.c.b16 %v222, %v214
    %v239 = vpack.c.b16 %v223, %v215
    %vm256 = vcmask 261120
    %v258 = vsel %vm256, %v172, 0
    %v261 = vsel %vm256, %v173, 0
    %v264 = vsel %vm256, %v174, 0
    %v267 = vsel %vm256, %v175, 0
    %269 = vmatprep.subr.bf16.mxu0 %v225
    %270 = vmatpush1.bf16.msra.mxu0 %v224
    %271 = vmatprep.subr.bf16.mxu0 %v233
    %272 = vmatpush1.bf16.msra.mxu0 %v232
    %273 = vmatprep.subr.bf16.mxu0 0
    %274 = vmatpush1.bf16.msra.mxu0 0
    %275 = vmatprep.subr.bf16.mxu0 0
    %276 = vmatpush1.bf16.msra.mxu0 0
    %277 = vmatprep.subr.bf16.mxu0 0
    %278 = vmatpush1.bf16.msra.mxu0 0
    %279 = vmatprep.subr.bf16.mxu0 0
    %280 = vmatpush1.bf16.msra.mxu0 0
    %281 = vmatprep.subr.bf16.mxu0 0
    %282 = vmatpush1.bf16.msra.mxu0 0
    %283 = vmatprep.subr.bf16.mxu0 0
    %284 = vmatpush1.bf16.msra.mxu0 0
    %285 = vmatprep.subr.bf16.mxu0 0
    %286 = vmatpush1.bf16.msra.mxu0 0
    %287 = vmatprep.subr.bf16.mxu0 0
    %288 = vmatpush1.bf16.msra.mxu0 0
    %289 = vmatprep.subr.bf16.mxu0 0
    %290 = vmatpush1.bf16.msra.mxu0 0
    %291 = vmatprep.subr.bf16.mxu0 0
    %292 = vmatpush1.bf16.msra.mxu0 0
    %293 = vmatprep.subr.bf16.mxu0 0
    %294 = vmatpush1.bf16.msra.mxu0 0
    %295 = vmatprep.subr.bf16.mxu0 0
    %296 = vmatpush1.bf16.msra.mxu0 0
    %297 = vmatprep.subr.bf16.mxu0 0
    %298 = vmatpush1.bf16.msra.mxu0 0
    %299 = vmatprep.subr.bf16.mxu0 0
    %300 = vmatpush1.bf16.msra.mxu0 0
    %301 = vmatprep.mubr.bf16.mxu0 0
    %302 = vmatmul.mubr.bf16.gmra.mrb[0].mxu0 %v258
    %v303 = vpop.f32.mrb[0].mxu0
    %v304 = vadd.f32 %v119, %v303
    %v305 = vpop.f32.mrb[0].mxu0
    %v306 = vadd.f32 %v123, %v305
    %v307 = vpop.f32.mrb[0].mxu0
    %v308 = vadd.f32 %v119, %v307
    %v309 = vpop.f32.mrb[0].mxu0
    %v310 = vadd.f32 %v123, %v309
    %311 = vmatprep.mubr.bf16.mxu0 0
    %312 = vmatmul.mubr.bf16.gmra.mrb[0].mxu0 %v261
    %v313 = vpop.f32.mrb[0].mxu0
    %v314 = vadd.f32 %v119, %v313
    %v315 = vpop.f32.mrb[0].mxu0
    %v316 = vadd.f32 %v123, %v315
    %v317 = vpop.f32.mrb[0].mxu0
    %v318 = vadd.f32 %v119, %v317
    %v319 = vpop.f32.mrb[0].mxu0
    %v320 = vadd.f32 %v123, %v319
    %321 = vmatprep.mubr.bf16.mxu0 0
    %322 = vmatmul.mubr.bf16.gmra.mrb[0].mxu0 %v264
    %v323 = vpop.f32.mrb[0].mxu0
    %v324 = vadd.f32 %v119, %v323
    %v325 = vpop.f32.mrb[0].mxu0
    %v326 = vadd.f32 %v123, %v325
    %v327 = vpop.f32.mrb[0].mxu0
    %v328 = vadd.f32 %v119, %v327
    %v329 = vpop.f32.mrb[0].mxu0
    %v330 = vadd.f32 %v123, %v329
    %331 = vmatprep.mubr.bf16.mxu0 0
    %332 = vmatmul.mubr.bf16.gmra.mrb[0].mxu0 %v267
    %v333 = vpop.f32.mrb[0].mxu0
    %v334 = vadd.f32 %v119, %v333
    %v335 = vpop.f32.mrb[0].mxu0
    %v336 = vadd.f32 %v123, %v335
    %v337 = vpop.f32.mrb[0].mxu0
    %v338 = vadd.f32 %v119, %v337
    %v339 = vpop.f32.mrb[0].mxu0
    %v340 = vadd.f32 %v123, %v339
    %341 = vdwg.mxu0
    %342 = vmatprep.subr.bf16.mxu0 %v227
    %343 = vmatpush1.bf16.msra.mxu0 %v226
    %344 = vmatprep.subr.bf16.mxu0 %v235
    %345 = vmatpush1.bf16.msra.mxu0 %v234
    %346 = vmatprep.subr.bf16.mxu0 0
    %347 = vmatpush1.bf16.msra.mxu0 0
    %348 = vmatprep.subr.bf16.mxu0 0
    %349 = vmatpush1.bf16.msra.mxu0 0
    %350 = vmatprep.subr.bf16.mxu0 0
    %351 = vmatpush1.bf16.msra.mxu0 0
    %352 = vmatprep.subr.bf16.mxu0 0
    %353 = vmatpush1.bf16.msra.mxu0 0
    %354 = vmatprep.subr.bf16.mxu0 0
    %355 = vmatpush1.bf16.msra.mxu0 0
    %356 = vmatprep.subr.bf16.mxu0 0
    %357 = vmatpush1.bf16.msra.mxu0 0
    %358 = vmatprep.subr.bf16.mxu0 0
    %359 = vmatpush1.bf16.msra.mxu0 0
    %360 = vmatprep.subr.bf16.mxu0 0
    %361 = vmatpush1.bf16.msra.mxu0 0
    %362 = vmatprep.subr.bf16.mxu0 0
    %363 = vmatpush1.bf16.msra.mxu0 0
    %364 = vmatprep.subr.bf16.mxu0 0
    %365 = vmatpush1.bf16.msra.mxu0 0
    %366 = vmatprep.subr.bf16.mxu0 0
    %367 = vmatpush1.bf16.msra.mxu0 0
    %368 = vmatprep.subr.bf16.mxu0 0
    %369 = vmatpush1.bf16.msra.mxu0 0
    %370 = vmatprep.subr.bf16.mxu0 0
    %371 = vmatpush1.bf16.msra.mxu0 0
    %372 = vmatprep.subr.bf16.mxu0 0
    %373 = vmatpush1.bf16.msra.mxu0 0
    %374 = vmatprep.mubr.bf16.mxu0 0
    %375 = vmatmul.mubr.bf16.gmra.mrb[0].mxu0 %v258
    %v376 = vpop.f32.mrb[0].mxu0
    %v377 = vadd.f32 %v127, %v376
    %v378 = vpop.f32.mrb[0].mxu0
    %v379 = vadd.f32 %v131, %v378
    %v380 = vpop.f32.mrb[0].mxu0
    %v381 = vadd.f32 %v127, %v380
    %v382 = vpop.f32.mrb[0].mxu0
    %v383 = vadd.f32 %v131, %v382
    %384 = vmatprep.mubr.bf16.mxu0 0
    %385 = vmatmul.mubr.bf16.gmra.mrb[0].mxu0 %v261
    %v386 = vpop.f32.mrb[0].mxu0
    %v387 = vadd.f32 %v127, %v386
    %v388 = vpop.f32.mrb[0].mxu0
    %v389 = vadd.f32 %v131, %v388
    %v390 = vpop.f32.mrb[0].mxu0
    %v391 = vadd.f32 %v127, %v390
    %v392 = vpop.f32.mrb[0].mxu0
    %v393 = vadd.f32 %v131, %v392
    %394 = vmatprep.mubr.bf16.mxu0 0
    %395 = vmatmul.mubr.bf16.gmra.mrb[0].mxu0 %v264
    %v396 = vpop.f32.mrb[0].mxu0
    %v397 = vadd.f32 %v127, %v396
    %v398 = vpop.f32.mrb[0].mxu0
    %v399 = vadd.f32 %v131, %v398
    %v400 = vpop.f32.mrb[0].mxu0
    %v401 = vadd.f32 %v127, %v400
    %v402 = vpop.f32.mrb[0].mxu0
    %v403 = vadd.f32 %v131, %v402
    %404 = vmatprep.mubr.bf16.mxu0 0
    %405 = vmatmul.mubr.bf16.gmra.mrb[0].mxu0 %v267
    %v406 = vpop.f32.mrb[0].mxu0
    %v407 = vadd.f32 %v127, %v406
    %v408 = vpop.f32.mrb[0].mxu0
    %v409 = vadd.f32 %v131, %v408
    %v410 = vpop.f32.mrb[0].mxu0
    %v411 = vadd.f32 %v127, %v410
    %v412 = vpop.f32.mrb[0].mxu0
    %v413 = vadd.f32 %v131, %v412
    %414 = vdwg.mxu0
    %415 = vmatprep.subr.bf16.mxu0 %v229
    %416 = vmatpush1.bf16.msra.mxu0 %v228
    %417 = vmatprep.subr.bf16.mxu0 %v237
    %418 = vmatpush1.bf16.msra.mxu0 %v236
    %419 = vmatprep.subr.bf16.mxu0 0
    %420 = vmatpush1.bf16.msra.mxu0 0
    %421 = vmatprep.subr.bf16.mxu0 0
    %422 = vmatpush1.bf16.msra.mxu0 0
    %423 = vmatprep.subr.bf16.mxu0 0
    %424 = vmatpush1.bf16.msra.mxu0 0
    %425 = vmatprep.subr.bf16.mxu0 0
    %426 = vmatpush1.bf16.msra.mxu0 0
    %427 = vmatprep.subr.bf16.mxu0 0
    %428 = vmatpush1.bf16.msra.mxu0 0
    %429 = vmatprep.subr.bf16.mxu0 0
    %430 = vmatpush1.bf16.msra.mxu0 0
    %431 = vmatprep.subr.bf16.mxu0 0
    %432 = vmatpush1.bf16.msra.mxu0 0
    %433 = vmatprep.subr.bf16.mxu0 0
    %434 = vmatpush1.bf16.msra.mxu0 0
    %435 = vmatprep.subr.bf16.mxu0 0
    %436 = vmatpush1.bf16.msra.mxu0 0
    %437 = vmatprep.subr.bf16.mxu0 0
    %438 = vmatpush1.bf16.msra.mxu0 0
    %439 = vmatprep.subr.bf16.mxu0 0
    %440 = vmatpush1.bf16.msra.mxu0 0
    %441 = vmatprep.subr.bf16.mxu0 0
    %442 = vmatpush1.bf16.msra.mxu0 0
    %443 = vmatprep.subr.bf16.mxu0 0
    %444 = vmatpush1.bf16.msra.mxu0 0
    %445 = vmatprep.subr.bf16.mxu0 0
    %446 = vmatpush1.bf16.msra.mxu0 0
    %447 = vmatprep.mubr.bf16.mxu0 0
    %448 = vmatmul.mubr.bf16.gmra.mrb[0].mxu0 %v258
    %v449 = vpop.f32.mrb[0].mxu0
    %v450 = vadd.f32 %v135, %v449
    %v451 = vpop.f32.mrb[0].mxu0
    %v452 = vadd.f32 %v139, %v451
    %v453 = vpop.f32.mrb[0].mxu0
    %v454 = vadd.f32 %v135, %v453
    %v455 = vpop.f32.mrb[0].mxu0
    %v456 = vadd.f32 %v139, %v455
    %457 = vmatprep.mubr.bf16.mxu0 0
    %458 = vmatmul.mubr.bf16.gmra.mrb[0].mxu0 %v261
    %v459 = vpop.f32.mrb[0].mxu0
    %v460 = vadd.f32 %v135, %v459
    %v461 = vpop.f32.mrb[0].mxu0
    %v462 = vadd.f32 %v139, %v461
    %v463 = vpop.f32.mrb[0].mxu0
    %v464 = vadd.f32 %v135, %v463
    %v465 = vpop.f32.mrb[0].mxu0
    %v466 = vadd.f32 %v139, %v465
    %467 = vmatprep.mubr.bf16.mxu0 0
    %468 = vmatmul.mubr.bf16.gmra.mrb[0].mxu0 %v264
    %v469 = vpop.f32.mrb[0].mxu0
    %v470 = vadd.f32 %v135, %v469
    %v471 = vpop.f32.mrb[0].mxu0
    %v472 = vadd.f32 %v139, %v471
    %v473 = vpop.f32.mrb[0].mxu0
    %v474 = vadd.f32 %v135, %v473
    %v475 = vpop.f32.mrb[0].mxu0
    %v476 = vadd.f32 %v139, %v475
    %477 = vmatprep.mubr.bf16.mxu0 0
    %478 = vmatmul.mubr.bf16.gmra.mrb[0].mxu0 %v267
    %v479 = vpop.f32.mrb[0].mxu0
    %v480 = vadd.f32 %v135, %v479
    %v481 = vpop.f32.mrb[0].mxu0
    %v482 = vadd.f32 %v139, %v481
    %v483 = vpop.f32.mrb[0].mxu0
    %v484 = vadd.f32 %v135, %v483
    %v485 = vpop.f32.mrb[0].mxu0
    %v486 = vadd.f32 %v139, %v485
    %487 = vdwg.mxu0
    %488 = vmatprep.subr.bf16.mxu0 %v231
    %489 = vmatpush1.bf16.msra.mxu0 %v230
    %490 = vmatprep.subr.bf16.mxu0 %v239
    %491 = vmatpush1.bf16.msra.mxu0 %v238
    %492 = vmatprep.subr.bf16.mxu0 0
    %493 = vmatpush1.bf16.msra.mxu0 0
    %494 = vmatprep.subr.bf16.mxu0 0
    %495 = vmatpush1.bf16.msra.mxu0 0
    %496 = vmatprep.subr.bf16.mxu0 0
    %497 = vmatpush1.bf16.msra.mxu0 0
    %498 = vmatprep.subr.bf16.mxu0 0
    %499 = vmatpush1.bf16.msra.mxu0 0
    %500 = vmatprep.subr.bf16.mxu0 0
    %501 = vmatpush1.bf16.msra.mxu0 0
    %502 = vmatprep.subr.bf16.mxu0 0
    %503 = vmatpush1.bf16.msra.mxu0 0
    %504 = vmatprep.subr.bf16.mxu0 0
    %505 = vmatpush1.bf16.msra.mxu0 0
    %506 = vmatprep.subr.bf16.mxu0 0
    %507 = vmatpush1.bf16.msra.mxu0 0
    %508 = vmatprep.subr.bf16.mxu0 0
    %509 = vmatpush1.bf16.msra.mxu0 0
    %510 = vmatprep.subr.bf16.mxu0 0
    %511 = vmatpush1.bf16.msra.mxu0 0
    %512 = vmatprep.subr.bf16.mxu0 0
    %513 = vmatpush1.bf16.msra.mxu0 0
    %514 = vmatprep.subr.bf16.mxu0 0
    %515 = vmatpush1.bf16.msra.mxu0 0
    %516 = vmatprep.subr.bf16.mxu0 0
    %517 = vmatpush1.bf16.msra.mxu0 0
    %518 = vmatprep.subr.bf16.mxu0 0
    %519 = vmatpush1.bf16.msra.mxu0 0
    %520 = vmatprep.mubr.bf16.mxu0 0
    %521 = vmatmul.mubr.bf16.gmra.mrb[0].mxu0 %v258
    %v522 = vpop.f32.mrb[0].mxu0
    %v523 = vadd.f32 %v143, %v522
    %v524 = vpop.f32.mrb[0].mxu0
    %v525 = vadd.f32 %v147, %v524
    %v526 = vpop.f32.mrb[0].mxu0
    %v527 = vadd.f32 %v143, %v526
    %v528 = vpop.f32.mrb[0].mxu0
    %v529 = vadd.f32 %v147, %v528
    %530 = vmatprep.mubr.bf16.mxu0 0
    %531 = vmatmul.mubr.bf16.gmra.mrb[0].mxu0 %v261
    %v532 = vpop.f32.mrb[0].mxu0
    %v533 = vadd.f32 %v143, %v532
    %v534 = vpop.f32.mrb[0].mxu0
    %v535 = vadd.f32 %v147, %v534
    %v536 = vpop.f32.mrb[0].mxu0
    %v537 = vadd.f32 %v143, %v536
    %v538 = vpop.f32.mrb[0].mxu0
    %v539 = vadd.f32 %v147, %v538
    %540 = vmatprep.mubr.bf16.mxu0 0
    %541 = vmatmul.mubr.bf16.gmra.mrb[0].mxu0 %v264
    %v542 = vpop.f32.mrb[0].mxu0
    %v543 = vadd.f32 %v143, %v542
    %v544 = vpop.f32.mrb[0].mxu0
    %v545 = vadd.f32 %v147, %v544
    %v546 = vpop.f32.mrb[0].mxu0
    %v547 = vadd.f32 %v143, %v546
    %v548 = vpop.f32.mrb[0].mxu0
    %v549 = vadd.f32 %v147, %v548
    %550 = vmatprep.mubr.bf16.mxu0 0
    %551 = vmatmul.mubr.bf16.gmra.mrb[0].mxu0 %v267
    %v552 = vpop.f32.mrb[0].mxu0
    %v553 = vadd.f32 %v143, %v552
    %v554 = vpop.f32.mrb[0].mxu0
    %v555 = vadd.f32 %v147, %v554
    %v556 = vpop.f32.mrb[0].mxu0
    %v557 = vadd.f32 %v143, %v556
    %v558 = vpop.f32.mrb[0].mxu0
    %v559 = vadd.f32 %v147, %v558
    %560 = vdwg.mxu0
    %561 = vst [vmem:[#allocation2] sm:$0xff] %v304
    %562 = vst [vmem:[#allocation2 + $0x8] sm:$0xff] %v306
    %563 = vst [vmem:[#allocation2 + $0x10] sm:$0xff] %v377
    %564 = vst [vmem:[#allocation2 + $0x18] sm:$0xff] %v379
    %565 = vst [vmem:[#allocation2 + $0x20] sm:$0xff] %v450
    %566 = vst [vmem:[#allocation2 + $0x28] sm:$0xff] %v452
    %567 = vst [vmem:[#allocation2 + $0x30] sm:$0xff] %v523
    %568 = vst [vmem:[#allocation2 + $0x38] sm:$0xff] %v525
    %569 = vst [vmem:[#allocation2 + $0x40] sm:$0xff] %v308
    %570 = vst [vmem:[#allocation2 + $0x48] sm:$0xff] %v310
    %571 = vst [vmem:[#allocation2 + $0x50] sm:$0xff] %v381
    %572 = vst [vmem:[#allocation2 + $0x58] sm:$0xff] %v383
    %573 = vst [vmem:[#allocation2 + $0x60] sm:$0xff] %v454
    %574 = vst [vmem:[#allocation2 + $0x68] sm:$0xff] %v456
    %575 = vst [vmem:[#allocation2 + $0x70] sm:$0xff] %v527
    %576 = vst [vmem:[#allocation2 + $0x78] sm:$0xff] %v529
    %577 = vst [vmem:[#allocation2 + $0x80] sm:$0xff] %v314
    %578 = vst [vmem:[#allocation2 + $0x88] sm:$0xff] %v316
    %579 = vst [vmem:[#allocation2 + $0x90] sm:$0xff] %v387
    %580 = vst [vmem:[#allocation2 + $0x98] sm:$0xff] %v389
    %581 = vst [vmem:[#allocation2 + $0xa0] sm:$0xff] %v460
    %582 = vst [vmem:[#allocation2 + $0xa8] sm:$0xff] %v462
    %583 = vst [vmem:[#allocation2 + $0xb0] sm:$0xff] %v533
    %584 = vst [vmem:[#allocation2 + $0xb8] sm:$0xff] %v535
    %585 = vst [vmem:[#allocation2 + $0xc0] sm:$0xff] %v318
    %586 = vst [vmem:[#allocation2 + $0xc8] sm:$0xff] %v320
    %587 = vst [vmem:[#allocation2 + $0xd0] sm:$0xff] %v391
    %588 = vst [vmem:[#allocation2 + $0xd8] sm:$0xff] %v393
    %589 = vst [vmem:[#allocation2 + $0xe0] sm:$0xff] %v464
    %590 = vst [vmem:[#allocation2 + $0xe8] sm:$0xff] %v466
    %591 = vst [vmem:[#allocation2 + $0xf0] sm:$0xff] %v537
    %592 = vst [vmem:[#allocation2 + $0xf8] sm:$0xff] %v539
    %593 = vst [vmem:[#allocation2 + $0x100] sm:$0xff] %v324
    %594 = vst [vmem:[#allocation2 + $0x108] sm:$0xff] %v326
    %595 = vst [vmem:[#allocation2 + $0x110] sm:$0xff] %v397
    %596 = vst [vmem:[#allocation2 + $0x118] sm:$0xff] %v399
    %597 = vst [vmem:[#allocation2 + $0x120] sm:$0xff] %v470
    %598 = vst [vmem:[#allocation2 + $0x128] sm:$0xff] %v472
    %599 = vst [vmem:[#allocation2 + $0x130] sm:$0xff] %v543
    %600 = vst [vmem:[#allocation2 + $0x138] sm:$0xff] %v545
    %601 = vst [vmem:[#allocation2 + $0x140] sm:$0xff] %v328
    %602 = vst [vmem:[#allocation2 + $0x148] sm:$0xff] %v330
    %603 = vst [vmem:[#allocation2 + $0x150] sm:$0xff] %v401
    %604 = vst [vmem:[#allocation2 + $0x158] sm:$0xff] %v403
    %605 = vst [vmem:[#allocation2 + $0x160] sm:$0xff] %v474
    %606 = vst [vmem:[#allocation2 + $0x168] sm:$0xff] %v476
    %607 = vst [vmem:[#allocation2 + $0x170] sm:$0xff] %v547
    %608 = vst [vmem:[#allocation2 + $0x178] sm:$0xff] %v549
    %609 = vst [vmem:[#allocation2 + $0x180] sm:$0xff] %v334
    %610 = vst [vmem:[#allocation2 + $0x188] sm:$0xff] %v336
    %611 = vst [vmem:[#allocation2 + $0x190] sm:$0xff] %v407
    %612 = vst [vmem:[#allocation2 + $0x198] sm:$0xff] %v409
    %613 = vst [vmem:[#allocation2 + $0x1a0] sm:$0xff] %v480
    %614 = vst [vmem:[#allocation2 + $0x1a8] sm:$0xff] %v482
    %615 = vst [vmem:[#allocation2 + $0x1b0] sm:$0xff] %v553
    %616 = vst [vmem:[#allocation2 + $0x1b8] sm:$0xff] %v555
    %617 = vst [vmem:[#allocation2 + $0x1c0] sm:$0xff] %v338
    %618 = vst [vmem:[#allocation2 + $0x1c8] sm:$0xff] %v340
    %619 = vst [vmem:[#allocation2 + $0x1d0] sm:$0xff] %v411
    %620 = vst [vmem:[#allocation2 + $0x1d8] sm:$0xff] %v413
    %621 = vst [vmem:[#allocation2 + $0x1e0] sm:$0xff] %v484
    %622 = vst [vmem:[#allocation2 + $0x1e8] sm:$0xff] %v486
    %623 = vst [vmem:[#allocation2 + $0x1f0] sm:$0xff] %v557
    %624 = vst [vmem:[#allocation2 + $0x1f8] sm:$0xff] %v559
    %v625 = vld [vmem:[#allocation3] sm:$0xff]
    %v626 = vld [vmem:[#allocation3 + $0x8] sm:$0xff]
    %v627 = vld [vmem:[#allocation3 + $0x10] sm:$0xff]
    %v628 = vld [vmem:[#allocation3 + $0x18] sm:$0xff]
    %v629 = vld [vmem:[#allocation3 + $0x20] sm:$0xff]
    %v630 = vld [vmem:[#allocation3 + $0x28] sm:$0xff]
    %v631 = vld [vmem:[#allocation3 + $0x30] sm:$0xff]
    %v632 = vld [vmem:[#allocation3 + $0x38] sm:$0xff]
    %v633 = vld [vmem:[#allocation3 + $0x40] sm:$0xff]
    %v634 = vld [vmem:[#allocation3 + $0x48] sm:$0xff]
    %v635 = vld [vmem:[#allocation3 + $0x50] sm:$0xff]
    %v636 = vld [vmem:[#allocation3 + $0x58] sm:$0xff]
    %v637 = vld [vmem:[#allocation3 + $0x60] sm:$0xff]
    %v638 = vld [vmem:[#allocation3 + $0x68] sm:$0xff]
    %v639 = vld [vmem:[#allocation3 + $0x70] sm:$0xff]
    %v640 = vld [vmem:[#allocation3 + $0x78] sm:$0xff]
    %v641 = vld [vmem:[#allocation3 + $0x80] sm:$0xff]
    %v642 = vld [vmem:[#allocation3 + $0x88] sm:$0xff]
    %v643 = vld [vmem:[#allocation3 + $0x90] sm:$0xff]
    %v644 = vld [vmem:[#allocation3 + $0x98] sm:$0xff]
    %v645 = vld [vmem:[#allocation3 + $0xa0] sm:$0xff]
    %v646 = vld [vmem:[#allocation3 + $0xa8] sm:$0xff]
    %v647 = vld [vmem:[#allocation3 + $0xb0] sm:$0xff]
    %v648 = vld [vmem:[#allocation3 + $0xb8] sm:$0xff]
    %v649 = vld [vmem:[#allocation3 + $0xc0] sm:$0xff]
    %v650 = vld [vmem:[#allocation3 + $0xc8] sm:$0xff]
    %v651 = vld [vmem:[#allocation3 + $0xd0] sm:$0xff]
    %v652 = vld [vmem:[#allocation3 + $0xd8] sm:$0xff]
    %v653 = vld [vmem:[#allocation3 + $0xe0] sm:$0xff]
    %v654 = vld [vmem:[#allocation3 + $0xe8] sm:$0xff]
    %v655 = vld [vmem:[#allocation3 + $0xf0] sm:$0xff]
    %v656 = vld [vmem:[#allocation3 + $0xf8] sm:$0xff]
    %v657 = vld [vmem:[#allocation3 + $0x100] sm:$0xff]
    %v658 = vld [vmem:[#allocation3 + $0x108] sm:$0xff]
    %v659 = vld [vmem:[#allocation3 + $0x110] sm:$0xff]
    %v660 = vld [vmem:[#allocation3 + $0x118] sm:$0xff]
    %v661 = vld [vmem:[#allocation3 + $0x120] sm:$0xff]
    %v662 = vld [vmem:[#allocation3 + $0x128] sm:$0xff]
    %v663 = vld [vmem:[#allocation3 + $0x130] sm:$0xff]
    %v664 = vld [vmem:[#allocation3 + $0x138] sm:$0xff]
    %v665 = vld [vmem:[#allocation3 + $0x140] sm:$0xff]
    %v666 = vld [vmem:[#allocation3 + $0x148] sm:$0xff]
    %v667 = vld [vmem:[#allocation3 + $0x150] sm:$0xff]
    %v668 = vld [vmem:[#allocation3 + $0x158] sm:$0xff]
    %v669 = vld [vmem:[#allocation3 + $0x160] sm:$0xff]
    %v670 = vld [vmem:[#allocation3 + $0x168] sm:$0xff]
    %v671 = vld [vmem:[#allocation3 + $0x170] sm:$0xff]
    %v672 = vld [vmem:[#allocation3 + $0x178] sm:$0xff]
    %v673 = vld [vmem:[#allocation3 + $0x180] sm:$0xff]
    %v674 = vld [vmem:[#allocation3 + $0x188] sm:$0xff]
    %v675 = vld [vmem:[#allocation3 + $0x190] sm:$0xff]
    %v676 = vld [vmem:[#allocation3 + $0x198] sm:$0xff]
    %v677 = vld [vmem:[#allocation3 + $0x1a0] sm:$0xff]
    %v678 = vld [vmem:[#allocation3 + $0x1a8] sm:$0xff]
    %v679 = vld [vmem:[#allocation3 + $0x1b0] sm:$0xff]
    %v680 = vld [vmem:[#allocation3 + $0x1b8] sm:$0xff]
    %v681 = vld [vmem:[#allocation3 + $0x1c0] sm:$0xff]
    %v682 = vld [vmem:[#allocation3 + $0x1c8] sm:$0xff]
    %v683 = vld [vmem:[#allocation3 + $0x1d0] sm:$0xff]
    %v684 = vld [vmem:[#allocation3 + $0x1d8] sm:$0xff]
    %v685 = vld [vmem:[#allocation3 + $0x1e0] sm:$0xff]
    %v686 = vld [vmem:[#allocation3 + $0x1e8] sm:$0xff]
    %v687 = vld [vmem:[#allocation3 + $0x1f0] sm:$0xff]
    %v688 = vld [vmem:[#allocation3 + $0x1f8] sm:$0xff]
    %v689 = vld [vmem:[#allocation3 + $0x200] sm:$0xff]
    %v690 = vld [vmem:[#allocation3 + $0x208] sm:$0xff]
    %v691 = vld [vmem:[#allocation3 + $0x210] sm:$0xff]
    %v692 = vld [vmem:[#allocation3 + $0x218] sm:$0xff]
    %v693 = vld [vmem:[#allocation3 + $0x220] sm:$0xff]
    %v694 = vld [vmem:[#allocation3 + $0x228] sm:$0xff]
    %v695 = vld [vmem:[#allocation3 + $0x230] sm:$0xff]
    %v696 = vld [vmem:[#allocation3 + $0x238] sm:$0xff]
    %v697 = vld [vmem:[#allocation3 + $0x240] sm:$0xff]
    %v698 = vld [vmem:[#allocation3 + $0x248] sm:$0xff]
    %v699 = vld [vmem:[#allocation3 + $0x250] sm:$0xff]
    %v700 = vld [vmem:[#allocation3 + $0x258] sm:$0xff]
    %v701 = vld [vmem:[#allocation3 + $0x260] sm:$0xff]
    %v702 = vld [vmem:[#allocation3 + $0x268] sm:$0xff]
    %v703 = vld [vmem:[#allocation3 + $0x270] sm:$0xff]
    %v704 = vld [vmem:[#allocation3 + $0x278] sm:$0xff]
    %v705 = vld [vmem:[#allocation3 + $0x280] sm:$0xff]
    %v706 = vld [vmem:[#allocation3 + $0x288] sm:$0xff]
    %v707 = vld [vmem:[#allocation3 + $0x290] sm:$0xff]
    %v708 = vld [vmem:[#allocation3 + $0x298] sm:$0xff]
    %v709 = vld [vmem:[#allocation3 + $0x2a0] sm:$0xff]
    %v710 = vld [vmem:[#allocation3 + $0x2a8] sm:$0xff]
    %v711 = vld [vmem:[#allocation3 + $0x2b0] sm:$0xff]
    %v712 = vld [vmem:[#allocation3 + $0x2b8] sm:$0xff]
    %v713 = vld [vmem:[#allocation3 + $0x2c0] sm:$0xff]
    %v714 = vld [vmem:[#allocation3 + $0x2c8] sm:$0xff]
    %v715 = vld [vmem:[#allocation3 + $0x2d0] sm:$0xff]
    %v716 = vld [vmem:[#allocation3 + $0x2d8] sm:$0xff]
    %v717 = vld [vmem:[#allocation3 + $0x2e0] sm:$0xff]
    %v718 = vld [vmem:[#allocation3 + $0x2e8] sm:$0xff]
    %v719 = vld [vmem:[#allocation3 + $0x2f0] sm:$0xff]
    %v720 = vld [vmem:[#allocation3 + $0x2f8] sm:$0xff]
    %v721 = vld [vmem:[#allocation3 + $0x300] sm:$0xff]
    %v722 = vld [vmem:[#allocation3 + $0x308] sm:$0xff]
    %v723 = vld [vmem:[#allocation3 + $0x310] sm:$0xff]
    %v724 = vld [vmem:[#allocation3 + $0x318] sm:$0xff]
    %v725 = vld [vmem:[#allocation3 + $0x320] sm:$0xff]
    %v726 = vld [vmem:[#allocation3 + $0x328] sm:$0xff]
    %v727 = vld [vmem:[#allocation3 + $0x330] sm:$0xff]
    %v728 = vld [vmem:[#allocation3 + $0x338] sm:$0xff]
    %v729 = vld [vmem:[#allocation3 + $0x340] sm:$0xff]
    %v730 = vld [vmem:[#allocation3 + $0x348] sm:$0xff]
    %v731 = vld [vmem:[#allocation3 + $0x350] sm:$0xff]
    %v732 = vld [vmem:[#allocation3 + $0x358] sm:$0xff]
    %v733 = vld [vmem:[#allocation3 + $0x360] sm:$0xff]
    %v734 = vld [vmem:[#allocation3 + $0x368] sm:$0xff]
    %v735 = vld [vmem:[#allocation3 + $0x370] sm:$0xff]
    %v736 = vld [vmem:[#allocation3 + $0x378] sm:$0xff]
    %v737 = vld [vmem:[#allocation3 + $0x380] sm:$0xff]
    %v738 = vld [vmem:[#allocation3 + $0x388] sm:$0xff]
    %v739 = vld [vmem:[#allocation3 + $0x390] sm:$0xff]
    %v740 = vld [vmem:[#allocation3 + $0x398] sm:$0xff]
    %v741 = vld [vmem:[#allocation3 + $0x3a0] sm:$0xff]
    %v742 = vld [vmem:[#allocation3 + $0x3a8] sm:$0xff]
    %v743 = vld [vmem:[#allocation3 + $0x3b0] sm:$0xff]
    %v744 = vld [vmem:[#allocation3 + $0x3b8] sm:$0xff]
    %v745 = vld [vmem:[#allocation3 + $0x3c0] sm:$0xff]
    %v746 = vld [vmem:[#allocation3 + $0x3c8] sm:$0xff]
    %v747 = vld [vmem:[#allocation3 + $0x3d0] sm:$0xff]
    %v748 = vld [vmem:[#allocation3 + $0x3d8] sm:$0xff]
    %v749 = vld [vmem:[#allocation3 + $0x3e0] sm:$0xff]
    %v750 = vld [vmem:[#allocation3 + $0x3e8] sm:$0xff]
    %v751 = vld [vmem:[#allocation3 + $0x3f0] sm:$0xff]
    %v752 = vld [vmem:[#allocation3 + $0x3f8] sm:$0xff]
    %s753 = smul.u32 0, 8
    %s754 = smul.addr %s753, 8
    %s755 = scalar_lea.vmem [#allocation2], %s754
    %v756 = vld [vmem:[%s755] sm:$0xff]
    %v757 = vld [vmem:[%s755 + $0x8] sm:$0xff]
    %v758 = vld [vmem:[%s755 + $0x10] sm:$0xff]
    %v759 = vld [vmem:[%s755 + $0x18] sm:$0xff]
    %v760 = vld [vmem:[%s755 + $0x20] sm:$0xff]
    %v761 = vld [vmem:[%s755 + $0x28] sm:$0xff]
    %v762 = vld [vmem:[%s755 + $0x30] sm:$0xff]
    %v763 = vld [vmem:[%s755 + $0x38] sm:$0xff]
    %v892 = vunpack.c.l.b16 %v625
    %v893 = vunpack.c.h.b16 %v625
    %v894 = vunpack.c.l.b16 %v626
    %v895 = vunpack.c.h.b16 %v626
    %v896 = vunpack.c.l.b16 %v627
    %v897 = vunpack.c.h.b16 %v627
    %v898 = vunpack.c.l.b16 %v628
    %v899 = vunpack.c.h.b16 %v628
    %v900 = vunpack.c.l.b16 %v629
    %v901 = vunpack.c.h.b16 %v629
    %v902 = vunpack.c.l.b16 %v630
    %v903 = vunpack.c.h.b16 %v630
    %v904 = vunpack.c.l.b16 %v631
    %v905 = vunpack.c.h.b16 %v631
    %v906 = vunpack.c.l.b16 %v632
    %v907 = vunpack.c.h.b16 %v632
    %v908 = vunpack.c.l.b16 %v633
    %v909 = vunpack.c.h.b16 %v633
    %v910 = vunpack.c.l.b16 %v634
    %v911 = vunpack.c.h.b16 %v634
    %v912 = vunpack.c.l.b16 %v635
    %v913 = vunpack.c.h.b16 %v635
    %v914 = vunpack.c.l.b16 %v636
    %v915 = vunpack.c.h.b16 %v636
    %v916 = vunpack.c.l.b16 %v637
    %v917 = vunpack.c.h.b16 %v637
    %v918 = vunpack.c.l.b16 %v638
    %v919 = vunpack.c.h.b16 %v638
    %v920 = vunpack.c.l.b16 %v639
    %v921 = vunpack.c.h.b16 %v639
    %v922 = vunpack.c.l.b16 %v640
    %v923 = vunpack.c.h.b16 %v640
    %v924 = vunpack.c.l.b16 %v641
    %v925 = vunpack.c.h.b16 %v641
    %v926 = vunpack.c.l.b16 %v642
    %v927 = vunpack.c.h.b16 %v642
    %v928 = vunpack.c.l.b16 %v643
    %v929 = vunpack.c.h.b16 %v643
    %v930 = vunpack.c.l.b16 %v644
    %v931 = vunpack.c.h.b16 %v644
    %v932 = vunpack.c.l.b16 %v645
    %v933 = vunpack.c.h.b16 %v645
    %v934 = vunpack.c.l.b16 %v646
    %v935 = vunpack.c.h.b16 %v646
    %v936 = vunpack.c.l.b16 %v647
    %v937 = vunpack.c.h.b16 %v647
    %v938 = vunpack.c.l.b16 %v648
    %v939 = vunpack.c.h.b16 %v648
    %v940 = vunpack.c.l.b16 %v649
    %v941 = vunpack.c.h.b16 %v649
    %v942 = vunpack.c.l.b16 %v650
    %v943 = vunpack.c.h.b16 %v650
    %v944 = vunpack.c.l.b16 %v651
    %v945 = vunpack.c.h.b16 %v651
    %v946 = vunpack.c.l.b16 %v652
    %v947 = vunpack.c.h.b16 %v652
    %v948 = vunpack.c.l.b16 %v653
    %v949 = vunpack.c.h.b16 %v653
    %v950 = vunpack.c.l.b16 %v654
    %v951 = vunpack.c.h.b16 %v654
    %v952 = vunpack.c.l.b16 %v655
    %v953 = vunpack.c.h.b16 %v655
    %v954 = vunpack.c.l.b16 %v656
    %v955 = vunpack.c.h.b16 %v656
    %v956 = vunpack.c.l.b16 %v657
    %v957 = vunpack.c.h.b16 %v657
    %v958 = vunpack.c.l.b16 %v658
    %v959 = vunpack.c.h.b16 %v658
    %v960 = vunpack.c.l.b16 %v659
    %v961 = vunpack.c.h.b16 %v659
    %v962 = vunpack.c.l.b16 %v660
    %v963 = vunpack.c.h.b16 %v660
    %v964 = vunpack.c.l.b16 %v661
    %v965 = vunpack.c.h.b16 %v661
    %v966 = vunpack.c.l.b16 %v662
    %v967 = vunpack.c.h.b16 %v662
    %v968 = vunpack.c.l.b16 %v663
    %v969 = vunpack.c.h.b16 %v663
    %v970 = vunpack.c.l.b16 %v664
    %v971 = vunpack.c.h.b16 %v664
    %v972 = vunpack.c.l.b16 %v665
    %v973 = vunpack.c.h.b16 %v665
    %v974 = vunpack.c.l.b16 %v666
    %v975 = vunpack.c.h.b16 %v666
    %v976 = vunpack.c.l.b16 %v667
    %v977 = vunpack.c.h.b16 %v667
    %v978 = vunpack.c.l.b16 %v668
    %v979 = vunpack.c.h.b16 %v668
    %v980 = vunpack.c.l.b16 %v669
    %v981 = vunpack.c.h.b16 %v669
    %v982 = vunpack.c.l.b16 %v670
    %v983 = vunpack.c.h.b16 %v670
    %v984 = vunpack.c.l.b16 %v671
    %v985 = vunpack.c.h.b16 %v671
    %v986 = vunpack.c.l.b16 %v672
    %v987 = vunpack.c.h.b16 %v672
    %v988 = vunpack.c.l.b16 %v673
    %v989 = vunpack.c.h.b16 %v673
    %v990 = vunpack.c.l.b16 %v674
    %v991 = vunpack.c.h.b16 %v674
    %v992 = vunpack.c.l.b16 %v675
    %v993 = vunpack.c.h.b16 %v675
    %v994 = vunpack.c.l.b16 %v676
    %v995 = vunpack.c.h.b16 %v676
    %v996 = vunpack.c.l.b16 %v677
    %v997 = vunpack.c.h.b16 %v677
    %v998 = vunpack.c.l.b16 %v678
    %v999 = vunpack.c.h.b16 %v678
    %v1000 = vunpack.c.l.b16 %v679
    %v1001 = vunpack.c.h.b16 %v679
    %v1002 = vunpack.c.l.b16 %v680
    %v1003 = vunpack.c.h.b16 %v680
    %v1004 = vunpack.c.l.b16 %v681
    %v1005 = vunpack.c.h.b16 %v681
    %v1006 = vunpack.c.l.b16 %v682
    %v1007 = vunpack.c.h.b16 %v682
    %v1008 = vunpack.c.l.b16 %v683
    %v1009 = vunpack.c.h.b16 %v683
    %v1010 = vunpack.c.l.b16 %v684
    %v1011 = vunpack.c.h.b16 %v684
    %v1012 = vunpack.c.l.b16 %v685
    %v1013 = vunpack.c.h.b16 %v685
    %v1014 = vunpack.c.l.b16 %v686
    %v1015 = vunpack.c.h.b16 %v686
    %v1016 = vunpack.c.l.b16 %v687
    %v1017 = vunpack.c.h.b16 %v687
    %v1018 = vunpack.c.l.b16 %v688
    %v1019 = vunpack.c.h.b16 %v688
    %v1020 = vunpack.c.l.b16 %v689
    %v1021 = vunpack.c.h.b16 %v689
    %v1022 = vunpack.c.l.b16 %v690
    %v1023 = vunpack.c.h.b16 %v690
    %v1024 = vunpack.c.l.b16 %v691
    %v1025 = vunpack.c.h.b16 %v691
    %v1026 = vunpack.c.l.b16 %v692
    %v1027 = vunpack.c.h.b16 %v692
    %v1028 = vunpack.c.l.b16 %v693
    %v1029 = vunpack.c.h.b16 %v693
    %v1030 = vunpack.c.l.b16 %v694
    %v1031 = vunpack.c.h.b16 %v694
    %v1032 = vunpack.c.l.b16 %v695
    %v1033 = vunpack.c.h.b16 %v695
    %v1034 = vunpack.c.l.b16 %v696
    %v1035 = vunpack.c.h.b16 %v696
    %v1036 = vunpack.c.l.b16 %v697
    %v1037 = vunpack.c.h.b16 %v697
    %v1038 = vunpack.c.l.b16 %v698
    %v1039 = vunpack.c.h.b16 %v698
    %v1040 = vunpack.c.l.b16 %v699
    %v1041 = vunpack.c.h.b16 %v699
    %v1042 = vunpack.c.l.b16 %v700
    %v1043 = vunpack.c.h.b16 %v700
    %v1044 = vunpack.c.l.b16 %v701
    %v1045 = vunpack.c.h.b16 %v701
    %v1046 = vunpack.c.l.b16 %v702
    %v1047 = vunpack.c.h.b16 %v702
    %v1048 = vunpack.c.l.b16 %v703
    %v1049 = vunpack.c.h.b16 %v703
    %v1050 = vunpack.c.l.b16 %v704
    %v1051 = vunpack.c.h.b16 %v704
    %v1052 = vunpack.c.l.b16 %v705
    %v1053 = vunpack.c.h.b16 %v705
    %v1054 = vunpack.c.l.b16 %v706
    %v1055 = vunpack.c.h.b16 %v706
    %v1056 = vunpack.c.l.b16 %v707
    %v1057 = vunpack.c.h.b16 %v707
    %v1058 = vunpack.c.l.b16 %v708
    %v1059 = vunpack.c.h.b16 %v708
    %v1060 = vunpack.c.l.b16 %v709
    %v1061 = vunpack.c.h.b16 %v709
    %v1062 = vunpack.c.l.b16 %v710
    %v1063 = vunpack.c.h.b16 %v710
    %v1064 = vunpack.c.l.b16 %v711
    %v1065 = vunpack.c.h.b16 %v711
    %v1066 = vunpack.c.l.b16 %v712
    %v1067 = vunpack.c.h.b16 %v712
    %v1068 = vunpack.c.l.b16 %v713
    %v1069 = vunpack.c.h.b16 %v713
    %v1070 = vunpack.c.l.b16 %v714
    %v1071 = vunpack.c.h.b16 %v714
    %v1072 = vunpack.c.l.b16 %v715
    %v1073 = vunpack.c.h.b16 %v715
    %v1074 = vunpack.c.l.b16 %v716
    %v1075 = vunpack.c.h.b16 %v716
    %v1076 = vunpack.c.l.b16 %v717
    %v1077 = vunpack.c.h.b16 %v717
    %v1078 = vunpack.c.l.b16 %v718
    %v1079 = vunpack.c.h.b16 %v718
    %v1080 = vunpack.c.l.b16 %v719
    %v1081 = vunpack.c.h.b16 %v719
    %v1082 = vunpack.c.l.b16 %v720
    %v1083 = vunpack.c.h.b16 %v720
    %v1084 = vunpack.c.l.b16 %v721
    %v1085 = vunpack.c.h.b16 %v721
    %v1086 = vunpack.c.l.b16 %v722
    %v1087 = vunpack.c.h.b16 %v722
    %v1088 = vunpack.c.l.b16 %v723
    %v1089 = vunpack.c.h.b16 %v723
    %v1090 = vunpack.c.l.b16 %v724
    %v1091 = vunpack.c.h.b16 %v724
    %v1092 = vunpack.c.l.b16 %v725
    %v1093 = vunpack.c.h.b16 %v725
    %v1094 = vunpack.c.l.b16 %v726
    %v1095 = vunpack.c.h.b16 %v726
    %v1096 = vunpack.c.l.b16 %v727
    %v1097 = vunpack.c.h.b16 %v727
    %v1098 = vunpack.c.l.b16 %v728
    %v1099 = vunpack.c.h.b16 %v728
    %v1100 = vunpack.c.l.b16 %v729
    %v1101 = vunpack.c.h.b16 %v729
    %v1102 = vunpack.c.l.b16 %v730
    %v1103 = vunpack.c.h.b16 %v730
    %v1104 = vunpack.c.l.b16 %v731
    %v1105 = vunpack.c.h.b16 %v731
    %v1106 = vunpack.c.l.b16 %v732
    %v1107 = vunpack.c.h.b16 %v732
    %v1108 = vunpack.c.l.b16 %v733
    %v1109 = vunpack.c.h.b16 %v733
    %v1110 = vunpack.c.l.b16 %v734
    %v1111 = vunpack.c.h.b16 %v734
    %v1112 = vunpack.c.l.b16 %v735
    %v1113 = vunpack.c.h.b16 %v735
    %v1114 = vunpack.c.l.b16 %v736
    %v1115 = vunpack.c.h.b16 %v736
    %v1116 = vunpack.c.l.b16 %v737
    %v1117 = vunpack.c.h.b16 %v737
    %v1118 = vunpack.c.l.b16 %v738
    %v1119 = vunpack.c.h.b16 %v738
    %v1120 = vunpack.c.l.b16 %v739
    %v1121 = vunpack.c.h.b16 %v739
    %v1122 = vunpack.c.l.b16 %v740
    %v1123 = vunpack.c.h.b16 %v740
    %v1124 = vunpack.c.l.b16 %v741
    %v1125 = vunpack.c.h.b16 %v741
    %v1126 = vunpack.c.l.b16 %v742
    %v1127 = vunpack.c.h.b16 %v742
    %v1128 = vunpack.c.l.b16 %v743
    %v1129 = vunpack.c.h.b16 %v743
    %v1130 = vunpack.c.l.b16 %v744
    %v1131 = vunpack.c.h.b16 %v744
    %v1132 = vunpack.c.l.b16 %v745
    %v1133 = vunpack.c.h.b16 %v745
    %v1134 = vunpack.c.l.b16 %v746
    %v1135 = vunpack.c.h.b16 %v746
    %v1136 = vunpack.c.l.b16 %v747
    %v1137 = vunpack.c.h.b16 %v747
    %v1138 = vunpack.c.l.b16 %v748
    %v1139 = vunpack.c.h.b16 %v748
    %v1140 = vunpack.c.l.b16 %v749
    %v1141 = vunpack.c.h.b16 %v749
    %v1142 = vunpack.c.l.b16 %v750
    %v1143 = vunpack.c.h.b16 %v750
    %v1144 = vunpack.c.l.b16 %v751
    %v1145 = vunpack.c.h.b16 %v751
    %v1146 = vunpack.c.l.b16 %v752
    %v1147 = vunpack.c.h.b16 %v752
    %v1148 = vpack.c.b16 %v900, %v892
    %v1149 = vpack.c.b16 %v901, %v893
    %v1150 = vpack.c.b16 %v902, %v894
    %v1151 = vpack.c.b16 %v903, %v895
    %v1152 = vpack.c.b16 %v904, %v896
    %v1153 = vpack.c.b16 %v905, %v897
    %v1154 = vpack.c.b16 %v906, %v898
    %v1155 = vpack.c.b16 %v907, %v899
    %v1156 = vpack.c.b16 %v916, %v908
    %v1157 = vpack.c.b16 %v917, %v909
    %v1158 = vpack.c.b16 %v918, %v910
    %v1159 = vpack.c.b16 %v919, %v911
    %v1160 = vpack.c.b16 %v920, %v912
    %v1161 = vpack.c.b16 %v921, %v913
    %v1162 = vpack.c.b16 %v922, %v914
    %v1163 = vpack.c.b16 %v923, %v915
    %v1164 = vpack.c.b16 %v932, %v924
    %v1165 = vpack.c.b16 %v933, %v925
    %v1166 = vpack.c.b16 %v934, %v926
    %v1167 = vpack.c.b16 %v935, %v927
    %v1168 = vpack.c.b16 %v936, %v928
    %v1169 = vpack.c.b16 %v937, %v929
    %v1170 = vpack.c.b16 %v938, %v930
    %v1171 = vpack.c.b16 %v939, %v931
    %v1172 = vpack.c.b16 %v948, %v940
    %v1173 = vpack.c.b16 %v949, %v941
    %v1174 = vpack.c.b16 %v950, %v942
    %v1175 = vpack.c.b16 %v951, %v943
    %v1176 = vpack.c.b16 %v952, %v944
    %v1177 = vpack.c.b16 %v953, %v945
    %v1178 = vpack.c.b16 %v954, %v946
    %v1179 = vpack.c.b16 %v955, %v947
    %v1180 = vpack.c.b16 %v964, %v956
    %v1181 = vpack.c.b16 %v965, %v957
    %v1182 = vpack.c.b16 %v966, %v958
    %v1183 = vpack.c.b16 %v967, %v959
    %v1184 = vpack.c.b16 %v968, %v960
    %v1185 = vpack.c.b16 %v969, %v961
    %v1186 = vpack.c.b16 %v970, %v962
    %v1187 = vpack.c.b16 %v971, %v963
    %v1188 = vpack.c.b16 %v980, %v972
    %v1189 = vpack.c.b16 %v981, %v973
    %v1190 = vpack.c.b16 %v982, %v974
    %v1191 = vpack.c.b16 %v983, %v975
    %v1192 = vpack.c.b16 %v984, %v976
    %v1193 = vpack.c.b16 %v985, %v977
    %v1194 = vpack.c.b16 %v986, %v978
    %v1195 = vpack.c.b16 %v987, %v979
    %v1196 = vpack.c.b16 %v996, %v988
    %v1197 = vpack.c.b16 %v997, %v989
    %v1198 = vpack.c.b16 %v998, %v990
    %v1199 = vpack.c.b16 %v999, %v991
    %v1200 = vpack.c.b16 %v1000, %v992
    %v1201 = vpack.c.b16 %v1001, %v993
    %v1202 = vpack.c.b16 %v1002, %v994
    %v1203 = vpack.c.b16 %v1003, %v995
    %v1204 = vpack.c.b16 %v1012, %v1004
    %v1205 = vpack.c.b16 %v1013, %v1005
    %v1206 = vpack.c.b16 %v1014, %v1006
    %v1207 = vpack.c.b16 %v1015, %v1007
    %v1208 = vpack.c.b16 %v1016, %v1008
    %v1209 = vpack.c.b16 %v1017, %v1009
    %v1210 = vpack.c.b16 %v1018, %v1010
    %v1211 = vpack.c.b16 %v1019, %v1011
    %v1212 = vpack.c.b16 %v1028, %v1020
    %v1213 = vpack.c.b16 %v1029, %v1021
    %v1214 = vpack.c.b16 %v1030, %v1022
    %v1215 = vpack.c.b16 %v1031, %v1023
    %v1216 = vpack.c.b16 %v1032, %v1024
    %v1217 = vpack.c.b16 %v1033, %v1025
    %v1218 = vpack.c.b16 %v1034, %v1026
    %v1219 = vpack.c.b16 %v1035, %v1027
    %v1220 = vpack.c.b16 %v1044, %v1036
    %v1221 = vpack.c.b16 %v1045, %v1037
    %v1222 = vpack.c.b16 %v1046, %v1038
    %v1223 = vpack.c.b16 %v1047, %v1039
    %v1224 = vpack.c.b16 %v1048, %v1040
    %v1225 = vpack.c.b16 %v1049, %v1041
    %v1226 = vpack.c.b16 %v1050, %v1042
    %v1227 = vpack.c.b16 %v1051, %v1043
    %v1228 = vpack.c.b16 %v1060, %v1052
    %v1229 = vpack.c.b16 %v1061, %v1053
    %v1230 = vpack.c.b16 %v1062, %v1054
    %v1231 = vpack.c.b16 %v1063, %v1055
    %v1232 = vpack.c.b16 %v1064, %v1056
    %v1233 = vpack.c.b16 %v1065, %v1057
    %v1234 = vpack.c.b16 %v1066, %v1058
    %v1235 = vpack.c.b16 %v1067, %v1059
    %v1236 = vpack.c.b16 %v1076, %v1068
    %v1237 = vpack.c.b16 %v1077, %v1069
    %v1238 = vpack.c.b16 %v1078, %v1070
    %v1239 = vpack.c.b16 %v1079, %v1071
    %v1240 = vpack.c.b16 %v1080, %v1072
    %v1241 = vpack.c.b16 %v1081, %v1073
    %v1242 = vpack.c.b16 %v1082, %v1074
    %v1243 = vpack.c.b16 %v1083, %v1075
    %v1244 = vpack.c.b16 %v1092, %v1084
    %v1245 = vpack.c.b16 %v1093, %v1085
    %v1246 = vpack.c.b16 %v1094, %v1086
    %v1247 = vpack.c.b16 %v1095, %v1087
    %v1248 = vpack.c.b16 %v1096, %v1088
    %v1249 = vpack.c.b16 %v1097, %v1089
    %v1250 = vpack.c.b16 %v1098, %v1090
    %v1251 = vpack.c.b16 %v1099, %v1091
    %v1252 = vpack.c.b16 %v1108, %v1100
    %v1253 = vpack.c.b16 %v1109, %v1101
    %v1254 = vpack.c.b16 %v1110, %v1102
    %v1255 = vpack.c.b16 %v1111, %v1103
    %v1256 = vpack.c.b16 %v1112, %v1104
    %v1257 = vpack.c.b16 %v1113, %v1105
    %v1258 = vpack.c.b16 %v1114, %v1106
    %v1259 = vpack.c.b16 %v1115, %v1107
    %v1260 = vpack.c.b16 %v1124, %v1116
    %v1261 = vpack.c.b16 %v1125, %v1117
    %v1262 = vpack.c.b16 %v1126, %v1118
    %v1263 = vpack.c.b16 %v1127, %v1119
    %v1264 = vpack.c.b16 %v1128, %v1120
    %v1265 = vpack.c.b16 %v1129, %v1121
    %v1266 = vpack.c.b16 %v1130, %v1122
    %v1267 = vpack.c.b16 %v1131, %v1123
    %v1268 = vpack.c.b16 %v1140, %v1132
    %v1269 = vpack.c.b16 %v1141, %v1133
    %v1270 = vpack.c.b16 %v1142, %v1134
    %v1271 = vpack.c.b16 %v1143, %v1135
    %v1272 = vpack.c.b16 %v1144, %v1136
    %v1273 = vpack.c.b16 %v1145, %v1137
    %v1274 = vpack.c.b16 %v1146, %v1138
    %v1275 = vpack.c.b16 %v1147, %v1139
    %1404 = vmatprep.subr.bf16.mxu0 %v1149
    %1405 = vmatpush1.bf16.msra.mxu0 %v1148
    %1406 = vmatprep.subr.bf16.mxu0 %v1157
    %1407 = vmatpush1.bf16.msra.mxu0 %v1156
    %1408 = vmatprep.subr.bf16.mxu0 %v1165
    %1409 = vmatpush1.bf16.msra.mxu0 %v1164
    %1410 = vmatprep.subr.bf16.mxu0 %v1173
    %1411 = vmatpush1.bf16.msra.mxu0 %v1172
    %1412 = vmatprep.subr.bf16.mxu0 %v1181
    %1413 = vmatpush1.bf16.msra.mxu0 %v1180
    %1414 = vmatprep.subr.bf16.mxu0 %v1189
    %1415 = vmatpush1.bf16.msra.mxu0 %v1188
    %1416 = vmatprep.subr.bf16.mxu0 %v1197
    %1417 = vmatpush1.bf16.msra.mxu0 %v1196
    %1418 = vmatprep.subr.bf16.mxu0 %v1205
    %1419 = vmatpush1.bf16.msra.mxu0 %v1204
    %1420 = vmatprep.subr.bf16.mxu0 %v1213
    %1421 = vmatpush1.bf16.msra.mxu0 %v1212
    %1422 = vmatprep.subr.bf16.mxu0 %v1221
    %1423 = vmatpush1.bf16.msra.mxu0 %v1220
    %1424 = vmatprep.subr.bf16.mxu0 %v1229
    %1425 = vmatpush1.bf16.msra.mxu0 %v1228
    %1426 = vmatprep.subr.bf16.mxu0 %v1237
    %1427 = vmatpush1.bf16.msra.mxu0 %v1236
    %1428 = vmatprep.subr.bf16.mxu0 %v1245
    %1429 = vmatpush1.bf16.msra.mxu0 %v1244
    %1430 = vmatprep.subr.bf16.mxu0 %v1253
    %1431 = vmatpush1.bf16.msra.mxu0 %v1252
    %1432 = vmatprep.subr.bf16.mxu0 %v1261
    %1433 = vmatpush1.bf16.msra.mxu0 %v1260
    %1434 = vmatprep.subr.bf16.mxu0 %v1269
    %1435 = vmatpush1.bf16.msra.mxu0 %v1268
    %1436 = vmatprep.mubr.bf16.mxu0 0
    %1437 = vmatmul.mubr.bf16.gmra.mrb[0].mxu0 0
    %v1438 = vpop.f32.mrb[0].mxu0
    %v1439 = vadd.f32 0.0, %v1438
    %v1440 = vpop.f32.mrb[0].mxu0
    %v1441 = vadd.f32 0.0, %v1440
    %v1442 = vpop.f32.mrb[0].mxu0
    %v1443 = vpop.f32.mrb[0].mxu0
    %1444 = vdwg.mxu0
    %1445 = vmatprep.subr.bf16.mxu0 %v1151
    %1446 = vmatpush1.bf16.msra.mxu0 %v1150
    %1447 = vmatprep.subr.bf16.mxu0 %v1159
    %1448 = vmatpush1.bf16.msra.mxu0 %v1158
    %1449 = vmatprep.subr.bf16.mxu0 %v1167
    %1450 = vmatpush1.bf16.msra.mxu0 %v1166
    %1451 = vmatprep.subr.bf16.mxu0 %v1175
    %1452 = vmatpush1.bf16.msra.mxu0 %v1174
    %1453 = vmatprep.subr.bf16.mxu0 %v1183
    %1454 = vmatpush1.bf16.msra.mxu0 %v1182
    %1455 = vmatprep.subr.bf16.mxu0 %v1191
    %1456 = vmatpush1.bf16.msra.mxu0 %v1190
    %1457 = vmatprep.subr.bf16.mxu0 %v1199
    %1458 = vmatpush1.bf16.msra.mxu0 %v1198
    %1459 = vmatprep.subr.bf16.mxu0 %v1207
    %1460 = vmatpush1.bf16.msra.mxu0 %v1206
    %1461 = vmatprep.subr.bf16.mxu0 %v1215
    %1462 = vmatpush1.bf16.msra.mxu0 %v1214
    %1463 = vmatprep.subr.bf16.mxu0 %v1223
    %1464 = vmatpush1.bf16.msra.mxu0 %v1222
    %1465 = vmatprep.subr.bf16.mxu0 %v1231
    %1466 = vmatpush1.bf16.msra.mxu0 %v1230
    %1467 = vmatprep.subr.bf16.mxu0 %v1239
    %1468 = vmatpush1.bf16.msra.mxu0 %v1238
    %1469 = vmatprep.subr.bf16.mxu0 %v1247
    %1470 = vmatpush1.bf16.msra.mxu0 %v1246
    %1471 = vmatprep.subr.bf16.mxu0 %v1255
    %1472 = vmatpush1.bf16.msra.mxu0 %v1254
    %1473 = vmatprep.subr.bf16.mxu0 %v1263
    %1474 = vmatpush1.bf16.msra.mxu0 %v1262
    %1475 = vmatprep.subr.bf16.mxu0 %v1271
    %1476 = vmatpush1.bf16.msra.mxu0 %v1270
    %1477 = vmatprep.mubr.bf16.mxu0 0
    %1478 = vmatmul.mubr.bf16.gmra.mrb[0].mxu0 0
    %v1479 = vpop.f32.mrb[0].mxu0
    %v1480 = vadd.f32 0.0, %v1479
    %v1481 = vpop.f32.mrb[0].mxu0
    %v1482 = vadd.f32 0.0, %v1481
    %v1483 = vpop.f32.mrb[0].mxu0
    %v1484 = vpop.f32.mrb[0].mxu0
    %1485 = vdwg.mxu0
    %1486 = vmatprep.subr.bf16.mxu0 %v1153
    %1487 = vmatpush1.bf16.msra.mxu0 %v1152
    %1488 = vmatprep.subr.bf16.mxu0 %v1161
    %1489 = vmatpush1.bf16.msra.mxu0 %v1160
    %1490 = vmatprep.subr.bf16.mxu0 %v1169
    %1491 = vmatpush1.bf16.msra.mxu0 %v1168
    %1492 = vmatprep.subr.bf16.mxu0 %v1177
    %1493 = vmatpush1.bf16.msra.mxu0 %v1176
    %1494 = vmatprep.subr.bf16.mxu0 %v1185
    %1495 = vmatpush1.bf16.msra.mxu0 %v1184
    %1496 = vmatprep.subr.bf16.mxu0 %v1193
    %1497 = vmatpush1.bf16.msra.mxu0 %v1192
    %1498 = vmatprep.subr.bf16.mxu0 %v1201
    %1499 = vmatpush1.bf16.msra.mxu0 %v1200
    %1500 = vmatprep.subr.bf16.mxu0 %v1209
    %1501 = vmatpush1.bf16.msra.mxu0 %v1208
    %1502 = vmatprep.subr.bf16.mxu0 %v1217
    %1503 = vmatpush1.bf16.msra.mxu0 %v1216
    %1504 = vmatprep.subr.bf16.mxu0 %v1225
    %1505 = vmatpush1.bf16.msra.mxu0 %v1224
    %1506 = vmatprep.subr.bf16.mxu0 %v1233
    %1507 = vmatpush1.bf16.msra.mxu0 %v1232
    %1508 = vmatprep.subr.bf16.mxu0 %v1241
    %1509 = vmatpush1.bf16.msra.mxu0 %v1240
    %1510 = vmatprep.subr.bf16.mxu0 %v1249
    %1511 = vmatpush1.bf16.msra.mxu0 %v1248
    %1512 = vmatprep.subr.bf16.mxu0 %v1257
    %1513 = vmatpush1.bf16.msra.mxu0 %v1256
    %1514 = vmatprep.subr.bf16.mxu0 %v1265
    %1515 = vmatpush1.bf16.msra.mxu0 %v1264
    %1516 = vmatprep.subr.bf16.mxu0 %v1273
    %1517 = vmatpush1.bf16.msra.mxu0 %v1272
    %1518 = vmatprep.mubr.bf16.mxu0 0
    %1519 = vmatmul.mubr.bf16.gmra.mrb[0].mxu0 0
    %v1520 = vpop.f32.mrb[0].mxu0
    %v1521 = vadd.f32 0.0, %v1520
    %v1522 = vpop.f32.mrb[0].mxu0
    %v1523 = vadd.f32 0.0, %v1522
    %v1524 = vpop.f32.mrb[0].mxu0
    %v1525 = vpop.f32.mrb[0].mxu0
    %1526 = vdwg.mxu0
    %1527 = vmatprep.subr.bf16.mxu0 %v1155
    %1528 = vmatpush1.bf16.msra.mxu0 %v1154
    %1529 = vmatprep.subr.bf16.mxu0 %v1163
    %1530 = vmatpush1.bf16.msra.mxu0 %v1162
    %1531 = vmatprep.subr.bf16.mxu0 %v1171
    %1532 = vmatpush1.bf16.msra.mxu0 %v1170
    %1533 = vmatprep.subr.bf16.mxu0 %v1179
    %1534 = vmatpush1.bf16.msra.mxu0 %v1178
    %1535 = vmatprep.subr.bf16.mxu0 %v1187
    %1536 = vmatpush1.bf16.msra.mxu0 %v1186
    %1537 = vmatprep.subr.bf16.mxu0 %v1195
    %1538 = vmatpush1.bf16.msra.mxu0 %v1194
    %1539 = vmatprep.subr.bf16.mxu0 %v1203
    %1540 = vmatpush1.bf16.msra.mxu0 %v1202
    %1541 = vmatprep.subr.bf16.mxu0 %v1211
    %1542 = vmatpush1.bf16.msra.mxu0 %v1210
    %1543 = vmatprep.subr.bf16.mxu0 %v1219
    %1544 = vmatpush1.bf16.msra.mxu0 %v1218
    %1545 = vmatprep.subr.bf16.mxu0 %v1227
    %1546 = vmatpush1.bf16.msra.mxu0 %v1226
    %1547 = vmatprep.subr.bf16.mxu0 %v1235
    %1548 = vmatpush1.bf16.msra.mxu0 %v1234
    %1549 = vmatprep.subr.bf16.mxu0 %v1243
    %1550 = vmatpush1.bf16.msra.mxu0 %v1242
    %1551 = vmatprep.subr.bf16.mxu0 %v1251
    %1552 = vmatpush1.bf16.msra.mxu0 %v1250
    %1553 = vmatprep.subr.bf16.mxu0 %v1259
    %1554 = vmatpush1.bf16.msra.mxu0 %v1258
    %1555 = vmatprep.subr.bf16.mxu0 %v1267
    %1556 = vmatpush1.bf16.msra.mxu0 %v1266
    %1557 = vmatprep.subr.bf16.mxu0 %v1275
    %1558 = vmatpush1.bf16.msra.mxu0 %v1274
    %1559 = vmatprep.mubr.bf16.mxu0 0
    %1560 = vmatmul.mubr.bf16.gmra.mrb[0].mxu0 0
    %v1561 = vpop.f32.mrb[0].mxu0
    %v1562 = vadd.f32 0.0, %v1561
    %v1563 = vpop.f32.mrb[0].mxu0
    %v1564 = vadd.f32 0.0, %v1563
    %v1565 = vpop.f32.mrb[0].mxu0
    %v1566 = vpop.f32.mrb[0].mxu0
    %1567 = vdwg.mxu0
    %v1568 = vadd.f32 %v756, %v1439
    %v1569 = vadd.f32 %v757, %v1441
    %v1570 = vadd.f32 %v758, %v1480
    %v1571 = vadd.f32 %v759, %v1482
    %v1572 = vadd.f32 %v760, %v1521
    %v1573 = vadd.f32 %v761, %v1523
    %v1574 = vadd.f32 %v762, %v1562
    %v1575 = vadd.f32 %v763, %v1564
    %v1576 = vmul.f32 %v1568, 0.5
    %v1577 = vmul.f32 %v1569, 0.5
    %v1578 = vtanh.pop %v1576
    %v1579 = vtanh.pop %v1577
    %v1580 = vmul.f32 %v1578, 0.5
    %v1581 = vmul.f32 %v1579, 0.5
    %v1582 = vadd.f32 %v1580, 0.5
    %v1583 = vadd.f32 %v1581, 0.5
    %v1584 = vmul.f32 %v1570, 0.5
    %v1585 = vmul.f32 %v1571, 0.5
    %v1586 = vtanh.pop %v1584
    %v1587 = vtanh.pop %v1585
    %v1588 = vmul.f32 %v1586, 0.5
    %v1589 = vmul.f32 %v1587, 0.5
    %v1590 = vadd.f32 %v1588, 0.5
    %v1591 = vadd.f32 %v1589, 0.5
    %v1592 = vtanh.pop %v1572
    %v1593 = vtanh.pop %v1573
    %v1594 = vmul.f32 %v1574, 0.5
    %v1595 = vmul.f32 %v1575, 0.5
    %v1596 = vtanh.pop %v1594
    %v1597 = vtanh.pop %v1595
    %v1598 = vmul.f32 %v1596, 0.5
    %v1599 = vmul.f32 %v1597, 0.5
    %v1600 = vadd.f32 %v1598, 0.5
    %v1601 = vadd.f32 %v1599, 0.5
    %v1602 = vmul.f32 %v1590, 0.0
    %v1603 = vmul.f32 %v1591, 0.0
    %v1604 = vmul.f32 %v1582, %v1592
    %v1605 = vmul.f32 %v1583, %v1593
    %v1606 = vadd.f32 %v1602, %v1604
    %v1607 = vadd.f32 %v1603, %v1605
    %v1608 = vtanh.pop %v1606
    %v1609 = vtanh.pop %v1607
    %v1610 = vmul.f32 %v1600, %v1608
    %v1611 = vmul.f32 %v1601, %v1609
    %s1612 = smul.u32 1, 8
    %s1613 = smul.addr %s1612, 8
    %s1614 = scalar_lea.vmem [#allocation2], %s1613
    %v1615 = vld [vmem:[%s1614] sm:$0xff]
    %v1616 = vld [vmem:[%s1614 + $0x8] sm:$0xff]
    %v1617 = vld [vmem:[%s1614 + $0x10] sm:$0xff]
    %v1618 = vld [vmem:[%s1614 + $0x18] sm:$0xff]
    %v1619 = vld [vmem:[%s1614 + $0x20] sm:$0xff]
    %v1620 = vld [vmem:[%s1614 + $0x28] sm:$0xff]
    %v1621 = vld [vmem:[%s1614 + $0x30] sm:$0xff]
    %v1622 = vld [vmem:[%s1614 + $0x38] sm:$0xff]
    %v1623 = vpack.c.bf16 %v1610, %v1610
    %v1624 = vpack.c.bf16 %v1611, %v1611
    %1625 = vmatprep.subr.bf16.mxu0 %v1149
    %1626 = vmatpush1.bf16.msra.mxu0 %v1148
    %1627 = vmatprep.subr.bf16.mxu0 %v1157
    %1628 = vmatpush1.bf16.msra.mxu0 %v1156
    %1629 = vmatprep.subr.bf16.mxu0 %v1165
    %1630 = vmatpush1.bf16.msra.mxu0 %v1164
    %1631 = vmatprep.subr.bf16.mxu0 %v1173
    %1632 = vmatpush1.bf16.msra.mxu0 %v1172
    %1633 = vmatprep.subr.bf16.mxu0 %v1181
    %1634 = vmatpush1.bf16.msra.mxu0 %v1180
    %1635 = vmatprep.subr.bf16.mxu0 %v1189
    %1636 = vmatpush1.bf16.msra.mxu0 %v1188
    %1637 = vmatprep.subr.bf16.mxu0 %v1197
    %1638 = vmatpush1.bf16.msra.mxu0 %v1196
    %1639 = vmatprep.subr.bf16.mxu0 %v1205
    %1640 = vmatpush1.bf16.msra.mxu0 %v1204
    %1641 = vmatprep.subr.bf16.mxu0 %v1213
    %1642 = vmatpush1.bf16.msra.mxu0 %v1212
    %1643 = vmatprep.subr.bf16.mxu0 %v1221
    %1644 = vmatpush1.bf16.msra.mxu0 %v1220
    %1645 = vmatprep.subr.bf16.mxu0 %v1229
    %1646 = vmatpush1.bf16.msra.mxu0 %v1228
    %1647 = vmatprep.subr.bf16.mxu0 %v1237
    %1648 = vmatpush1.bf16.msra.mxu0 %v1236
    %1649 = vmatprep.subr.bf16.mxu0 %v1245
    %1650 = vmatpush1.bf16.msra.mxu0 %v1244
    %1651 = vmatprep.subr.bf16.mxu0 %v1253
    %1652 = vmatpush1.bf16.msra.mxu0 %v1252
    %1653 = vmatprep.subr.bf16.mxu0 %v1261
    %1654 = vmatpush1.bf16.msra.mxu0 %v1260
    %1655 = vmatprep.subr.bf16.mxu0 %v1269
    %1656 = vmatpush1.bf16.msra.mxu0 %v1268
    %1657 = vmatprep.mubr.bf16.mxu0 %v1624
    %1658 = vmatmul.mubr.bf16.gmra.mrb[0].mxu0 %v1623
    %v1659 = vpop.f32.mrb[0].mxu0
    %v1660 = vadd.f32 0.0, %v1659
    %v1661 = vpop.f32.mrb[0].mxu0
    %v1662 = vadd.f32 0.0, %v1661
    %v1663 = vpop.f32.mrb[0].mxu0
    %v1664 = vpop.f32.mrb[0].mxu0
    %1665 = vdwg.mxu0
    %1666 = vmatprep.subr.bf16.mxu0 %v1151
    %1667 = vmatpush1.bf16.msra.mxu0 %v1150
    %1668 = vmatprep.subr.bf16.mxu0 %v1159
    %1669 = vmatpush1.bf16.msra.mxu0 %v1158
    %1670 = vmatprep.subr.bf16.mxu0 %v1167
    %1671 = vmatpush1.bf16.msra.mxu0 %v1166
    %1672 = vmatprep.subr.bf16.mxu0 %v1175
    %1673 = vmatpush1.bf16.msra.mxu0 %v1174
    %1674 = vmatprep.subr.bf16.mxu0 %v1183
    %1675 = vmatpush1.bf16.msra.mxu0 %v1182
    %1676 = vmatprep.subr.bf16.mxu0 %v1191
    %1677 = vmatpush1.bf16.msra.mxu0 %v1190
    %1678 = vmatprep.subr.bf16.mxu0 %v1199
    %1679 = vmatpush1.bf16.msra.mxu0 %v1198
    %1680 = vmatprep.subr.bf16.mxu0 %v1207
    %1681 = vmatpush1.bf16.msra.mxu0 %v1206
    %1682 = vmatprep.subr.bf16.mxu0 %v1215
    %1683 = vmatpush1.bf16.msra.mxu0 %v1214
    %1684 = vmatprep.subr.bf16.mxu0 %v1223
    %1685 = vmatpush1.bf16.msra.mxu0 %v1222
    %1686 = vmatprep.subr.bf16.mxu0 %v1231
    %1687 = vmatpush1.bf16.msra.mxu0 %v1230
    %1688 = vmatprep.subr.bf16.mxu0 %v1239
    %1689 = vmatpush1.bf16.msra.mxu0 %v1238
    %1690 = vmatprep.subr.bf16.mxu0 %v1247
    %1691 = vmatpush1.bf16.msra.mxu0 %v1246
    %1692 = vmatprep.subr.bf16.mxu0 %v1255
    %1693 = vmatpush1.bf16.msra.mxu0 %v1254
    %1694 = vmatprep.subr.bf16.mxu0 %v1263
    %1695 = vmatpush1.bf16.msra.mxu0 %v1262
    %1696 = vmatprep.subr.bf16.mxu0 %v1271
    %1697 = vmatpush1.bf16.msra.mxu0 %v1270
    %1698 = vmatprep.mubr.bf16.mxu0 %v1624
    %1699 = vmatmul.mubr.bf16.gmra.mrb[0].mxu0 %v1623
    %v1700 = vpop.f32.mrb[0].mxu0
    %v1701 = vadd.f32 0.0, %v1700
    %v1702 = vpop.f32.mrb[0].mxu0
    %v1703 = vadd.f32 0.0, %v1702
    %v1704 = vpop.f32.mrb[0].mxu0
    %v1705 = vpop.f32.mrb[0].mxu0
    %1706 = vdwg.mxu0
    %1707 = vmatprep.subr.bf16.mxu0 %v1153
    %1708 = vmatpush1.bf16.msra.mxu0 %v1152
    %1709 = vmatprep.subr.bf16.mxu0 %v1161
    %1710 = vmatpush1.bf16.msra.mxu0 %v1160
    %1711 = vmatprep.subr.bf16.mxu0 %v1169
    %1712 = vmatpush1.bf16.msra.mxu0 %v1168
    %1713 = vmatprep.subr.bf16.mxu0 %v1177
    %1714 = vmatpush1.bf16.msra.mxu0 %v1176
    %1715 = vmatprep.subr.bf16.mxu0 %v1185
    %1716 = vmatpush1.bf16.msra.mxu0 %v1184
    %1717 = vmatprep.subr.bf16.mxu0 %v1193
    %1718 = vmatpush1.bf16.msra.mxu0 %v1192
    %1719 = vmatprep.subr.bf16.mxu0 %v1201
    %1720 = vmatpush1.bf16.msra.mxu0 %v1200
    %1721 = vmatprep.subr.bf16.mxu0 %v1209
    %1722 = vmatpush1.bf16.msra.mxu0 %v1208
    %1723 = vmatprep.subr.bf16.mxu0 %v1217
    %1724 = vmatpush1.bf16.msra.mxu0 %v1216
    %1725 = vmatprep.subr.bf16.mxu0 %v1225
    %1726 = vmatpush1.bf16.msra.mxu0 %v1224
    %1727 = vmatprep.subr.bf16.mxu0 %v1233
    %1728 = vmatpush1.bf16.msra.mxu0 %v1232
    %1729 = vmatprep.subr.bf16.mxu0 %v1241
    %1730 = vmatpush1.bf16.msra.mxu0 %v1240
    %1731 = vmatprep.subr.bf16.mxu0 %v1249
    %1732 = vmatpush1.bf16.msra.mxu0 %v1248
    %1733 = vmatprep.subr.bf16.mxu0 %v1257
    %1734 = vmatpush1.bf16.msra.mxu0 %v1256
    %1735 = vmatprep.subr.bf16.mxu0 %v1265
    %1736 = vmatpush1.bf16.msra.mxu0 %v1264
    %1737 = vmatprep.subr.bf16.mxu0 %v1273
    %1738 = vmatpush1.bf16.msra.mxu0 %v1272
    %1739 = vmatprep.mubr.bf16.mxu0 %v1624
    %1740 = vmatmul.mubr.bf16.gmra.mrb[0].mxu0 %v1623
    %v1741 = vpop.f32.mrb[0].mxu0
    %v1742 = vadd.f32 0.0, %v1741
    %v1743 = vpop.f32.mrb[0].mxu0
    %v1744 = vadd.f32 0.0, %v1743
    %v1745 = vpop.f32.mrb[0].mxu0
    %v1746 = vpop.f32.mrb[0].mxu0
    %1747 = vdwg.mxu0
    %1748 = vmatprep.subr.bf16.mxu0 %v1155
    %1749 = vmatpush1.bf16.msra.mxu0 %v1154
    %1750 = vmatprep.subr.bf16.mxu0 %v1163
    %1751 = vmatpush1.bf16.msra.mxu0 %v1162
    %1752 = vmatprep.subr.bf16.mxu0 %v1171
    %1753 = vmatpush1.bf16.msra.mxu0 %v1170
    %1754 = vmatprep.subr.bf16.mxu0 %v1179
    %1755 = vmatpush1.bf16.msra.mxu0 %v1178
    %1756 = vmatprep.subr.bf16.mxu0 %v1187
    %1757 = vmatpush1.bf16.msra.mxu0 %v1186
    %1758 = vmatprep.subr.bf16.mxu0 %v1195
    %1759 = vmatpush1.bf16.msra.mxu0 %v1194
    %1760 = vmatprep.subr.bf16.mxu0 %v1203
    %1761 = vmatpush1.bf16.msra.mxu0 %v1202
    %1762 = vmatprep.subr.bf16.mxu0 %v1211
    %1763 = vmatpush1.bf16.msra.mxu0 %v1210
    %1764 = vmatprep.subr.bf16.mxu0 %v1219
    %1765 = vmatpush1.bf16.msra.mxu0 %v1218
    %1766 = vmatprep.subr.bf16.mxu0 %v1227
    %1767 = vmatpush1.bf16.msra.mxu0 %v1226
    %1768 = vmatprep.subr.bf16.mxu0 %v1235
    %1769 = vmatpush1.bf16.msra.mxu0 %v1234
    %1770 = vmatprep.subr.bf16.mxu0 %v1243
    %1771 = vmatpush1.bf16.msra.mxu0 %v1242
    %1772 = vmatprep.subr.bf16.mxu0 %v1251
    %1773 = vmatpush1.bf16.msra.mxu0 %v1250
    %1774 = vmatprep.subr.bf16.mxu0 %v1259
    %1775 = vmatpush1.bf16.msra.mxu0 %v1258
    %1776 = vmatprep.subr.bf16.mxu0 %v1267
    %1777 = vmatpush1.bf16.msra.mxu0 %v1266
    %1778 = vmatprep.subr.bf16.mxu0 %v1275
    %1779 = vmatpush1.bf16.msra.mxu0 %v1274
    %1780 = vmatprep.mubr.bf16.mxu0 %v1624
    %1781 = vmatmul.mubr.bf16.gmra.mrb[0].mxu0 %v1623
    %v1782 = vpop.f32.mrb[0].mxu0
    %v1783 = vadd.f32 0.0, %v1782
    %v1784 = vpop.f32.mrb[0].mxu0
    %v1785 = vadd.f32 0.0, %v1784
    %v1786 = vpop.f32.mrb[0].mxu0
    %v1787 = vpop.f32.mrb[0].mxu0
    %1788 = vdwg.mxu0
    %v1789 = vadd.f32 %v1615, %v1660
    %v1790 = vadd.f32 %v1616, %v1662
    %v1791 = vadd.f32 %v1617, %v1701
    %v1792 = vadd.f32 %v1618, %v1703
    %v1793 = vadd.f32 %v1619, %v1742
    %v1794 = vadd.f32 %v1620, %v1744
    %v1795 = vadd.f32 %v1621, %v1783
    %v1796 = vadd.f32 %v1622, %v1785
    %v1797 = vmul.f32 %v1789, 0.5
    %v1798 = vmul.f32 %v1790, 0.5
    %v1799 = vtanh.pop %v1797
    %v1800 = vtanh.pop %v1798
    %v1801 = vmul.f32 %v1799, 0.5
    %v1802 = vmul.f32 %v1800, 0.5
    %v1803 = vadd.f32 %v1801, 0.5
    %v1804 = vadd.f32 %v1802, 0.5
    %v1805 = vmul.f32 %v1791, 0.5
    %v1806 = vmul.f32 %v1792, 0.5
    %v1807 = vtanh.pop %v1805
    %v1808 = vtanh.pop %v1806
    %v1809 = vmul.f32 %v1807, 0.5
    %v1810 = vmul.f32 %v1808, 0.5
    %v1811 = vadd.f32 %v1809, 0.5
    %v1812 = vadd.f32 %v1810, 0.5
    %v1813 = vtanh.pop %v1793
    %v1814 = vtanh.pop %v1794
    %v1815 = vmul.f32 %v1795, 0.5
    %v1816 = vmul.f32 %v1796, 0.5
    %v1817 = vtanh.pop %v1815
    %v1818 = vtanh.pop %v1816
    %v1819 = vmul.f32 %v1817, 0.5
    %v1820 = vmul.f32 %v1818, 0.5
    %v1821 = vadd.f32 %v1819, 0.5
    %v1822 = vadd.f32 %v1820, 0.5
    %v1823 = vmul.f32 %v1811, %v1606
    %v1824 = vmul.f32 %v1812, %v1607
    %v1825 = vmul.f32 %v1803, %v1813
    %v1826 = vmul.f32 %v1804, %v1814
    %v1827 = vadd.f32 %v1823, %v1825
    %v1828 = vadd.f32 %v1824, %v1826
    %v1829 = vtanh.pop %v1827
    %v1830 = vtanh.pop %v1828
    %v1831 = vmul.f32 %v1821, %v1829
    %v1832 = vmul.f32 %v1822, %v1830
    %s1833 = smul.u32 2, 8
    %s1834 = smul.addr %s1833, 8
    %s1835 = scalar_lea.vmem [#allocation2], %s1834
    %v1836 = vld [vmem:[%s1835] sm:$0xff]
    %v1837 = vld [vmem:[%s1835 + $0x8] sm:$0xff]
    %v1838 = vld [vmem:[%s1835 + $0x10] sm:$0xff]
    %v1839 = vld [vmem:[%s1835 + $0x18] sm:$0xff]
    %v1840 = vld [vmem:[%s1835 + $0x20] sm:$0xff]
    %v1841 = vld [vmem:[%s1835 + $0x28] sm:$0xff]
    %v1842 = vld [vmem:[%s1835 + $0x30] sm:$0xff]
    %v1843 = vld [vmem:[%s1835 + $0x38] sm:$0xff]
    %v1844 = vpack.c.bf16 %v1831, %v1831
    %v1845 = vpack.c.bf16 %v1832, %v1832
    %1846 = vmatprep.subr.bf16.mxu0 %v1149
    %1847 = vmatpush1.bf16.msra.mxu0 %v1148
    %1848 = vmatprep.subr.bf16.mxu0 %v1157
    %1849 = vmatpush1.bf16.msra.mxu0 %v1156
    %1850 = vmatprep.subr.bf16.mxu0 %v1165
    %1851 = vmatpush1.bf16.msra.mxu0 %v1164
    %1852 = vmatprep.subr.bf16.mxu0 %v1173
    %1853 = vmatpush1.bf16.msra.mxu0 %v1172
    %1854 = vmatprep.subr.bf16.mxu0 %v1181
    %1855 = vmatpush1.bf16.msra.mxu0 %v1180
    %1856 = vmatprep.subr.bf16.mxu0 %v1189
    %1857 = vmatpush1.bf16.msra.mxu0 %v1188
    %1858 = vmatprep.subr.bf16.mxu0 %v1197
    %1859 = vmatpush1.bf16.msra.mxu0 %v1196
    %1860 = vmatprep.subr.bf16.mxu0 %v1205
    %1861 = vmatpush1.bf16.msra.mxu0 %v1204
    %1862 = vmatprep.subr.bf16.mxu0 %v1213
    %1863 = vmatpush1.bf16.msra.mxu0 %v1212
    %1864 = vmatprep.subr.bf16.mxu0 %v1221
    %1865 = vmatpush1.bf16.msra.mxu0 %v1220
    %1866 = vmatprep.subr.bf16.mxu0 %v1229
    %1867 = vmatpush1.bf16.msra.mxu0 %v1228
    %1868 = vmatprep.subr.bf16.mxu0 %v1237
    %1869 = vmatpush1.bf16.msra.mxu0 %v1236
    %1870 = vmatprep.subr.bf16.mxu0 %v1245
    %1871 = vmatpush1.bf16.msra.mxu0 %v1244
    %1872 = vmatprep.subr.bf16.mxu0 %v1253
    %1873 = vmatpush1.bf16.msra.mxu0 %v1252
    %1874 = vmatprep.subr.bf16.mxu0 %v1261
    %1875 = vmatpush1.bf16.msra.mxu0 %v1260
    %1876 = vmatprep.subr.bf16.mxu0 %v1269
    %1877 = vmatpush1.bf16.msra.mxu0 %v1268
    %1878 = vmatprep.mubr.bf16.mxu0 %v1845
    %1879 = vmatmul.mubr.bf16.gmra.mrb[0].mxu0 %v1844
    %v1880 = vpop.f32.mrb[0].mxu0
    %v1881 = vadd.f32 0.0, %v1880
    %v1882 = vpop.f32.mrb[0].mxu0
    %v1883 = vadd.f32 0.0, %v1882
    %v1884 = vpop.f32.mrb[0].mxu0
    %v1885 = vpop.f32.mrb[0].mxu0
    %1886 = vdwg.mxu0
    %1887 = vmatprep.subr.bf16.mxu0 %v1151
    %1888 = vmatpush1.bf16.msra.mxu0 %v1150
    %1889 = vmatprep.subr.bf16.mxu0 %v1159
    %1890 = vmatpush1.bf16.msra.mxu0 %v1158
    %1891 = vmatprep.subr.bf16.mxu0 %v1167
    %1892 = vmatpush1.bf16.msra.mxu0 %v1166
    %1893 = vmatprep.subr.bf16.mxu0 %v1175
    %1894 = vmatpush1.bf16.msra.mxu0 %v1174
    %1895 = vmatprep.subr.bf16.mxu0 %v1183
    %1896 = vmatpush1.bf16.msra.mxu0 %v1182
    %1897 = vmatprep.subr.bf16.mxu0 %v1191
    %1898 = vmatpush1.bf16.msra.mxu0 %v1190
    %1899 = vmatprep.subr.bf16.mxu0 %v1199
    %1900 = vmatpush1.bf16.msra.mxu0 %v1198
    %1901 = vmatprep.subr.bf16.mxu0 %v1207
    %1902 = vmatpush1.bf16.msra.mxu0 %v1206
    %1903 = vmatprep.subr.bf16.mxu0 %v1215
    %1904 = vmatpush1.bf16.msra.mxu0 %v1214
    %1905 = vmatprep.subr.bf16.mxu0 %v1223
    %1906 = vmatpush1.bf16.msra.mxu0 %v1222
    %1907 = vmatprep.subr.bf16.mxu0 %v1231
    %1908 = vmatpush1.bf16.msra.mxu0 %v1230
    %1909 = vmatprep.subr.bf16.mxu0 %v1239
    %1910 = vmatpush1.bf16.msra.mxu0 %v1238
    %1911 = vmatprep.subr.bf16.mxu0 %v1247
    %1912 = vmatpush1.bf16.msra.mxu0 %v1246
    %1913 = vmatprep.subr.bf16.mxu0 %v1255
    %1914 = vmatpush1.bf16.msra.mxu0 %v1254
    %1915 = vmatprep.subr.bf16.mxu0 %v1263
    %1916 = vmatpush1.bf16.msra.mxu0 %v1262
    %1917 = vmatprep.subr.bf16.mxu0 %v1271
    %1918 = vmatpush1.bf16.msra.mxu0 %v1270
    %1919 = vmatprep.mubr.bf16.mxu0 %v1845
    %1920 = vmatmul.mubr.bf16.gmra.mrb[0].mxu0 %v1844
    %v1921 = vpop.f32.mrb[0].mxu0
    %v1922 = vadd.f32 0.0, %v1921
    %v1923 = vpop.f32.mrb[0].mxu0
    %v1924 = vadd.f32 0.0, %v1923
    %v1925 = vpop.f32.mrb[0].mxu0
    %v1926 = vpop.f32.mrb[0].mxu0
    %1927 = vdwg.mxu0
    %1928 = vmatprep.subr.bf16.mxu0 %v1153
    %1929 = vmatpush1.bf16.msra.mxu0 %v1152
    %1930 = vmatprep.subr.bf16.mxu0 %v1161
    %1931 = vmatpush1.bf16.msra.mxu0 %v1160
    %1932 = vmatprep.subr.bf16.mxu0 %v1169
    %1933 = vmatpush1.bf16.msra.mxu0 %v1168
    %1934 = vmatprep.subr.bf16.mxu0 %v1177
    %1935 = vmatpush1.bf16.msra.mxu0 %v1176
    %1936 = vmatprep.subr.bf16.mxu0 %v1185
    %1937 = vmatpush1.bf16.msra.mxu0 %v1184
    %1938 = vmatprep.subr.bf16.mxu0 %v1193
    %1939 = vmatpush1.bf16.msra.mxu0 %v1192
    %1940 = vmatprep.subr.bf16.mxu0 %v1201
    %1941 = vmatpush1.bf16.msra.mxu0 %v1200
    %1942 = vmatprep.subr.bf16.mxu0 %v1209
    %1943 = vmatpush1.bf16.msra.mxu0 %v1208
    %1944 = vmatprep.subr.bf16.mxu0 %v1217
    %1945 = vmatpush1.bf16.msra.mxu0 %v1216
    %1946 = vmatprep.subr.bf16.mxu0 %v1225
    %1947 = vmatpush1.bf16.msra.mxu0 %v1224
    %1948 = vmatprep.subr.bf16.mxu0 %v1233
    %1949 = vmatpush1.bf16.msra.mxu0 %v1232
    %1950 = vmatprep.subr.bf16.mxu0 %v1241
    %1951 = vmatpush1.bf16.msra.mxu0 %v1240
    %1952 = vmatprep.subr.bf16.mxu0 %v1249
    %1953 = vmatpush1.bf16.msra.mxu0 %v1248
    %1954 = vmatprep.subr.bf16.mxu0 %v1257
    %1955 = vmatpush1.bf16.msra.mxu0 %v1256
    %1956 = vmatprep.subr.bf16.mxu0 %v1265
    %1957 = vmatpush1.bf16.msra.mxu0 %v1264
    %1958 = vmatprep.subr.bf16.mxu0 %v1273
    %1959 = vmatpush1.bf16.msra.mxu0 %v1272
    %1960 = vmatprep.mubr.bf16.mxu0 %v1845
    %1961 = vmatmul.mubr.bf16.gmra.mrb[0].mxu0 %v1844
    %v1962 = vpop.f32.mrb[0].mxu0
    %v1963 = vadd.f32 0.0, %v1962
    %v1964 = vpop.f32.mrb[0].mxu0
    %v1965 = vadd.f32 0.0, %v1964
    %v1966 = vpop.f32.mrb[0].mxu0
    %v1967 = vpop.f32.mrb[0].mxu0
    %1968 = vdwg.mxu0
    %1969 = vmatprep.subr.bf16.mxu0 %v1155
    %1970 = vmatpush1.bf16.msra.mxu0 %v1154
    %1971 = vmatprep.subr.bf16.mxu0 %v1163
    %1972 = vmatpush1.bf16.msra.mxu0 %v1162
    %1973 = vmatprep.subr.bf16.mxu0 %v1171
    %1974 = vmatpush1.bf16.msra.mxu0 %v1170
    %1975 = vmatprep.subr.bf16.mxu0 %v1179
    %1976 = vmatpush1.bf16.msra.mxu0 %v1178
    %1977 = vmatprep.subr.bf16.mxu0 %v1187
    %1978 = vmatpush1.bf16.msra.mxu0 %v1186
    %1979 = vmatprep.subr.bf16.mxu0 %v1195
    %1980 = vmatpush1.bf16.msra.mxu0 %v1194
    %1981 = vmatprep.subr.bf16.mxu0 %v1203
    %1982 = vmatpush1.bf16.msra.mxu0 %v1202
    %1983 = vmatprep.subr.bf16.mxu0 %v1211
    %1984 = vmatpush1.bf16.msra.mxu0 %v1210
    %1985 = vmatprep.subr.bf16.mxu0 %v1219
    %1986 = vmatpush1.bf16.msra.mxu0 %v1218
    %1987 = vmatprep.subr.bf16.mxu0 %v1227
    %1988 = vmatpush1.bf16.msra.mxu0 %v1226
    %1989 = vmatprep.subr.bf16.mxu0 %v1235
    %1990 = vmatpush1.bf16.msra.mxu0 %v1234
    %1991 = vmatprep.subr.bf16.mxu0 %v1243
    %1992 = vmatpush1.bf16.msra.mxu0 %v1242
    %1993 = vmatprep.subr.bf16.mxu0 %v1251
    %1994 = vmatpush1.bf16.msra.mxu0 %v1250
    %1995 = vmatprep.subr.bf16.mxu0 %v1259
    %1996 = vmatpush1.bf16.msra.mxu0 %v1258
    %1997 = vmatprep.subr.bf16.mxu0 %v1267
    %1998 = vmatpush1.bf16.msra.mxu0 %v1266
    %1999 = vmatprep.subr.bf16.mxu0 %v1275
    %2000 = vmatpush1.bf16.msra.mxu0 %v1274
    %2001 = vmatprep.mubr.bf16.mxu0 %v1845
    %2002 = vmatmul.mubr.bf16.gmra.mrb[0].mxu0 %v1844
    %v2003 = vpop.f32.mrb[0].mxu0
    %v2004 = vadd.f32 0.0, %v2003
    %v2005 = vpop.f32.mrb[0].mxu0
    %v2006 = vadd.f32 0.0, %v2005
    %v2007 = vpop.f32.mrb[0].mxu0
    %v2008 = vpop.f32.mrb[0].mxu0
    %2009 = vdwg.mxu0
    %v2010 = vadd.f32 %v1836, %v1881
    %v2011 = vadd.f32 %v1837, %v1883
    %v2012 = vadd.f32 %v1838, %v1922
    %v2013 = vadd.f32 %v1839, %v1924
    %v2014 = vadd.f32 %v1840, %v1963
    %v2015 = vadd.f32 %v1841, %v1965
    %v2016 = vadd.f32 %v1842, %v2004
    %v2017 = vadd.f32 %v1843, %v2006
    %v2018 = vmul.f32 %v2010, 0.5
    %v2019 = vmul.f32 %v2011, 0.5
    %v2020 = vtanh.pop %v2018
    %v2021 = vtanh.pop %v2019
    %v2022 = vmul.f32 %v2020, 0.5
    %v2023 = vmul.f32 %v2021, 0.5
    %v2024 = vadd.f32 %v2022, 0.5
    %v2025 = vadd.f32 %v2023, 0.5
    %v2026 = vmul.f32 %v2012, 0.5
    %v2027 = vmul.f32 %v2013, 0.5
    %v2028 = vtanh.pop %v2026
    %v2029 = vtanh.pop %v2027
    %v2030 = vmul.f32 %v2028, 0.5
    %v2031 = vmul.f32 %v2029, 0.5
    %v2032 = vadd.f32 %v2030, 0.5
    %v2033 = vadd.f32 %v2031, 0.5
    %v2034 = vtanh.pop %v2014
    %v2035 = vtanh.pop %v2015
    %v2036 = vmul.f32 %v2016, 0.5
    %v2037 = vmul.f32 %v2017, 0.5
    %v2038 = vtanh.pop %v2036
    %v2039 = vtanh.pop %v2037
    %v2040 = vmul.f32 %v2038, 0.5
    %v2041 = vmul.f32 %v2039, 0.5
    %v2042 = vadd.f32 %v2040, 0.5
    %v2043 = vadd.f32 %v2041, 0.5
    %v2044 = vmul.f32 %v2032, %v1827
    %v2045 = vmul.f32 %v2033, %v1828
    %v2046 = vmul.f32 %v2024, %v2034
    %v2047 = vmul.f32 %v2025, %v2035
    %v2048 = vadd.f32 %v2044, %v2046
    %v2049 = vadd.f32 %v2045, %v2047
    %v2050 = vtanh.pop %v2048
    %v2051 = vtanh.pop %v2049
    %v2052 = vmul.f32 %v2042, %v2050
    %v2053 = vmul.f32 %v2043, %v2051
    %s2054 = smul.u32 3, 8
    %s2055 = smul.addr %s2054, 8
    %s2056 = scalar_lea.vmem [#allocation2], %s2055
    %v2057 = vld [vmem:[%s2056] sm:$0xff]
    %v2058 = vld [vmem:[%s2056 + $0x8] sm:$0xff]
    %v2059 = vld [vmem:[%s2056 + $0x10] sm:$0xff]
    %v2060 = vld [vmem:[%s2056 + $0x18] sm:$0xff]
    %v2061 = vld [vmem:[%s2056 + $0x20] sm:$0xff]
    %v2062 = vld [vmem:[%s2056 + $0x28] sm:$0xff]
    %v2063 = vld [vmem:[%s2056 + $0x30] sm:$0xff]
    %v2064 = vld [vmem:[%s2056 + $0x38] sm:$0xff]
    %v2065 = vpack.c.bf16 %v2052, %v2052
    %v2066 = vpack.c.bf16 %v2053, %v2053
    %2067 = vmatprep.subr.bf16.mxu0 %v1149
    %2068 = vmatpush1.bf16.msra.mxu0 %v1148
    %2069 = vmatprep.subr.bf16.mxu0 %v1157
    %2070 = vmatpush1.bf16.msra.mxu0 %v1156
    %2071 = vmatprep.subr.bf16.mxu0 %v1165
    %2072 = vmatpush1.bf16.msra.mxu0 %v1164
    %2073 = vmatprep.subr.bf16.mxu0 %v1173
    %2074 = vmatpush1.bf16.msra.mxu0 %v1172
    %2075 = vmatprep.subr.bf16.mxu0 %v1181
    %2076 = vmatpush1.bf16.msra.mxu0 %v1180
    %2077 = vmatprep.subr.bf16.mxu0 %v1189
    %2078 = vmatpush1.bf16.msra.mxu0 %v1188
    %2079 = vmatprep.subr.bf16.mxu0 %v1197
    %2080 = vmatpush1.bf16.msra.mxu0 %v1196
    %2081 = vmatprep.subr.bf16.mxu0 %v1205
    %2082 = vmatpush1.bf16.msra.mxu0 %v1204
    %2083 = vmatprep.subr.bf16.mxu0 %v1213
    %2084 = vmatpush1.bf16.msra.mxu0 %v1212
    %2085 = vmatprep.subr.bf16.mxu0 %v1221
    %2086 = vmatpush1.bf16.msra.mxu0 %v1220
    %2087 = vmatprep.subr.bf16.mxu0 %v1229
    %2088 = vmatpush1.bf16.msra.mxu0 %v1228
    %2089 = vmatprep.subr.bf16.mxu0 %v1237
    %2090 = vmatpush1.bf16.msra.mxu0 %v1236
    %2091 = vmatprep.subr.bf16.mxu0 %v1245
    %2092 = vmatpush1.bf16.msra.mxu0 %v1244
    %2093 = vmatprep.subr.bf16.mxu0 %v1253
    %2094 = vmatpush1.bf16.msra.mxu0 %v1252
    %2095 = vmatprep.subr.bf16.mxu0 %v1261
    %2096 = vmatpush1.bf16.msra.mxu0 %v1260
    %2097 = vmatprep.subr.bf16.mxu0 %v1269
    %2098 = vmatpush1.bf16.msra.mxu0 %v1268
    %2099 = vmatprep.mubr.bf16.mxu0 %v2066
    %2100 = vmatmul.mubr.bf16.gmra.mrb[0].mxu0 %v2065
    %v2101 = vpop.f32.mrb[0].mxu0
    %v2102 = vadd.f32 0.0, %v2101
    %v2103 = vpop.f32.mrb[0].mxu0
    %v2104 = vadd.f32 0.0, %v2103
    %v2105 = vpop.f32.mrb[0].mxu0
    %v2106 = vpop.f32.mrb[0].mxu0
    %2107 = vdwg.mxu0
    %2108 = vmatprep.subr.bf16.mxu0 %v1151
    %2109 = vmatpush1.bf16.msra.mxu0 %v1150
    %2110 = vmatprep.subr.bf16.mxu0 %v1159
    %2111 = vmatpush1.bf16.msra.mxu0 %v1158
    %2112 = vmatprep.subr.bf16.mxu0 %v1167
    %2113 = vmatpush1.bf16.msra.mxu0 %v1166
    %2114 = vmatprep.subr.bf16.mxu0 %v1175
    %2115 = vmatpush1.bf16.msra.mxu0 %v1174
    %2116 = vmatprep.subr.bf16.mxu0 %v1183
    %2117 = vmatpush1.bf16.msra.mxu0 %v1182
    %2118 = vmatprep.subr.bf16.mxu0 %v1191
    %2119 = vmatpush1.bf16.msra.mxu0 %v1190
    %2120 = vmatprep.subr.bf16.mxu0 %v1199
    %2121 = vmatpush1.bf16.msra.mxu0 %v1198
    %2122 = vmatprep.subr.bf16.mxu0 %v1207
    %2123 = vmatpush1.bf16.msra.mxu0 %v1206
    %2124 = vmatprep.subr.bf16.mxu0 %v1215
    %2125 = vmatpush1.bf16.msra.mxu0 %v1214
    %2126 = vmatprep.subr.bf16.mxu0 %v1223
    %2127 = vmatpush1.bf16.msra.mxu0 %v1222
    %2128 = vmatprep.subr.bf16.mxu0 %v1231
    %2129 = vmatpush1.bf16.msra.mxu0 %v1230
    %2130 = vmatprep.subr.bf16.mxu0 %v1239
    %2131 = vmatpush1.bf16.msra.mxu0 %v1238
    %2132 = vmatprep.subr.bf16.mxu0 %v1247
    %2133 = vmatpush1.bf16.msra.mxu0 %v1246
    %2134 = vmatprep.subr.bf16.mxu0 %v1255
    %2135 = vmatpush1.bf16.msra.mxu0 %v1254
    %2136 = vmatprep.subr.bf16.mxu0 %v1263
    %2137 = vmatpush1.bf16.msra.mxu0 %v1262
    %2138 = vmatprep.subr.bf16.mxu0 %v1271
    %2139 = vmatpush1.bf16.msra.mxu0 %v1270
    %2140 = vmatprep.mubr.bf16.mxu0 %v2066
    %2141 = vmatmul.mubr.bf16.gmra.mrb[0].mxu0 %v2065
    %v2142 = vpop.f32.mrb[0].mxu0
    %v2143 = vadd.f32 0.0, %v2142
    %v2144 = vpop.f32.mrb[0].mxu0
    %v2145 = vadd.f32 0.0, %v2144
    %v2146 = vpop.f32.mrb[0].mxu0
    %v2147 = vpop.f32.mrb[0].mxu0
    %2148 = vdwg.mxu0
    %2149 = vmatprep.subr.bf16.mxu0 %v1153
    %2150 = vmatpush1.bf16.msra.mxu0 %v1152
    %2151 = vmatprep.subr.bf16.mxu0 %v1161
    %2152 = vmatpush1.bf16.msra.mxu0 %v1160
    %2153 = vmatprep.subr.bf16.mxu0 %v1169
    %2154 = vmatpush1.bf16.msra.mxu0 %v1168
    %2155 = vmatprep.subr.bf16.mxu0 %v1177
    %2156 = vmatpush1.bf16.msra.mxu0 %v1176
    %2157 = vmatprep.subr.bf16.mxu0 %v1185
    %2158 = vmatpush1.bf16.msra.mxu0 %v1184
    %2159 = vmatprep.subr.bf16.mxu0 %v1193
    %2160 = vmatpush1.bf16.msra.mxu0 %v1192
    %2161 = vmatprep.subr.bf16.mxu0 %v1201
    %2162 = vmatpush1.bf16.msra.mxu0 %v1200
    %2163 = vmatprep.subr.bf16.mxu0 %v1209
    %2164 = vmatpush1.bf16.msra.mxu0 %v1208
    %2165 = vmatprep.subr.bf16.mxu0 %v1217
    %2166 = vmatpush1.bf16.msra.mxu0 %v1216
    %2167 = vmatprep.subr.bf16.mxu0 %v1225
    %2168 = vmatpush1.bf16.msra.mxu0 %v1224
    %2169 = vmatprep.subr.bf16.mxu0 %v1233
    %2170 = vmatpush1.bf16.msra.mxu0 %v1232
    %2171 = vmatprep.subr.bf16.mxu0 %v1241
    %2172 = vmatpush1.bf16.msra.mxu0 %v1240
    %2173 = vmatprep.subr.bf16.mxu0 %v1249
    %2174 = vmatpush1.bf16.msra.mxu0 %v1248
    %2175 = vmatprep.subr.bf16.mxu0 %v1257
    %2176 = vmatpush1.bf16.msra.mxu0 %v1256
    %2177 = vmatprep.subr.bf16.mxu0 %v1265
    %2178 = vmatpush1.bf16.msra.mxu0 %v1264
    %2179 = vmatprep.subr.bf16.mxu0 %v1273
    %2180 = vmatpush1.bf16.msra.mxu0 %v1272
    %2181 = vmatprep.mubr.bf16.mxu0 %v2066
    %2182 = vmatmul.mubr.bf16.gmra.mrb[0].mxu0 %v2065
    %v2183 = vpop.f32.mrb[0].mxu0
    %v2184 = vadd.f32 0.0, %v2183
    %v2185 = vpop.f32.mrb[0].mxu0
    %v2186 = vadd.f32 0.0, %v2185
    %v2187 = vpop.f32.mrb[0].mxu0
    %v2188 = vpop.f32.mrb[0].mxu0
    %2189 = vdwg.mxu0
    %2190 = vmatprep.subr.bf16.mxu0 %v1155
    %2191 = vmatpush1.bf16.msra.mxu0 %v1154
    %2192 = vmatprep.subr.bf16.mxu0 %v1163
    %2193 = vmatpush1.bf16.msra.mxu0 %v1162
    %2194 = vmatprep.subr.bf16.mxu0 %v1171
    %2195 = vmatpush1.bf16.msra.mxu0 %v1170
    %2196 = vmatprep.subr.bf16.mxu0 %v1179
    %2197 = vmatpush1.bf16.msra.mxu0 %v1178
    %2198 = vmatprep.subr.bf16.mxu0 %v1187
    %2199 = vmatpush1.bf16.msra.mxu0 %v1186
    %2200 = vmatprep.subr.bf16.mxu0 %v1195
    %2201 = vmatpush1.bf16.msra.mxu0 %v1194
    %2202 = vmatprep.subr.bf16.mxu0 %v1203
    %2203 = vmatpush1.bf16.msra.mxu0 %v1202
    %2204 = vmatprep.subr.bf16.mxu0 %v1211
    %2205 = vmatpush1.bf16.msra.mxu0 %v1210
    %2206 = vmatprep.subr.bf16.mxu0 %v1219
    %2207 = vmatpush1.bf16.msra.mxu0 %v1218
    %2208 = vmatprep.subr.bf16.mxu0 %v1227
    %2209 = vmatpush1.bf16.msra.mxu0 %v1226
    %2210 = vmatprep.subr.bf16.mxu0 %v1235
    %2211 = vmatpush1.bf16.msra.mxu0 %v1234
    %2212 = vmatprep.subr.bf16.mxu0 %v1243
    %2213 = vmatpush1.bf16.msra.mxu0 %v1242
    %2214 = vmatprep.subr.bf16.mxu0 %v1251
    %2215 = vmatpush1.bf16.msra.mxu0 %v1250
    %2216 = vmatprep.subr.bf16.mxu0 %v1259
    %2217 = vmatpush1.bf16.msra.mxu0 %v1258
    %2218 = vmatprep.subr.bf16.mxu0 %v1267
    %2219 = vmatpush1.bf16.msra.mxu0 %v1266
    %2220 = vmatprep.subr.bf16.mxu0 %v1275
    %2221 = vmatpush1.bf16.msra.mxu0 %v1274
    %2222 = vmatprep.mubr.bf16.mxu0 %v2066
    %2223 = vmatmul.mubr.bf16.gmra.mrb[0].mxu0 %v2065
    %v2224 = vpop.f32.mrb[0].mxu0
    %v2225 = vadd.f32 0.0, %v2224
    %v2226 = vpop.f32.mrb[0].mxu0
    %v2227 = vadd.f32 0.0, %v2226
    %v2228 = vpop.f32.mrb[0].mxu0
    %v2229 = vpop.f32.mrb[0].mxu0
    %2230 = vdwg.mxu0
    %v2231 = vadd.f32 %v2057, %v2102
    %v2232 = vadd.f32 %v2058, %v2104
    %v2233 = vadd.f32 %v2059, %v2143
    %v2234 = vadd.f32 %v2060, %v2145
    %v2235 = vadd.f32 %v2061, %v2184
    %v2236 = vadd.f32 %v2062, %v2186
    %v2237 = vadd.f32 %v2063, %v2225
    %v2238 = vadd.f32 %v2064, %v2227
    %v2239 = vmul.f32 %v2231, 0.5
    %v2240 = vmul.f32 %v2232, 0.5
    %v2241 = vtanh.pop %v2239
    %v2242 = vtanh.pop %v2240
    %v2243 = vmul.f32 %v2241, 0.5
    %v2244 = vmul.f32 %v2242, 0.5
    %v2245 = vadd.f32 %v2243, 0.5
    %v2246 = vadd.f32 %v2244, 0.5
    %v2247 = vmul.f32 %v2233, 0.5
    %v2248 = vmul.f32 %v2234, 0.5
    %v2249 = vtanh.pop %v2247
    %v2250 = vtanh.pop %v2248
    %v2251 = vmul.f32 %v2249, 0.5
    %v2252 = vmul.f32 %v2250, 0.5
    %v2253 = vadd.f32 %v2251, 0.5
    %v2254 = vadd.f32 %v2252, 0.5
    %v2255 = vtanh.pop %v2235
    %v2256 = vtanh.pop %v2236
    %v2257 = vmul.f32 %v2237, 0.5
    %v2258 = vmul.f32 %v2238, 0.5
    %v2259 = vtanh.pop %v2257
    %v2260 = vtanh.pop %v2258
    %v2261 = vmul.f32 %v2259, 0.5
    %v2262 = vmul.f32 %v2260, 0.5
    %v2263 = vadd.f32 %v2261, 0.5
    %v2264 = vadd.f32 %v2262, 0.5
    %v2265 = vmul.f32 %v2253, %v2048
    %v2266 = vmul.f32 %v2254, %v2049
    %v2267 = vmul.f32 %v2245, %v2255
    %v2268 = vmul.f32 %v2246, %v2256
    %v2269 = vadd.f32 %v2265, %v2267
    %v2270 = vadd.f32 %v2266, %v2268
    %v2271 = vtanh.pop %v2269
    %v2272 = vtanh.pop %v2270
    %v2273 = vmul.f32 %v2263, %v2271
    %v2274 = vmul.f32 %v2264, %v2272
    %s2275 = smul.u32 4, 8
    %s2276 = smul.addr %s2275, 8
    %s2277 = scalar_lea.vmem [#allocation2], %s2276
    %v2278 = vld [vmem:[%s2277] sm:$0xff]
    %v2279 = vld [vmem:[%s2277 + $0x8] sm:$0xff]
    %v2280 = vld [vmem:[%s2277 + $0x10] sm:$0xff]
    %v2281 = vld [vmem:[%s2277 + $0x18] sm:$0xff]
    %v2282 = vld [vmem:[%s2277 + $0x20] sm:$0xff]
    %v2283 = vld [vmem:[%s2277 + $0x28] sm:$0xff]
    %v2284 = vld [vmem:[%s2277 + $0x30] sm:$0xff]
    %v2285 = vld [vmem:[%s2277 + $0x38] sm:$0xff]
    %v2286 = vpack.c.bf16 %v2273, %v2273
    %v2287 = vpack.c.bf16 %v2274, %v2274
    %2288 = vmatprep.subr.bf16.mxu0 %v1149
    %2289 = vmatpush1.bf16.msra.mxu0 %v1148
    %2290 = vmatprep.subr.bf16.mxu0 %v1157
    %2291 = vmatpush1.bf16.msra.mxu0 %v1156
    %2292 = vmatprep.subr.bf16.mxu0 %v1165
    %2293 = vmatpush1.bf16.msra.mxu0 %v1164
    %2294 = vmatprep.subr.bf16.mxu0 %v1173
    %2295 = vmatpush1.bf16.msra.mxu0 %v1172
    %2296 = vmatprep.subr.bf16.mxu0 %v1181
    %2297 = vmatpush1.bf16.msra.mxu0 %v1180
    %2298 = vmatprep.subr.bf16.mxu0 %v1189
    %2299 = vmatpush1.bf16.msra.mxu0 %v1188
    %2300 = vmatprep.subr.bf16.mxu0 %v1197
    %2301 = vmatpush1.bf16.msra.mxu0 %v1196
    %2302 = vmatprep.subr.bf16.mxu0 %v1205
    %2303 = vmatpush1.bf16.msra.mxu0 %v1204
    %2304 = vmatprep.subr.bf16.mxu0 %v1213
    %2305 = vmatpush1.bf16.msra.mxu0 %v1212
    %2306 = vmatprep.subr.bf16.mxu0 %v1221
    %2307 = vmatpush1.bf16.msra.mxu0 %v1220
    %2308 = vmatprep.subr.bf16.mxu0 %v1229
    %2309 = vmatpush1.bf16.msra.mxu0 %v1228
    %2310 = vmatprep.subr.bf16.mxu0 %v1237
    %2311 = vmatpush1.bf16.msra.mxu0 %v1236
    %2312 = vmatprep.subr.bf16.mxu0 %v1245
    %2313 = vmatpush1.bf16.msra.mxu0 %v1244
    %2314 = vmatprep.subr.bf16.mxu0 %v1253
    %2315 = vmatpush1.bf16.msra.mxu0 %v1252
    %2316 = vmatprep.subr.bf16.mxu0 %v1261
    %2317 = vmatpush1.bf16.msra.mxu0 %v1260
    %2318 = vmatprep.subr.bf16.mxu0 %v1269
    %2319 = vmatpush1.bf16.msra.mxu0 %v1268
    %2320 = vmatprep.mubr.bf16.mxu0 %v2287
    %2321 = vmatmul.mubr.bf16.gmra.mrb[0].mxu0 %v2286
    %v2322 = vpop.f32.mrb[0].mxu0
    %v2323 = vadd.f32 0.0, %v2322
    %v2324 = vpop.f32.mrb[0].mxu0
    %v2325 = vadd.f32 0.0, %v2324
    %v2326 = vpop.f32.mrb[0].mxu0
    %v2327 = vpop.f32.mrb[0].mxu0
    %2328 = vdwg.mxu0
    %2329 = vmatprep.subr.bf16.mxu0 %v1151
    %2330 = vmatpush1.bf16.msra.mxu0 %v1150
    %2331 = vmatprep.subr.bf16.mxu0 %v1159
    %2332 = vmatpush1.bf16.msra.mxu0 %v1158
    %2333 = vmatprep.subr.bf16.mxu0 %v1167
    %2334 = vmatpush1.bf16.msra.mxu0 %v1166
    %2335 = vmatprep.subr.bf16.mxu0 %v1175
    %2336 = vmatpush1.bf16.msra.mxu0 %v1174
    %2337 = vmatprep.subr.bf16.mxu0 %v1183
    %2338 = vmatpush1.bf16.msra.mxu0 %v1182
    %2339 = vmatprep.subr.bf16.mxu0 %v1191
    %2340 = vmatpush1.bf16.msra.mxu0 %v1190
    %2341 = vmatprep.subr.bf16.mxu0 %v1199
    %2342 = vmatpush1.bf16.msra.mxu0 %v1198
    %2343 = vmatprep.subr.bf16.mxu0 %v1207
    %2344 = vmatpush1.bf16.msra.mxu0 %v1206
    %2345 = vmatprep.subr.bf16.mxu0 %v1215
    %2346 = vmatpush1.bf16.msra.mxu0 %v1214
    %2347 = vmatprep.subr.bf16.mxu0 %v1223
    %2348 = vmatpush1.bf16.msra.mxu0 %v1222
    %2349 = vmatprep.subr.bf16.mxu0 %v1231
    %2350 = vmatpush1.bf16.msra.mxu0 %v1230
    %2351 = vmatprep.subr.bf16.mxu0 %v1239
    %2352 = vmatpush1.bf16.msra.mxu0 %v1238
    %2353 = vmatprep.subr.bf16.mxu0 %v1247
    %2354 = vmatpush1.bf16.msra.mxu0 %v1246
    %2355 = vmatprep.subr.bf16.mxu0 %v1255
    %2356 = vmatpush1.bf16.msra.mxu0 %v1254
    %2357 = vmatprep.subr.bf16.mxu0 %v1263
    %2358 = vmatpush1.bf16.msra.mxu0 %v1262
    %2359 = vmatprep.subr.bf16.mxu0 %v1271
    %2360 = vmatpush1.bf16.msra.mxu0 %v1270
    %2361 = vmatprep.mubr.bf16.mxu0 %v2287
    %2362 = vmatmul.mubr.bf16.gmra.mrb[0].mxu0 %v2286
    %v2363 = vpop.f32.mrb[0].mxu0
    %v2364 = vadd.f32 0.0, %v2363
    %v2365 = vpop.f32.mrb[0].mxu0
    %v2366 = vadd.f32 0.0, %v2365
    %v2367 = vpop.f32.mrb[0].mxu0
    %v2368 = vpop.f32.mrb[0].mxu0
    %2369 = vdwg.mxu0
    %2370 = vmatprep.subr.bf16.mxu0 %v1153
    %2371 = vmatpush1.bf16.msra.mxu0 %v1152
    %2372 = vmatprep.subr.bf16.mxu0 %v1161
    %2373 = vmatpush1.bf16.msra.mxu0 %v1160
    %2374 = vmatprep.subr.bf16.mxu0 %v1169
    %2375 = vmatpush1.bf16.msra.mxu0 %v1168
    %2376 = vmatprep.subr.bf16.mxu0 %v1177
    %2377 = vmatpush1.bf16.msra.mxu0 %v1176
    %2378 = vmatprep.subr.bf16.mxu0 %v1185
    %2379 = vmatpush1.bf16.msra.mxu0 %v1184
    %2380 = vmatprep.subr.bf16.mxu0 %v1193
    %2381 = vmatpush1.bf16.msra.mxu0 %v1192
    %2382 = vmatprep.subr.bf16.mxu0 %v1201
    %2383 = vmatpush1.bf16.msra.mxu0 %v1200
    %2384 = vmatprep.subr.bf16.mxu0 %v1209
    %2385 = vmatpush1.bf16.msra.mxu0 %v1208
    %2386 = vmatprep.subr.bf16.mxu0 %v1217
    %2387 = vmatpush1.bf16.msra.mxu0 %v1216
    %2388 = vmatprep.subr.bf16.mxu0 %v1225
    %2389 = vmatpush1.bf16.msra.mxu0 %v1224
    %2390 = vmatprep.subr.bf16.mxu0 %v1233
    %2391 = vmatpush1.bf16.msra.mxu0 %v1232
    %2392 = vmatprep.subr.bf16.mxu0 %v1241
    %2393 = vmatpush1.bf16.msra.mxu0 %v1240
    %2394 = vmatprep.subr.bf16.mxu0 %v1249
    %2395 = vmatpush1.bf16.msra.mxu0 %v1248
    %2396 = vmatprep.subr.bf16.mxu0 %v1257
    %2397 = vmatpush1.bf16.msra.mxu0 %v1256
    %2398 = vmatprep.subr.bf16.mxu0 %v1265
    %2399 = vmatpush1.bf16.msra.mxu0 %v1264
    %2400 = vmatprep.subr.bf16.mxu0 %v1273
    %2401 = vmatpush1.bf16.msra.mxu0 %v1272
    %2402 = vmatprep.mubr.bf16.mxu0 %v2287
    %2403 = vmatmul.mubr.bf16.gmra.mrb[0].mxu0 %v2286
    %v2404 = vpop.f32.mrb[0].mxu0
    %v2405 = vadd.f32 0.0, %v2404
    %v2406 = vpop.f32.mrb[0].mxu0
    %v2407 = vadd.f32 0.0, %v2406
    %v2408 = vpop.f32.mrb[0].mxu0
    %v2409 = vpop.f32.mrb[0].mxu0
    %2410 = vdwg.mxu0
    %2411 = vmatprep.subr.bf16.mxu0 %v1155
    %2412 = vmatpush1.bf16.msra.mxu0 %v1154
    %2413 = vmatprep.subr.bf16.mxu0 %v1163
    %2414 = vmatpush1.bf16.msra.mxu0 %v1162
    %2415 = vmatprep.subr.bf16.mxu0 %v1171
    %2416 = vmatpush1.bf16.msra.mxu0 %v1170
    %2417 = vmatprep.subr.bf16.mxu0 %v1179
    %2418 = vmatpush1.bf16.msra.mxu0 %v1178
    %2419 = vmatprep.subr.bf16.mxu0 %v1187
    %2420 = vmatpush1.bf16.msra.mxu0 %v1186
    %2421 = vmatprep.subr.bf16.mxu0 %v1195
    %2422 = vmatpush1.bf16.msra.mxu0 %v1194
    %2423 = vmatprep.subr.bf16.mxu0 %v1203
    %2424 = vmatpush1.bf16.msra.mxu0 %v1202
    %2425 = vmatprep.subr.bf16.mxu0 %v1211
    %2426 = vmatpush1.bf16.msra.mxu0 %v1210
    %2427 = vmatprep.subr.bf16.mxu0 %v1219
    %2428 = vmatpush1.bf16.msra.mxu0 %v1218
    %2429 = vmatprep.subr.bf16.mxu0 %v1227
    %2430 = vmatpush1.bf16.msra.mxu0 %v1226
    %2431 = vmatprep.subr.bf16.mxu0 %v1235
    %2432 = vmatpush1.bf16.msra.mxu0 %v1234
    %2433 = vmatprep.subr.bf16.mxu0 %v1243
    %2434 = vmatpush1.bf16.msra.mxu0 %v1242
    %2435 = vmatprep.subr.bf16.mxu0 %v1251
    %2436 = vmatpush1.bf16.msra.mxu0 %v1250
    %2437 = vmatprep.subr.bf16.mxu0 %v1259
    %2438 = vmatpush1.bf16.msra.mxu0 %v1258
    %2439 = vmatprep.subr.bf16.mxu0 %v1267
    %2440 = vmatpush1.bf16.msra.mxu0 %v1266
    %2441 = vmatprep.subr.bf16.mxu0 %v1275
    %2442 = vmatpush1.bf16.msra.mxu0 %v1274
    %2443 = vmatprep.mubr.bf16.mxu0 %v2287
    %2444 = vmatmul.mubr.bf16.gmra.mrb[0].mxu0 %v2286
    %v2445 = vpop.f32.mrb[0].mxu0
    %v2446 = vadd.f32 0.0, %v2445
    %v2447 = vpop.f32.mrb[0].mxu0
    %v2448 = vadd.f32 0.0, %v2447
    %v2449 = vpop.f32.mrb[0].mxu0
    %v2450 = vpop.f32.mrb[0].mxu0
    %2451 = vdwg.mxu0
    %v2452 = vadd.f32 %v2278, %v2323
    %v2453 = vadd.f32 %v2279, %v2325
    %v2454 = vadd.f32 %v2280, %v2364
    %v2455 = vadd.f32 %v2281, %v2366
    %v2456 = vadd.f32 %v2282, %v2405
    %v2457 = vadd.f32 %v2283, %v2407
    %v2458 = vadd.f32 %v2284, %v2446
    %v2459 = vadd.f32 %v2285, %v2448
    %v2460 = vmul.f32 %v2452, 0.5
    %v2461 = vmul.f32 %v2453, 0.5
    %v2462 = vtanh.pop %v2460
    %v2463 = vtanh.pop %v2461
    %v2464 = vmul.f32 %v2462, 0.5
    %v2465 = vmul.f32 %v2463, 0.5
    %v2466 = vadd.f32 %v2464, 0.5
    %v2467 = vadd.f32 %v2465, 0.5
    %v2468 = vmul.f32 %v2454, 0.5
    %v2469 = vmul.f32 %v2455, 0.5
    %v2470 = vtanh.pop %v2468
    %v2471 = vtanh.pop %v2469
    %v2472 = vmul.f32 %v2470, 0.5
    %v2473 = vmul.f32 %v2471, 0.5
    %v2474 = vadd.f32 %v2472, 0.5
    %v2475 = vadd.f32 %v2473, 0.5
    %v2476 = vtanh.pop %v2456
    %v2477 = vtanh.pop %v2457
    %v2478 = vmul.f32 %v2458, 0.5
    %v2479 = vmul.f32 %v2459, 0.5
    %v2480 = vtanh.pop %v2478
    %v2481 = vtanh.pop %v2479
    %v2482 = vmul.f32 %v2480, 0.5
    %v2483 = vmul.f32 %v2481, 0.5
    %v2484 = vadd.f32 %v2482, 0.5
    %v2485 = vadd.f32 %v2483, 0.5
    %v2486 = vmul.f32 %v2474, %v2269
    %v2487 = vmul.f32 %v2475, %v2270
    %v2488 = vmul.f32 %v2466, %v2476
    %v2489 = vmul.f32 %v2467, %v2477
    %v2490 = vadd.f32 %v2486, %v2488
    %v2491 = vadd.f32 %v2487, %v2489
    %v2492 = vtanh.pop %v2490
    %v2493 = vtanh.pop %v2491
    %v2494 = vmul.f32 %v2484, %v2492
    %v2495 = vmul.f32 %v2485, %v2493
    %s2496 = smul.u32 5, 8
    %s2497 = smul.addr %s2496, 8
    %s2498 = scalar_lea.vmem [#allocation2], %s2497
    %v2499 = vld [vmem:[%s2498] sm:$0xff]
    %v2500 = vld [vmem:[%s2498 + $0x8] sm:$0xff]
    %v2501 = vld [vmem:[%s2498 + $0x10] sm:$0xff]
    %v2502 = vld [vmem:[%s2498 + $0x18] sm:$0xff]
    %v2503 = vld [vmem:[%s2498 + $0x20] sm:$0xff]
    %v2504 = vld [vmem:[%s2498 + $0x28] sm:$0xff]
    %v2505 = vld [vmem:[%s2498 + $0x30] sm:$0xff]
    %v2506 = vld [vmem:[%s2498 + $0x38] sm:$0xff]
    %v2507 = vpack.c.bf16 %v2494, %v2494
    %v2508 = vpack.c.bf16 %v2495, %v2495
    %2509 = vmatprep.subr.bf16.mxu0 %v1149
    %2510 = vmatpush1.bf16.msra.mxu0 %v1148
    %2511 = vmatprep.subr.bf16.mxu0 %v1157
    %2512 = vmatpush1.bf16.msra.mxu0 %v1156
    %2513 = vmatprep.subr.bf16.mxu0 %v1165
    %2514 = vmatpush1.bf16.msra.mxu0 %v1164
    %2515 = vmatprep.subr.bf16.mxu0 %v1173
    %2516 = vmatpush1.bf16.msra.mxu0 %v1172
    %2517 = vmatprep.subr.bf16.mxu0 %v1181
    %2518 = vmatpush1.bf16.msra.mxu0 %v1180
    %2519 = vmatprep.subr.bf16.mxu0 %v1189
    %2520 = vmatpush1.bf16.msra.mxu0 %v1188
    %2521 = vmatprep.subr.bf16.mxu0 %v1197
    %2522 = vmatpush1.bf16.msra.mxu0 %v1196
    %2523 = vmatprep.subr.bf16.mxu0 %v1205
    %2524 = vmatpush1.bf16.msra.mxu0 %v1204
    %2525 = vmatprep.subr.bf16.mxu0 %v1213
    %2526 = vmatpush1.bf16.msra.mxu0 %v1212
    %2527 = vmatprep.subr.bf16.mxu0 %v1221
    %2528 = vmatpush1.bf16.msra.mxu0 %v1220
    %2529 = vmatprep.subr.bf16.mxu0 %v1229
    %2530 = vmatpush1.bf16.msra.mxu0 %v1228
    %2531 = vmatprep.subr.bf16.mxu0 %v1237
    %2532 = vmatpush1.bf16.msra.mxu0 %v1236
    %2533 = vmatprep.subr.bf16.mxu0 %v1245
    %2534 = vmatpush1.bf16.msra.mxu0 %v1244
    %2535 = vmatprep.subr.bf16.mxu0 %v1253
    %2536 = vmatpush1.bf16.msra.mxu0 %v1252
    %2537 = vmatprep.subr.bf16.mxu0 %v1261
    %2538 = vmatpush1.bf16.msra.mxu0 %v1260
    %2539 = vmatprep.subr.bf16.mxu0 %v1269
    %2540 = vmatpush1.bf16.msra.mxu0 %v1268
    %2541 = vmatprep.mubr.bf16.mxu0 %v2508
    %2542 = vmatmul.mubr.bf16.gmra.mrb[0].mxu0 %v2507
    %v2543 = vpop.f32.mrb[0].mxu0
    %v2544 = vadd.f32 0.0, %v2543
    %v2545 = vpop.f32.mrb[0].mxu0
    %v2546 = vadd.f32 0.0, %v2545
    %v2547 = vpop.f32.mrb[0].mxu0
    %v2548 = vpop.f32.mrb[0].mxu0
    %2549 = vdwg.mxu0
    %2550 = vmatprep.subr.bf16.mxu0 %v1151
    %2551 = vmatpush1.bf16.msra.mxu0 %v1150
    %2552 = vmatprep.subr.bf16.mxu0 %v1159
    %2553 = vmatpush1.bf16.msra.mxu0 %v1158
    %2554 = vmatprep.subr.bf16.mxu0 %v1167
    %2555 = vmatpush1.bf16.msra.mxu0 %v1166
    %2556 = vmatprep.subr.bf16.mxu0 %v1175
    %2557 = vmatpush1.bf16.msra.mxu0 %v1174
    %2558 = vmatprep.subr.bf16.mxu0 %v1183
    %2559 = vmatpush1.bf16.msra.mxu0 %v1182
    %2560 = vmatprep.subr.bf16.mxu0 %v1191
    %2561 = vmatpush1.bf16.msra.mxu0 %v1190
    %2562 = vmatprep.subr.bf16.mxu0 %v1199
    %2563 = vmatpush1.bf16.msra.mxu0 %v1198
    %2564 = vmatprep.subr.bf16.mxu0 %v1207
    %2565 = vmatpush1.bf16.msra.mxu0 %v1206
    %2566 = vmatprep.subr.bf16.mxu0 %v1215
    %2567 = vmatpush1.bf16.msra.mxu0 %v1214
    %2568 = vmatprep.subr.bf16.mxu0 %v1223
    %2569 = vmatpush1.bf16.msra.mxu0 %v1222
    %2570 = vmatprep.subr.bf16.mxu0 %v1231
    %2571 = vmatpush1.bf16.msra.mxu0 %v1230
    %2572 = vmatprep.subr.bf16.mxu0 %v1239
    %2573 = vmatpush1.bf16.msra.mxu0 %v1238
    %2574 = vmatprep.subr.bf16.mxu0 %v1247
    %2575 = vmatpush1.bf16.msra.mxu0 %v1246
    %2576 = vmatprep.subr.bf16.mxu0 %v1255
    %2577 = vmatpush1.bf16.msra.mxu0 %v1254
    %2578 = vmatprep.subr.bf16.mxu0 %v1263
    %2579 = vmatpush1.bf16.msra.mxu0 %v1262
    %2580 = vmatprep.subr.bf16.mxu0 %v1271
    %2581 = vmatpush1.bf16.msra.mxu0 %v1270
    %2582 = vmatprep.mubr.bf16.mxu0 %v2508
    %2583 = vmatmul.mubr.bf16.gmra.mrb[0].mxu0 %v2507
    %v2584 = vpop.f32.mrb[0].mxu0
    %v2585 = vadd.f32 0.0, %v2584
    %v2586 = vpop.f32.mrb[0].mxu0
    %v2587 = vadd.f32 0.0, %v2586
    %v2588 = vpop.f32.mrb[0].mxu0
    %v2589 = vpop.f32.mrb[0].mxu0
    %2590 = vdwg.mxu0
    %2591 = vmatprep.subr.bf16.mxu0 %v1153
    %2592 = vmatpush1.bf16.msra.mxu0 %v1152
    %2593 = vmatprep.subr.bf16.mxu0 %v1161
    %2594 = vmatpush1.bf16.msra.mxu0 %v1160
    %2595 = vmatprep.subr.bf16.mxu0 %v1169
    %2596 = vmatpush1.bf16.msra.mxu0 %v1168
    %2597 = vmatprep.subr.bf16.mxu0 %v1177
    %2598 = vmatpush1.bf16.msra.mxu0 %v1176
    %2599 = vmatprep.subr.bf16.mxu0 %v1185
    %2600 = vmatpush1.bf16.msra.mxu0 %v1184
    %2601 = vmatprep.subr.bf16.mxu0 %v1193
    %2602 = vmatpush1.bf16.msra.mxu0 %v1192
    %2603 = vmatprep.subr.bf16.mxu0 %v1201
    %2604 = vmatpush1.bf16.msra.mxu0 %v1200
    %2605 = vmatprep.subr.bf16.mxu0 %v1209
    %2606 = vmatpush1.bf16.msra.mxu0 %v1208
    %2607 = vmatprep.subr.bf16.mxu0 %v1217
    %2608 = vmatpush1.bf16.msra.mxu0 %v1216
    %2609 = vmatprep.subr.bf16.mxu0 %v1225
    %2610 = vmatpush1.bf16.msra.mxu0 %v1224
    %2611 = vmatprep.subr.bf16.mxu0 %v1233
    %2612 = vmatpush1.bf16.msra.mxu0 %v1232
    %2613 = vmatprep.subr.bf16.mxu0 %v1241
    %2614 = vmatpush1.bf16.msra.mxu0 %v1240
    %2615 = vmatprep.subr.bf16.mxu0 %v1249
    %2616 = vmatpush1.bf16.msra.mxu0 %v1248
    %2617 = vmatprep.subr.bf16.mxu0 %v1257
    %2618 = vmatpush1.bf16.msra.mxu0 %v1256
    %2619 = vmatprep.subr.bf16.mxu0 %v1265
    %2620 = vmatpush1.bf16.msra.mxu0 %v1264
    %2621 = vmatprep.subr.bf16.mxu0 %v1273
    %2622 = vmatpush1.bf16.msra.mxu0 %v1272
    %2623 = vmatprep.mubr.bf16.mxu0 %v2508
    %2624 = vmatmul.mubr.bf16.gmra.mrb[0].mxu0 %v2507
    %v2625 = vpop.f32.mrb[0].mxu0
    %v2626 = vadd.f32 0.0, %v2625
    %v2627 = vpop.f32.mrb[0].mxu0
    %v2628 = vadd.f32 0.0, %v2627
    %v2629 = vpop.f32.mrb[0].mxu0
    %v2630 = vpop.f32.mrb[0].mxu0
    %2631 = vdwg.mxu0
    %2632 = vmatprep.subr.bf16.mxu0 %v1155
    %2633 = vmatpush1.bf16.msra.mxu0 %v1154
    %2634 = vmatprep.subr.bf16.mxu0 %v1163
    %2635 = vmatpush1.bf16.msra.mxu0 %v1162
    %2636 = vmatprep.subr.bf16.mxu0 %v1171
    %2637 = vmatpush1.bf16.msra.mxu0 %v1170
    %2638 = vmatprep.subr.bf16.mxu0 %v1179
    %2639 = vmatpush1.bf16.msra.mxu0 %v1178
    %2640 = vmatprep.subr.bf16.mxu0 %v1187
    %2641 = vmatpush1.bf16.msra.mxu0 %v1186
    %2642 = vmatprep.subr.bf16.mxu0 %v1195
    %2643 = vmatpush1.bf16.msra.mxu0 %v1194
    %2644 = vmatprep.subr.bf16.mxu0 %v1203
    %2645 = vmatpush1.bf16.msra.mxu0 %v1202
    %2646 = vmatprep.subr.bf16.mxu0 %v1211
    %2647 = vmatpush1.bf16.msra.mxu0 %v1210
    %2648 = vmatprep.subr.bf16.mxu0 %v1219
    %2649 = vmatpush1.bf16.msra.mxu0 %v1218
    %2650 = vmatprep.subr.bf16.mxu0 %v1227
    %2651 = vmatpush1.bf16.msra.mxu0 %v1226
    %2652 = vmatprep.subr.bf16.mxu0 %v1235
    %2653 = vmatpush1.bf16.msra.mxu0 %v1234
    %2654 = vmatprep.subr.bf16.mxu0 %v1243
    %2655 = vmatpush1.bf16.msra.mxu0 %v1242
    %2656 = vmatprep.subr.bf16.mxu0 %v1251
    %2657 = vmatpush1.bf16.msra.mxu0 %v1250
    %2658 = vmatprep.subr.bf16.mxu0 %v1259
    %2659 = vmatpush1.bf16.msra.mxu0 %v1258
    %2660 = vmatprep.subr.bf16.mxu0 %v1267
    %2661 = vmatpush1.bf16.msra.mxu0 %v1266
    %2662 = vmatprep.subr.bf16.mxu0 %v1275
    %2663 = vmatpush1.bf16.msra.mxu0 %v1274
    %2664 = vmatprep.mubr.bf16.mxu0 %v2508
    %2665 = vmatmul.mubr.bf16.gmra.mrb[0].mxu0 %v2507
    %v2666 = vpop.f32.mrb[0].mxu0
    %v2667 = vadd.f32 0.0, %v2666
    %v2668 = vpop.f32.mrb[0].mxu0
    %v2669 = vadd.f32 0.0, %v2668
    %v2670 = vpop.f32.mrb[0].mxu0
    %v2671 = vpop.f32.mrb[0].mxu0
    %2672 = vdwg.mxu0
    %v2673 = vadd.f32 %v2499, %v2544
    %v2674 = vadd.f32 %v2500, %v2546
    %v2675 = vadd.f32 %v2501, %v2585
    %v2676 = vadd.f32 %v2502, %v2587
    %v2677 = vadd.f32 %v2503, %v2626
    %v2678 = vadd.f32 %v2504, %v2628
    %v2679 = vadd.f32 %v2505, %v2667
    %v2680 = vadd.f32 %v2506, %v2669
    %v2681 = vmul.f32 %v2673, 0.5
    %v2682 = vmul.f32 %v2674, 0.5
    %v2683 = vtanh.pop %v2681
    %v2684 = vtanh.pop %v2682
    %v2685 = vmul.f32 %v2683, 0.5
    %v2686 = vmul.f32 %v2684, 0.5
    %v2687 = vadd.f32 %v2685, 0.5
    %v2688 = vadd.f32 %v2686, 0.5
    %v2689 = vmul.f32 %v2675, 0.5
    %v2690 = vmul.f32 %v2676, 0.5
    %v2691 = vtanh.pop %v2689
    %v2692 = vtanh.pop %v2690
    %v2693 = vmul.f32 %v2691, 0.5
    %v2694 = vmul.f32 %v2692, 0.5
    %v2695 = vadd.f32 %v2693, 0.5
    %v2696 = vadd.f32 %v2694, 0.5
    %v2697 = vtanh.pop %v2677
    %v2698 = vtanh.pop %v2678
    %v2699 = vmul.f32 %v2679, 0.5
    %v2700 = vmul.f32 %v2680, 0.5
    %v2701 = vtanh.pop %v2699
    %v2702 = vtanh.pop %v2700
    %v2703 = vmul.f32 %v2701, 0.5
    %v2704 = vmul.f32 %v2702, 0.5
    %v2705 = vadd.f32 %v2703, 0.5
    %v2706 = vadd.f32 %v2704, 0.5
    %v2707 = vmul.f32 %v2695, %v2490
    %v2708 = vmul.f32 %v2696, %v2491
    %v2709 = vmul.f32 %v2687, %v2697
    %v2710 = vmul.f32 %v2688, %v2698
    %v2711 = vadd.f32 %v2707, %v2709
    %v2712 = vadd.f32 %v2708, %v2710
    %v2713 = vtanh.pop %v2711
    %v2714 = vtanh.pop %v2712
    %v2715 = vmul.f32 %v2705, %v2713
    %v2716 = vmul.f32 %v2706, %v2714
    %s2717 = smul.u32 6, 8
    %s2718 = smul.addr %s2717, 8
    %s2719 = scalar_lea.vmem [#allocation2], %s2718
    %v2720 = vld [vmem:[%s2719] sm:$0xff]
    %v2721 = vld [vmem:[%s2719 + $0x8] sm:$0xff]
    %v2722 = vld [vmem:[%s2719 + $0x10] sm:$0xff]
    %v2723 = vld [vmem:[%s2719 + $0x18] sm:$0xff]
    %v2724 = vld [vmem:[%s2719 + $0x20] sm:$0xff]
    %v2725 = vld [vmem:[%s2719 + $0x28] sm:$0xff]
    %v2726 = vld [vmem:[%s2719 + $0x30] sm:$0xff]
    %v2727 = vld [vmem:[%s2719 + $0x38] sm:$0xff]
    %v2728 = vpack.c.bf16 %v2715, %v2715
    %v2729 = vpack.c.bf16 %v2716, %v2716
    %2730 = vmatprep.subr.bf16.mxu0 %v1149
    %2731 = vmatpush1.bf16.msra.mxu0 %v1148
    %2732 = vmatprep.subr.bf16.mxu0 %v1157
    %2733 = vmatpush1.bf16.msra.mxu0 %v1156
    %2734 = vmatprep.subr.bf16.mxu0 %v1165
    %2735 = vmatpush1.bf16.msra.mxu0 %v1164
    %2736 = vmatprep.subr.bf16.mxu0 %v1173
    %2737 = vmatpush1.bf16.msra.mxu0 %v1172
    %2738 = vmatprep.subr.bf16.mxu0 %v1181
    %2739 = vmatpush1.bf16.msra.mxu0 %v1180
    %2740 = vmatprep.subr.bf16.mxu0 %v1189
    %2741 = vmatpush1.bf16.msra.mxu0 %v1188
    %2742 = vmatprep.subr.bf16.mxu0 %v1197
    %2743 = vmatpush1.bf16.msra.mxu0 %v1196
    %2744 = vmatprep.subr.bf16.mxu0 %v1205
    %2745 = vmatpush1.bf16.msra.mxu0 %v1204
    %2746 = vmatprep.subr.bf16.mxu0 %v1213
    %2747 = vmatpush1.bf16.msra.mxu0 %v1212
    %2748 = vmatprep.subr.bf16.mxu0 %v1221
    %2749 = vmatpush1.bf16.msra.mxu0 %v1220
    %2750 = vmatprep.subr.bf16.mxu0 %v1229
    %2751 = vmatpush1.bf16.msra.mxu0 %v1228
    %2752 = vmatprep.subr.bf16.mxu0 %v1237
    %2753 = vmatpush1.bf16.msra.mxu0 %v1236
    %2754 = vmatprep.subr.bf16.mxu0 %v1245
    %2755 = vmatpush1.bf16.msra.mxu0 %v1244
    %2756 = vmatprep.subr.bf16.mxu0 %v1253
    %2757 = vmatpush1.bf16.msra.mxu0 %v1252
    %2758 = vmatprep.subr.bf16.mxu0 %v1261
    %2759 = vmatpush1.bf16.msra.mxu0 %v1260
    %2760 = vmatprep.subr.bf16.mxu0 %v1269
    %2761 = vmatpush1.bf16.msra.mxu0 %v1268
    %2762 = vmatprep.mubr.bf16.mxu0 %v2729
    %2763 = vmatmul.mubr.bf16.gmra.mrb[0].mxu0 %v2728
    %v2764 = vpop.f32.mrb[0].mxu0
    %v2765 = vadd.f32 0.0, %v2764
    %v2766 = vpop.f32.mrb[0].mxu0
    %v2767 = vadd.f32 0.0, %v2766
    %v2768 = vpop.f32.mrb[0].mxu0
    %v2769 = vpop.f32.mrb[0].mxu0
    %2770 = vdwg.mxu0
    %2771 = vmatprep.subr.bf16.mxu0 %v1151
    %2772 = vmatpush1.bf16.msra.mxu0 %v1150
    %2773 = vmatprep.subr.bf16.mxu0 %v1159
    %2774 = vmatpush1.bf16.msra.mxu0 %v1158
    %2775 = vmatprep.subr.bf16.mxu0 %v1167
    %2776 = vmatpush1.bf16.msra.mxu0 %v1166
    %2777 = vmatprep.subr.bf16.mxu0 %v1175
    %2778 = vmatpush1.bf16.msra.mxu0 %v1174
    %2779 = vmatprep.subr.bf16.mxu0 %v1183
    %2780 = vmatpush1.bf16.msra.mxu0 %v1182
    %2781 = vmatprep.subr.bf16.mxu0 %v1191
    %2782 = vmatpush1.bf16.msra.mxu0 %v1190
    %2783 = vmatprep.subr.bf16.mxu0 %v1199
    %2784 = vmatpush1.bf16.msra.mxu0 %v1198
    %2785 = vmatprep.subr.bf16.mxu0 %v1207
    %2786 = vmatpush1.bf16.msra.mxu0 %v1206
    %2787 = vmatprep.subr.bf16.mxu0 %v1215
    %2788 = vmatpush1.bf16.msra.mxu0 %v1214
    %2789 = vmatprep.subr.bf16.mxu0 %v1223
    %2790 = vmatpush1.bf16.msra.mxu0 %v1222
    %2791 = vmatprep.subr.bf16.mxu0 %v1231
    %2792 = vmatpush1.bf16.msra.mxu0 %v1230
    %2793 = vmatprep.subr.bf16.mxu0 %v1239
    %2794 = vmatpush1.bf16.msra.mxu0 %v1238
    %2795 = vmatprep.subr.bf16.mxu0 %v1247
    %2796 = vmatpush1.bf16.msra.mxu0 %v1246
    %2797 = vmatprep.subr.bf16.mxu0 %v1255
    %2798 = vmatpush1.bf16.msra.mxu0 %v1254
    %2799 = vmatprep.subr.bf16.mxu0 %v1263
    %2800 = vmatpush1.bf16.msra.mxu0 %v1262
    %2801 = vmatprep.subr.bf16.mxu0 %v1271
    %2802 = vmatpush1.bf16.msra.mxu0 %v1270
    %2803 = vmatprep.mubr.bf16.mxu0 %v2729
    %2804 = vmatmul.mubr.bf16.gmra.mrb[0].mxu0 %v2728
    %v2805 = vpop.f32.mrb[0].mxu0
    %v2806 = vadd.f32 0.0, %v2805
    %v2807 = vpop.f32.mrb[0].mxu0
    %v2808 = vadd.f32 0.0, %v2807
    %v2809 = vpop.f32.mrb[0].mxu0
    %v2810 = vpop.f32.mrb[0].mxu0
    %2811 = vdwg.mxu0
    %2812 = vmatprep.subr.bf16.mxu0 %v1153
    %2813 = vmatpush1.bf16.msra.mxu0 %v1152
    %2814 = vmatprep.subr.bf16.mxu0 %v1161
    %2815 = vmatpush1.bf16.msra.mxu0 %v1160
    %2816 = vmatprep.subr.bf16.mxu0 %v1169
    %2817 = vmatpush1.bf16.msra.mxu0 %v1168
    %2818 = vmatprep.subr.bf16.mxu0 %v1177
    %2819 = vmatpush1.bf16.msra.mxu0 %v1176
    %2820 = vmatprep.subr.bf16.mxu0 %v1185
    %2821 = vmatpush1.bf16.msra.mxu0 %v1184
    %2822 = vmatprep.subr.bf16.mxu0 %v1193
    %2823 = vmatpush1.bf16.msra.mxu0 %v1192
    %2824 = vmatprep.subr.bf16.mxu0 %v1201
    %2825 = vmatpush1.bf16.msra.mxu0 %v1200
    %2826 = vmatprep.subr.bf16.mxu0 %v1209
    %2827 = vmatpush1.bf16.msra.mxu0 %v1208
    %2828 = vmatprep.subr.bf16.mxu0 %v1217
    %2829 = vmatpush1.bf16.msra.mxu0 %v1216
    %2830 = vmatprep.subr.bf16.mxu0 %v1225
    %2831 = vmatpush1.bf16.msra.mxu0 %v1224
    %2832 = vmatprep.subr.bf16.mxu0 %v1233
    %2833 = vmatpush1.bf16.msra.mxu0 %v1232
    %2834 = vmatprep.subr.bf16.mxu0 %v1241
    %2835 = vmatpush1.bf16.msra.mxu0 %v1240
    %2836 = vmatprep.subr.bf16.mxu0 %v1249
    %2837 = vmatpush1.bf16.msra.mxu0 %v1248
    %2838 = vmatprep.subr.bf16.mxu0 %v1257
    %2839 = vmatpush1.bf16.msra.mxu0 %v1256
    %2840 = vmatprep.subr.bf16.mxu0 %v1265
    %2841 = vmatpush1.bf16.msra.mxu0 %v1264
    %2842 = vmatprep.subr.bf16.mxu0 %v1273
    %2843 = vmatpush1.bf16.msra.mxu0 %v1272
    %2844 = vmatprep.mubr.bf16.mxu0 %v2729
    %2845 = vmatmul.mubr.bf16.gmra.mrb[0].mxu0 %v2728
    %v2846 = vpop.f32.mrb[0].mxu0
    %v2847 = vadd.f32 0.0, %v2846
    %v2848 = vpop.f32.mrb[0].mxu0
    %v2849 = vadd.f32 0.0, %v2848
    %v2850 = vpop.f32.mrb[0].mxu0
    %v2851 = vpop.f32.mrb[0].mxu0
    %2852 = vdwg.mxu0
    %2853 = vmatprep.subr.bf16.mxu0 %v1155
    %2854 = vmatpush1.bf16.msra.mxu0 %v1154
    %2855 = vmatprep.subr.bf16.mxu0 %v1163
    %2856 = vmatpush1.bf16.msra.mxu0 %v1162
    %2857 = vmatprep.subr.bf16.mxu0 %v1171
    %2858 = vmatpush1.bf16.msra.mxu0 %v1170
    %2859 = vmatprep.subr.bf16.mxu0 %v1179
    %2860 = vmatpush1.bf16.msra.mxu0 %v1178
    %2861 = vmatprep.subr.bf16.mxu0 %v1187
    %2862 = vmatpush1.bf16.msra.mxu0 %v1186
    %2863 = vmatprep.subr.bf16.mxu0 %v1195
    %2864 = vmatpush1.bf16.msra.mxu0 %v1194
    %2865 = vmatprep.subr.bf16.mxu0 %v1203
    %2866 = vmatpush1.bf16.msra.mxu0 %v1202
    %2867 = vmatprep.subr.bf16.mxu0 %v1211
    %2868 = vmatpush1.bf16.msra.mxu0 %v1210
    %2869 = vmatprep.subr.bf16.mxu0 %v1219
    %2870 = vmatpush1.bf16.msra.mxu0 %v1218
    %2871 = vmatprep.subr.bf16.mxu0 %v1227
    %2872 = vmatpush1.bf16.msra.mxu0 %v1226
    %2873 = vmatprep.subr.bf16.mxu0 %v1235
    %2874 = vmatpush1.bf16.msra.mxu0 %v1234
    %2875 = vmatprep.subr.bf16.mxu0 %v1243
    %2876 = vmatpush1.bf16.msra.mxu0 %v1242
    %2877 = vmatprep.subr.bf16.mxu0 %v1251
    %2878 = vmatpush1.bf16.msra.mxu0 %v1250
    %2879 = vmatprep.subr.bf16.mxu0 %v1259
    %2880 = vmatpush1.bf16.msra.mxu0 %v1258
    %2881 = vmatprep.subr.bf16.mxu0 %v1267
    %2882 = vmatpush1.bf16.msra.mxu0 %v1266
    %2883 = vmatprep.subr.bf16.mxu0 %v1275
    %2884 = vmatpush1.bf16.msra.mxu0 %v1274
    %2885 = vmatprep.mubr.bf16.mxu0 %v2729
    %2886 = vmatmul.mubr.bf16.gmra.mrb[0].mxu0 %v2728
    %v2887 = vpop.f32.mrb[0].mxu0
    %v2888 = vadd.f32 0.0, %v2887
    %v2889 = vpop.f32.mrb[0].mxu0
    %v2890 = vadd.f32 0.0, %v2889
    %v2891 = vpop.f32.mrb[0].mxu0
    %v2892 = vpop.f32.mrb[0].mxu0
    %2893 = vdwg.mxu0
    %v2894 = vadd.f32 %v2720, %v2765
    %v2895 = vadd.f32 %v2721, %v2767
    %v2896 = vadd.f32 %v2722, %v2806
    %v2897 = vadd.f32 %v2723, %v2808
    %v2898 = vadd.f32 %v2724, %v2847
    %v2899 = vadd.f32 %v2725, %v2849
    %v2900 = vadd.f32 %v2726, %v2888
    %v2901 = vadd.f32 %v2727, %v2890
    %v2902 = vmul.f32 %v2894, 0.5
    %v2903 = vmul.f32 %v2895, 0.5
    %v2904 = vtanh.pop %v2902
    %v2905 = vtanh.pop %v2903
    %v2906 = vmul.f32 %v2904, 0.5
    %v2907 = vmul.f32 %v2905, 0.5
    %v2908 = vadd.f32 %v2906, 0.5
    %v2909 = vadd.f32 %v2907, 0.5
    %v2910 = vmul.f32 %v2896, 0.5
    %v2911 = vmul.f32 %v2897, 0.5
    %v2912 = vtanh.pop %v2910
    %v2913 = vtanh.pop %v2911
    %v2914 = vmul.f32 %v2912, 0.5
    %v2915 = vmul.f32 %v2913, 0.5
    %v2916 = vadd.f32 %v2914, 0.5
    %v2917 = vadd.f32 %v2915, 0.5
    %v2918 = vtanh.pop %v2898
    %v2919 = vtanh.pop %v2899
    %v2920 = vmul.f32 %v2900, 0.5
    %v2921 = vmul.f32 %v2901, 0.5
    %v2922 = vtanh.pop %v2920
    %v2923 = vtanh.pop %v2921
    %v2924 = vmul.f32 %v2922, 0.5
    %v2925 = vmul.f32 %v2923, 0.5
    %v2926 = vadd.f32 %v2924, 0.5
    %v2927 = vadd.f32 %v2925, 0.5
    %v2928 = vmul.f32 %v2916, %v2711
    %v2929 = vmul.f32 %v2917, %v2712
    %v2930 = vmul.f32 %v2908, %v2918
    %v2931 = vmul.f32 %v2909, %v2919
    %v2932 = vadd.f32 %v2928, %v2930
    %v2933 = vadd.f32 %v2929, %v2931
    %v2934 = vtanh.pop %v2932
    %v2935 = vtanh.pop %v2933
    %v2936 = vmul.f32 %v2926, %v2934
    %v2937 = vmul.f32 %v2927, %v2935
    %s2938 = smul.u32 7, 8
    %s2939 = smul.addr %s2938, 8
    %s2940 = scalar_lea.vmem [#allocation2], %s2939
    %v2941 = vld [vmem:[%s2940] sm:$0xff]
    %v2942 = vld [vmem:[%s2940 + $0x8] sm:$0xff]
    %v2943 = vld [vmem:[%s2940 + $0x10] sm:$0xff]
    %v2944 = vld [vmem:[%s2940 + $0x18] sm:$0xff]
    %v2945 = vld [vmem:[%s2940 + $0x20] sm:$0xff]
    %v2946 = vld [vmem:[%s2940 + $0x28] sm:$0xff]
    %v2947 = vld [vmem:[%s2940 + $0x30] sm:$0xff]
    %v2948 = vld [vmem:[%s2940 + $0x38] sm:$0xff]
    %v2949 = vpack.c.bf16 %v2936, %v2936
    %v2950 = vpack.c.bf16 %v2937, %v2937
    %2951 = vmatprep.subr.bf16.mxu0 %v1149
    %2952 = vmatpush1.bf16.msra.mxu0 %v1148
    %2953 = vmatprep.subr.bf16.mxu0 %v1157
    %2954 = vmatpush1.bf16.msra.mxu0 %v1156
    %2955 = vmatprep.subr.bf16.mxu0 %v1165
    %2956 = vmatpush1.bf16.msra.mxu0 %v1164
    %2957 = vmatprep.subr.bf16.mxu0 %v1173
    %2958 = vmatpush1.bf16.msra.mxu0 %v1172
    %2959 = vmatprep.subr.bf16.mxu0 %v1181
    %2960 = vmatpush1.bf16.msra.mxu0 %v1180
    %2961 = vmatprep.subr.bf16.mxu0 %v1189
    %2962 = vmatpush1.bf16.msra.mxu0 %v1188
    %2963 = vmatprep.subr.bf16.mxu0 %v1197
    %2964 = vmatpush1.bf16.msra.mxu0 %v1196
    %2965 = vmatprep.subr.bf16.mxu0 %v1205
    %2966 = vmatpush1.bf16.msra.mxu0 %v1204
    %2967 = vmatprep.subr.bf16.mxu0 %v1213
    %2968 = vmatpush1.bf16.msra.mxu0 %v1212
    %2969 = vmatprep.subr.bf16.mxu0 %v1221
    %2970 = vmatpush1.bf16.msra.mxu0 %v1220
    %2971 = vmatprep.subr.bf16.mxu0 %v1229
    %2972 = vmatpush1.bf16.msra.mxu0 %v1228
    %2973 = vmatprep.subr.bf16.mxu0 %v1237
    %2974 = vmatpush1.bf16.msra.mxu0 %v1236
    %2975 = vmatprep.subr.bf16.mxu0 %v1245
    %2976 = vmatpush1.bf16.msra.mxu0 %v1244
    %2977 = vmatprep.subr.bf16.mxu0 %v1253
    %2978 = vmatpush1.bf16.msra.mxu0 %v1252
    %2979 = vmatprep.subr.bf16.mxu0 %v1261
    %2980 = vmatpush1.bf16.msra.mxu0 %v1260
    %2981 = vmatprep.subr.bf16.mxu0 %v1269
    %2982 = vmatpush1.bf16.msra.mxu0 %v1268
    %2983 = vmatprep.mubr.bf16.mxu0 %v2950
    %2984 = vmatmul.mubr.bf16.gmra.mrb[0].mxu0 %v2949
    %v2985 = vpop.f32.mrb[0].mxu0
    %v2986 = vadd.f32 0.0, %v2985
    %v2987 = vpop.f32.mrb[0].mxu0
    %v2988 = vadd.f32 0.0, %v2987
    %v2989 = vpop.f32.mrb[0].mxu0
    %v2990 = vpop.f32.mrb[0].mxu0
    %2991 = vdwg.mxu0
    %2992 = vmatprep.subr.bf16.mxu0 %v1151
    %2993 = vmatpush1.bf16.msra.mxu0 %v1150
    %2994 = vmatprep.subr.bf16.mxu0 %v1159
    %2995 = vmatpush1.bf16.msra.mxu0 %v1158
    %2996 = vmatprep.subr.bf16.mxu0 %v1167
    %2997 = vmatpush1.bf16.msra.mxu0 %v1166
    %2998 = vmatprep.subr.bf16.mxu0 %v1175
    %2999 = vmatpush1.bf16.msra.mxu0 %v1174
    %3000 = vmatprep.subr.bf16.mxu0 %v1183
    %3001 = vmatpush1.bf16.msra.mxu0 %v1182
    %3002 = vmatprep.subr.bf16.mxu0 %v1191
    %3003 = vmatpush1.bf16.msra.mxu0 %v1190
    %3004 = vmatprep.subr.bf16.mxu0 %v1199
    %3005 = vmatpush1.bf16.msra.mxu0 %v1198
    %3006 = vmatprep.subr.bf16.mxu0 %v1207
    %3007 = vmatpush1.bf16.msra.mxu0 %v1206
    %3008 = vmatprep.subr.bf16.mxu0 %v1215
    %3009 = vmatpush1.bf16.msra.mxu0 %v1214
    %3010 = vmatprep.subr.bf16.mxu0 %v1223
    %3011 = vmatpush1.bf16.msra.mxu0 %v1222
    %3012 = vmatprep.subr.bf16.mxu0 %v1231
    %3013 = vmatpush1.bf16.msra.mxu0 %v1230
    %3014 = vmatprep.subr.bf16.mxu0 %v1239
    %3015 = vmatpush1.bf16.msra.mxu0 %v1238
    %3016 = vmatprep.subr.bf16.mxu0 %v1247
    %3017 = vmatpush1.bf16.msra.mxu0 %v1246
    %3018 = vmatprep.subr.bf16.mxu0 %v1255
    %3019 = vmatpush1.bf16.msra.mxu0 %v1254
    %3020 = vmatprep.subr.bf16.mxu0 %v1263
    %3021 = vmatpush1.bf16.msra.mxu0 %v1262
    %3022 = vmatprep.subr.bf16.mxu0 %v1271
    %3023 = vmatpush1.bf16.msra.mxu0 %v1270
    %3024 = vmatprep.mubr.bf16.mxu0 %v2950
    %3025 = vmatmul.mubr.bf16.gmra.mrb[0].mxu0 %v2949
    %v3026 = vpop.f32.mrb[0].mxu0
    %v3027 = vadd.f32 0.0, %v3026
    %v3028 = vpop.f32.mrb[0].mxu0
    %v3029 = vadd.f32 0.0, %v3028
    %v3030 = vpop.f32.mrb[0].mxu0
    %v3031 = vpop.f32.mrb[0].mxu0
    %3032 = vdwg.mxu0
    %3033 = vmatprep.subr.bf16.mxu0 %v1153
    %3034 = vmatpush1.bf16.msra.mxu0 %v1152
    %3035 = vmatprep.subr.bf16.mxu0 %v1161
    %3036 = vmatpush1.bf16.msra.mxu0 %v1160
    %3037 = vmatprep.subr.bf16.mxu0 %v1169
    %3038 = vmatpush1.bf16.msra.mxu0 %v1168
    %3039 = vmatprep.subr.bf16.mxu0 %v1177
    %3040 = vmatpush1.bf16.msra.mxu0 %v1176
    %3041 = vmatprep.subr.bf16.mxu0 %v1185
    %3042 = vmatpush1.bf16.msra.mxu0 %v1184
    %3043 = vmatprep.subr.bf16.mxu0 %v1193
    %3044 = vmatpush1.bf16.msra.mxu0 %v1192
    %3045 = vmatprep.subr.bf16.mxu0 %v1201
    %3046 = vmatpush1.bf16.msra.mxu0 %v1200
    %3047 = vmatprep.subr.bf16.mxu0 %v1209
    %3048 = vmatpush1.bf16.msra.mxu0 %v1208
    %3049 = vmatprep.subr.bf16.mxu0 %v1217
    %3050 = vmatpush1.bf16.msra.mxu0 %v1216
    %3051 = vmatprep.subr.bf16.mxu0 %v1225
    %3052 = vmatpush1.bf16.msra.mxu0 %v1224
    %3053 = vmatprep.subr.bf16.mxu0 %v1233
    %3054 = vmatpush1.bf16.msra.mxu0 %v1232
    %3055 = vmatprep.subr.bf16.mxu0 %v1241
    %3056 = vmatpush1.bf16.msra.mxu0 %v1240
    %3057 = vmatprep.subr.bf16.mxu0 %v1249
    %3058 = vmatpush1.bf16.msra.mxu0 %v1248
    %3059 = vmatprep.subr.bf16.mxu0 %v1257
    %3060 = vmatpush1.bf16.msra.mxu0 %v1256
    %3061 = vmatprep.subr.bf16.mxu0 %v1265
    %3062 = vmatpush1.bf16.msra.mxu0 %v1264
    %3063 = vmatprep.subr.bf16.mxu0 %v1273
    %3064 = vmatpush1.bf16.msra.mxu0 %v1272
    %3065 = vmatprep.mubr.bf16.mxu0 %v2950
    %3066 = vmatmul.mubr.bf16.gmra.mrb[0].mxu0 %v2949
    %v3067 = vpop.f32.mrb[0].mxu0
    %v3068 = vadd.f32 0.0, %v3067
    %v3069 = vpop.f32.mrb[0].mxu0
    %v3070 = vadd.f32 0.0, %v3069
    %v3071 = vpop.f32.mrb[0].mxu0
    %v3072 = vpop.f32.mrb[0].mxu0
    %3073 = vdwg.mxu0
    %3074 = vmatprep.subr.bf16.mxu0 %v1155
    %3075 = vmatpush1.bf16.msra.mxu0 %v1154
    %3076 = vmatprep.subr.bf16.mxu0 %v1163
    %3077 = vmatpush1.bf16.msra.mxu0 %v1162
    %3078 = vmatprep.subr.bf16.mxu0 %v1171
    %3079 = vmatpush1.bf16.msra.mxu0 %v1170
    %3080 = vmatprep.subr.bf16.mxu0 %v1179
    %3081 = vmatpush1.bf16.msra.mxu0 %v1178
    %3082 = vmatprep.subr.bf16.mxu0 %v1187
    %3083 = vmatpush1.bf16.msra.mxu0 %v1186
    %3084 = vmatprep.subr.bf16.mxu0 %v1195
    %3085 = vmatpush1.bf16.msra.mxu0 %v1194
    %3086 = vmatprep.subr.bf16.mxu0 %v1203
    %3087 = vmatpush1.bf16.msra.mxu0 %v1202
    %3088 = vmatprep.subr.bf16.mxu0 %v1211
    %3089 = vmatpush1.bf16.msra.mxu0 %v1210
    %3090 = vmatprep.subr.bf16.mxu0 %v1219
    %3091 = vmatpush1.bf16.msra.mxu0 %v1218
    %3092 = vmatprep.subr.bf16.mxu0 %v1227
    %3093 = vmatpush1.bf16.msra.mxu0 %v1226
    %3094 = vmatprep.subr.bf16.mxu0 %v1235
    %3095 = vmatpush1.bf16.msra.mxu0 %v1234
    %3096 = vmatprep.subr.bf16.mxu0 %v1243
    %3097 = vmatpush1.bf16.msra.mxu0 %v1242
    %3098 = vmatprep.subr.bf16.mxu0 %v1251
    %3099 = vmatpush1.bf16.msra.mxu0 %v1250
    %3100 = vmatprep.subr.bf16.mxu0 %v1259
    %3101 = vmatpush1.bf16.msra.mxu0 %v1258
    %3102 = vmatprep.subr.bf16.mxu0 %v1267
    %3103 = vmatpush1.bf16.msra.mxu0 %v1266
    %3104 = vmatprep.subr.bf16.mxu0 %v1275
    %3105 = vmatpush1.bf16.msra.mxu0 %v1274
    %3106 = vmatprep.mubr.bf16.mxu0 %v2950
    %3107 = vmatmul.mubr.bf16.gmra.mrb[0].mxu0 %v2949
    %v3108 = vpop.f32.mrb[0].mxu0
    %v3109 = vadd.f32 0.0, %v3108
    %v3110 = vpop.f32.mrb[0].mxu0
    %v3111 = vadd.f32 0.0, %v3110
    %v3112 = vpop.f32.mrb[0].mxu0
    %v3113 = vpop.f32.mrb[0].mxu0
    %3114 = vdwg.mxu0
    %v3115 = vadd.f32 %v2941, %v2986
    %v3116 = vadd.f32 %v2942, %v2988
    %v3117 = vadd.f32 %v2943, %v3027
    %v3118 = vadd.f32 %v2944, %v3029
    %v3119 = vadd.f32 %v2945, %v3068
    %v3120 = vadd.f32 %v2946, %v3070
    %v3121 = vadd.f32 %v2947, %v3109
    %v3122 = vadd.f32 %v2948, %v3111
    %v3123 = vmul.f32 %v3115, 0.5
    %v3124 = vmul.f32 %v3116, 0.5
    %v3125 = vtanh.pop %v3123
    %v3126 = vtanh.pop %v3124
    %v3127 = vmul.f32 %v3125, 0.5
    %v3128 = vmul.f32 %v3126, 0.5
    %v3129 = vadd.f32 %v3127, 0.5
    %v3130 = vadd.f32 %v3128, 0.5
    %v3131 = vmul.f32 %v3117, 0.5
    %v3132 = vmul.f32 %v3118, 0.5
    %v3133 = vtanh.pop %v3131
    %v3134 = vtanh.pop %v3132
    %v3135 = vmul.f32 %v3133, 0.5
    %v3136 = vmul.f32 %v3134, 0.5
    %v3137 = vadd.f32 %v3135, 0.5
    %v3138 = vadd.f32 %v3136, 0.5
    %v3139 = vtanh.pop %v3119
    %v3140 = vtanh.pop %v3120
    %v3141 = vmul.f32 %v3121, 0.5
    %v3142 = vmul.f32 %v3122, 0.5
    %v3143 = vtanh.pop %v3141
    %v3144 = vtanh.pop %v3142
    %v3145 = vmul.f32 %v3143, 0.5
    %v3146 = vmul.f32 %v3144, 0.5
    %v3147 = vadd.f32 %v3145, 0.5
    %v3148 = vadd.f32 %v3146, 0.5
    %v3149 = vmul.f32 %v3137, %v2932
    %v3150 = vmul.f32 %v3138, %v2933
    %v3151 = vmul.f32 %v3129, %v3139
    %v3152 = vmul.f32 %v3130, %v3140
    %v3153 = vadd.f32 %v3149, %v3151
    %v3154 = vadd.f32 %v3150, %v3152
    %v3155 = vtanh.pop %v3153
    %v3156 = vtanh.pop %v3154
    %v3157 = vmul.f32 %v3147, %v3155
    %v3158 = vmul.f32 %v3148, %v3156
    %v3159 = vpack.c.bf16 %v3157, %v3157
    %v3160 = vpack.c.bf16 %v3158, %v3158
    %v3161 = vld [vmem:[#allocation8] sm:$0xf]
    %v3162 = vld [vmem:[#allocation8 + $0x4] sm:$0xf]
    %v3163 = vld [vmem:[#allocation8 + $0x8] sm:$0xf]
    %v3164 = vld [vmem:[#allocation8 + $0xc] sm:$0xf]
    %v3165 = vld [vmem:[#allocation8 + $0x10] sm:$0xf]
    %v3166 = vld [vmem:[#allocation8 + $0x14] sm:$0xf]
    %v3167 = vld [vmem:[#allocation8 + $0x18] sm:$0xf]
    %v3168 = vld [vmem:[#allocation8 + $0x1c] sm:$0xf]
    %v3169 = vld [vmem:[#allocation8 + $0x20] sm:$0xf]
    %v3170 = vld [vmem:[#allocation8 + $0x24] sm:$0xf]
    %v3171 = vld [vmem:[#allocation8 + $0x28] sm:$0xf]
    %v3172 = vld [vmem:[#allocation8 + $0x2c] sm:$0xf]
    %v3173 = vld [vmem:[#allocation8 + $0x30] sm:$0xf]
    %v3174 = vld [vmem:[#allocation8 + $0x34] sm:$0xf]
    %v3175 = vld [vmem:[#allocation8 + $0x38] sm:$0xf]
    %v3176 = vld [vmem:[#allocation8 + $0x3c] sm:$0xf]
    %v3177 = vld [vmem:[#allocation8 + $0x40] sm:$0xf]
    %v3178 = vld [vmem:[#allocation8 + $0x44] sm:$0xf]
    %v3179 = vld [vmem:[#allocation8 + $0x48] sm:$0xf]
    %v3180 = vld [vmem:[#allocation8 + $0x4c] sm:$0xf]
    %v3181 = vld [vmem:[#allocation8 + $0x50] sm:$0xf]
    %v3182 = vld [vmem:[#allocation8 + $0x54] sm:$0xf]
    %v3183 = vld [vmem:[#allocation8 + $0x58] sm:$0xf]
    %v3184 = vld [vmem:[#allocation8 + $0x5c] sm:$0xf]
    %v3185 = vld [vmem:[#allocation8 + $0x60] sm:$0xf]
    %v3186 = vld [vmem:[#allocation8 + $0x64] sm:$0xf]
    %v3187 = vld [vmem:[#allocation8 + $0x68] sm:$0xf]
    %v3188 = vld [vmem:[#allocation8 + $0x6c] sm:$0xf]
    %v3189 = vld [vmem:[#allocation8 + $0x70] sm:$0xf]
    %v3190 = vld [vmem:[#allocation8 + $0x74] sm:$0xf]
    %v3191 = vld [vmem:[#allocation8 + $0x78] sm:$0xf]
    %v3192 = vld [vmem:[#allocation8 + $0x7c] sm:$0xf]
    %v3193 = vld [vmem:[%s5] sm:$0x1]
    %v3195 = vlaneseq
    %v3196 = vshrl.u32 %v3195, 7
    %v3197 = vsub.s32 0, %v3196
    %v3198 = vrot.slane %v3193, %v3197
    %v3232 = vunpack.c.l.b16 %v3161
    %v3233 = vunpack.c.l.b16 %v3162
    %v3234 = vunpack.c.l.b16 %v3163
    %v3235 = vunpack.c.l.b16 %v3164
    %v3236 = vunpack.c.l.b16 %v3165
    %v3237 = vunpack.c.l.b16 %v3166
    %v3238 = vunpack.c.l.b16 %v3167
    %v3239 = vunpack.c.l.b16 %v3168
    %v3240 = vunpack.c.l.b16 %v3169
    %v3241 = vunpack.c.l.b16 %v3170
    %v3242 = vunpack.c.l.b16 %v3171
    %v3243 = vunpack.c.l.b16 %v3172
    %v3244 = vunpack.c.l.b16 %v3173
    %v3245 = vunpack.c.l.b16 %v3174
    %v3246 = vunpack.c.l.b16 %v3175
    %v3247 = vunpack.c.l.b16 %v3176
    %v3248 = vunpack.c.l.b16 %v3177
    %v3249 = vunpack.c.l.b16 %v3178
    %v3250 = vunpack.c.l.b16 %v3179
    %v3251 = vunpack.c.l.b16 %v3180
    %v3252 = vunpack.c.l.b16 %v3181
    %v3253 = vunpack.c.l.b16 %v3182
    %v3254 = vunpack.c.l.b16 %v3183
    %v3255 = vunpack.c.l.b16 %v3184
    %v3256 = vunpack.c.l.b16 %v3185
    %v3257 = vunpack.c.l.b16 %v3186
    %v3258 = vunpack.c.l.b16 %v3187
    %v3259 = vunpack.c.l.b16 %v3188
    %v3260 = vunpack.c.l.b16 %v3189
    %v3261 = vunpack.c.l.b16 %v3190
    %v3262 = vunpack.c.l.b16 %v3191
    %v3263 = vunpack.c.l.b16 %v3192
    %v3264 = vpack.c.b16 %v3233, %v3232
    %v3265 = vpack.c.b16 %v3235, %v3234
    %v3266 = vpack.c.b16 %v3237, %v3236
    %v3267 = vpack.c.b16 %v3239, %v3238
    %v3268 = vpack.c.b16 %v3241, %v3240
    %v3269 = vpack.c.b16 %v3243, %v3242
    %v3270 = vpack.c.b16 %v3245, %v3244
    %v3271 = vpack.c.b16 %v3247, %v3246
    %v3272 = vpack.c.b16 %v3249, %v3248
    %v3273 = vpack.c.b16 %v3251, %v3250
    %v3274 = vpack.c.b16 %v3253, %v3252
    %v3275 = vpack.c.b16 %v3255, %v3254
    %v3276 = vpack.c.b16 %v3257, %v3256
    %v3277 = vpack.c.b16 %v3259, %v3258
    %v3278 = vpack.c.b16 %v3261, %v3260
    %v3279 = vpack.c.b16 %v3263, %v3262
    %3296 = vmatprep.subr.bf16.mxu0 0
    %3297 = vmatpush1.bf16.msra.mxu0 %v3264
    %3298 = vmatprep.subr.bf16.mxu0 0
    %3299 = vmatpush1.bf16.msra.mxu0 %v3265
    %3300 = vmatprep.subr.bf16.mxu0 0
    %3301 = vmatpush1.bf16.msra.mxu0 %v3266
    %3302 = vmatprep.subr.bf16.mxu0 0
    %3303 = vmatpush1.bf16.msra.mxu0 %v3267
    %3304 = vmatprep.subr.bf16.mxu0 0
    %3305 = vmatpush1.bf16.msra.mxu0 %v3268
    %3306 = vmatprep.subr.bf16.mxu0 0
    %3307 = vmatpush1.bf16.msra.mxu0 %v3269
    %3308 = vmatprep.subr.bf16.mxu0 0
    %3309 = vmatpush1.bf16.msra.mxu0 %v3270
    %3310 = vmatprep.subr.bf16.mxu0 0
    %3311 = vmatpush1.bf16.msra.mxu0 %v3271
    %3312 = vmatprep.subr.bf16.mxu0 0
    %3313 = vmatpush1.bf16.msra.mxu0 %v3272
    %3314 = vmatprep.subr.bf16.mxu0 0
    %3315 = vmatpush1.bf16.msra.mxu0 %v3273
    %3316 = vmatprep.subr.bf16.mxu0 0
    %3317 = vmatpush1.bf16.msra.mxu0 %v3274
    %3318 = vmatprep.subr.bf16.mxu0 0
    %3319 = vmatpush1.bf16.msra.mxu0 %v3275
    %3320 = vmatprep.subr.bf16.mxu0 0
    %3321 = vmatpush1.bf16.msra.mxu0 %v3276
    %3322 = vmatprep.subr.bf16.mxu0 0
    %3323 = vmatpush1.bf16.msra.mxu0 %v3277
    %3324 = vmatprep.subr.bf16.mxu0 0
    %3325 = vmatpush1.bf16.msra.mxu0 %v3278
    %3326 = vmatprep.subr.bf16.mxu0 0
    %3327 = vmatpush1.bf16.msra.mxu0 %v3279
    %3328 = vmatprep.mubr.bf16.mxu0 %v3160
    %3329 = vmatmul.mubr.bf16.gmra.mrb[0].mxu0 %v3159
    %v3330 = vpop.f32.mrb[0].mxu0
    %v3331 = vadd.f32 %v3198, %v3330
    %v3332 = vpop.f32.mrb[0].mxu0
    %v3333 = vpop.f32.mrb[0].mxu0
    %v3334 = vpop.f32.mrb[0].mxu0
    %3335 = vdwg.mxu0
    %v3336 = vmax.f32 %v3331, 0.0
    %v3337 = vpack.c.bf16 %v3336, %v3336
    %v3338 = vld [vmem:[%s6] sm:$0xf]
    %v3339 = vld [vmem:[%s6 + $0x4] sm:$0xf]
    %v3340 = vld [vmem:[%s6 + $0x8] sm:$0xf]
    %v3341 = vld [vmem:[%s6 + $0xc] sm:$0xf]
    %v3342 = vld [vmem:[%s6 + $0x10] sm:$0xf]
    %v3343 = vld [vmem:[%s6 + $0x14] sm:$0xf]
    %v3344 = vld [vmem:[%s6 + $0x18] sm:$0xf]
    %v3345 = vld [vmem:[%s6 + $0x1c] sm:$0xf]
    %v3346 = vld [vmem:[%s6 + $0x20] sm:$0xf]
    %v3347 = vld [vmem:[%s6 + $0x24] sm:$0xf]
    %v3348 = vld [vmem:[%s6 + $0x28] sm:$0xf]
    %v3349 = vld [vmem:[%s6 + $0x2c] sm:$0xf]
    %v3350 = vld [vmem:[%s6 + $0x30] sm:$0xf]
    %v3351 = vld [vmem:[%s6 + $0x34] sm:$0xf]
    %v3352 = vld [vmem:[%s6 + $0x38] sm:$0xf]
    %v3353 = vld [vmem:[%s6 + $0x3c] sm:$0xf]
    %v3354 = vld [vmem:[%s7] sm:$0x1]
    %v3356 = vlaneseq
    %v3357 = vshrl.u32 %v3356, 7
    %v3358 = vsub.s32 0, %v3357
    %v3359 = vrot.slane %v3354, %v3358
    %v3377 = vunpack.c.l.b16 %v3338
    %v3378 = vunpack.c.l.b16 %v3339
    %v3379 = vunpack.c.l.b16 %v3340
    %v3380 = vunpack.c.l.b16 %v3341
    %v3381 = vunpack.c.l.b16 %v3342
    %v3382 = vunpack.c.l.b16 %v3343
    %v3383 = vunpack.c.l.b16 %v3344
    %v3384 = vunpack.c.l.b16 %v3345
    %v3385 = vunpack.c.l.b16 %v3346
    %v3386 = vunpack.c.l.b16 %v3347
    %v3387 = vunpack.c.l.b16 %v3348
    %v3388 = vunpack.c.l.b16 %v3349
    %v3389 = vunpack.c.l.b16 %v3350
    %v3390 = vunpack.c.l.b16 %v3351
    %v3391 = vunpack.c.l.b16 %v3352
    %v3392 = vunpack.c.l.b16 %v3353
    %v3393 = vpack.c.b16 %v3378, %v3377
    %v3394 = vpack.c.b16 %v3380, %v3379
    %v3395 = vpack.c.b16 %v3382, %v3381
    %v3396 = vpack.c.b16 %v3384, %v3383
    %v3397 = vpack.c.b16 %v3386, %v3385
    %v3398 = vpack.c.b16 %v3388, %v3387
    %v3399 = vpack.c.b16 %v3390, %v3389
    %v3400 = vpack.c.b16 %v3392, %v3391
    %3409 = vmatprep.subr.bf16.mxu0 0
    %3410 = vmatpush1.bf16.msra.mxu0 %v3393
    %3411 = vmatprep.subr.bf16.mxu0 0
    %3412 = vmatpush1.bf16.msra.mxu0 %v3394
    %3413 = vmatprep.subr.bf16.mxu0 0
    %3414 = vmatpush1.bf16.msra.mxu0 %v3395
    %3415 = vmatprep.subr.bf16.mxu0 0
    %3416 = vmatpush1.bf16.msra.mxu0 %v3396
    %3417 = vmatprep.subr.bf16.mxu0 0
    %3418 = vmatpush1.bf16.msra.mxu0 %v3397
    %3419 = vmatprep.subr.bf16.mxu0 0
    %3420 = vmatpush1.bf16.msra.mxu0 %v3398
    %3421 = vmatprep.subr.bf16.mxu0 0
    %3422 = vmatpush1.bf16.msra.mxu0 %v3399
    %3423 = vmatprep.subr.bf16.mxu0 0
    %3424 = vmatpush1.bf16.msra.mxu0 %v3400
    %3425 = vmatprep.subr.bf16.mxu0 0
    %3426 = vmatpush1.bf16.msra.mxu0 0
    %3427 = vmatprep.subr.bf16.mxu0 0
    %3428 = vmatpush1.bf16.msra.mxu0 0
    %3429 = vmatprep.subr.bf16.mxu0 0
    %3430 = vmatpush1.bf16.msra.mxu0 0
    %3431 = vmatprep.subr.bf16.mxu0 0
    %3432 = vmatpush1.bf16.msra.mxu0 0
    %3433 = vmatprep.subr.bf16.mxu0 0
    %3434 = vmatpush1.bf16.msra.mxu0 0
    %3435 = vmatprep.subr.bf16.mxu0 0
    %3436 = vmatpush1.bf16.msra.mxu0 0
    %3437 = vmatprep.subr.bf16.mxu0 0
    %3438 = vmatpush1.bf16.msra.mxu0 0
    %3439 = vmatprep.subr.bf16.mxu0 0
    %3440 = vmatpush1.bf16.msra.mxu0 0
    %3441 = vmatprep.mubr.bf16.mxu0 0
    %3442 = vmatmul.mubr.bf16.gmra.mrb[0].mxu0 %v3337
    %v3443 = vpop.f32.mrb[0].mxu0
    %v3444 = vadd.f32 %v3359, %v3443
    %v3445 = vpop.f32.mrb[0].mxu0
    %v3446 = vpop.f32.mrb[0].mxu0
    %v3447 = vpop.f32.mrb[0].mxu0
    %3448 = vdwg.mxu0
    %v3449 = vmax.f32 %v3444, 0.0
    %v3450 = vpack.c.bf16 %v3449, %v3449
    %v3451 = vld [vmem:[#allocation9] sm:$0xf]
    %v3452 = vld [vmem:[#allocation9 + $0x4] sm:$0xf]
    %v3453 = vld [vmem:[#allocation9 + $0x8] sm:$0xf]
    %v3454 = vld [vmem:[#allocation9 + $0xc] sm:$0xf]
    %v3455 = vld [vmem:[#allocation9 + $0x10] sm:$0xf]
    %v3456 = vld [vmem:[#allocation9 + $0x14] sm:$0xf]
    %v3457 = vld [vmem:[#allocation9 + $0x18] sm:$0xf]
    %v3458 = vld [vmem:[#allocation9 + $0x1c] sm:$0xf]
    %v3459 = vld [vmem:[%s9] sm:$0x1]
    %v3461 = vlaneseq
    %v3462 = vshrl.u32 %v3461, 7
    %v3463 = vsub.s32 0, %v3462
    %v3464 = vrot.slane %v3459, %v3463
    %v3474 = vunpack.c.l.b16 %v3451
    %v3475 = vunpack.c.l.b16 %v3452
    %v3476 = vunpack.c.l.b16 %v3453
    %v3477 = vunpack.c.l.b16 %v3454
    %v3478 = vunpack.c.l.b16 %v3455
    %v3479 = vunpack.c.l.b16 %v3456
    %v3480 = vunpack.c.l.b16 %v3457
    %v3481 = vunpack.c.l.b16 %v3458
    %v3482 = vpack.c.b16 %v3475, %v3474
    %v3483 = vpack.c.b16 %v3477, %v3476
    %v3484 = vpack.c.b16 %v3479, %v3478
    %v3485 = vpack.c.b16 %v3481, %v3480
    %vm3490 = vcmask 523264
    %v3492 = vsel %vm3490, %v3450, 0
    %3494 = vmatprep.subr.bf16.mxu0 0
    %3495 = vmatpush1.bf16.msra.mxu0 %v3482
    %3496 = vmatprep.subr.bf16.mxu0 0
    %3497 = vmatpush1.bf16.msra.mxu0 %v3483
    %3498 = vmatprep.subr.bf16.mxu0 0
    %3499 = vmatpush1.bf16.msra.mxu0 %v3484
    %3500 = vmatprep.subr.bf16.mxu0 0
    %3501 = vmatpush1.bf16.msra.mxu0 %v3485
    %3502 = vmatprep.subr.bf16.mxu0 0
    %3503 = vmatpush1.bf16.msra.mxu0 0
    %3504 = vmatprep.subr.bf16.mxu0 0
    %3505 = vmatpush1.bf16.msra.mxu0 0
    %3506 = vmatprep.subr.bf16.mxu0 0
    %3507 = vmatpush1.bf16.msra.mxu0 0
    %3508 = vmatprep.subr.bf16.mxu0 0
    %3509 = vmatpush1.bf16.msra.mxu0 0
    %3510 = vmatprep.subr.bf16.mxu0 0
    %3511 = vmatpush1.bf16.msra.mxu0 0
    %3512 = vmatprep.subr.bf16.mxu0 0
    %3513 = vmatpush1.bf16.msra.mxu0 0
    %3514 = vmatprep.subr.bf16.mxu0 0
    %3515 = vmatpush1.bf16.msra.mxu0 0
    %3516 = vmatprep.subr.bf16.mxu0 0
    %3517 = vmatpush1.bf16.msra.mxu0 0
    %3518 = vmatprep.subr.bf16.mxu0 0
    %3519 = vmatpush1.bf16.msra.mxu0 0
    %3520 = vmatprep.subr.bf16.mxu0 0
    %3521 = vmatpush1.bf16.msra.mxu0 0
    %3522 = vmatprep.subr.bf16.mxu0 0
    %3523 = vmatpush1.bf16.msra.mxu0 0
    %3524 = vmatprep.subr.bf16.mxu0 0
    %3525 = vmatpush1.bf16.msra.mxu0 0
    %3526 = vmatprep.mubr.bf16.mxu0 0
    %3527 = vmatmul.mubr.bf16.gmra.mrb[0].mxu0 %v3492
    %v3528 = vpop.f32.mrb[0].mxu0
    %v3529 = vadd.f32 %v3464, %v3528
    %v3530 = vpop.f32.mrb[0].mxu0
    %v3531 = vpop.f32.mrb[0].mxu0
    %v3532 = vpop.f32.mrb[0].mxu0
    %3533 = vdwg.mxu0
    %3534 = vst [vmem:[#allocation11] sm:$0xff] %v3529
    // Predicated region
    $region58: #{tpu_custom_call.1} parent=1 // pred_check
      _
    $region59: #{tpu_custom_call.1} parent=1 // pred_check_branch
      %3536 = sbr.rel (0) target = $region61
    $region60: #{tpu_custom_call.1} parent=1 // pred_region
      %s3538 = ssub.s32 128, 128
      %3539 = vsyncadd [#allocation5], %s3538
      %s3541 = sshll.u32 [#allocation11], 4
      %s3542 = int_to_ptr.vmem [resolvable:$true] %s3541
      %3544 = dma.vmem_to_hbm [thread:$0]  %s3542, 128, %s10, [#allocation5]
    $region61: #{tpu_custom_call.1} parent=1 // pred_fallthru
      _
    // Predicated region
    $region62: #{tpu_custom_call.1} parent=1 // pred_check
      _
    $region63: #{tpu_custom_call.1} parent=1 // pred_check_branch
      %3546 = sbr.rel (0) target = $region65
    $region64: #{tpu_custom_call.1} parent=1 // pred_region
      %3547 = dma.done [#allocation5], 128
    $region65: #{tpu_custom_call.1} parent=1 // pred_fallthru
      _
    %3548 = vsyncpa [#allocation4], 1
    %3549 = vsyncpa [#allocation7], 1
    %3550 = vsyncpa [#allocation10], 1
    %3551 = vsyncpa [#allocation5], 1

</llo_original>
